<compile_context>
chip_gen: v6e
topology: v6e:2x2x1
jax: 0.10.0
libtpu: 0.0.40
codegen_flags: <defaults>
</compile_context>

<pallas_src>
import jax
import jax.numpy as jnp
from jax.experimental import pallas as pl
from jax.experimental.pallas import tpu as pltpu

SEQ_LEN = 30
PAD_SEQ = SEQ_LEN + 2       # 32 padded positions per element (conv zero pads)
EMBED_LEN = 32
VOCAB = 50
VOCAB_PAD = 64              # embedding table padded with zero rows
NFILT = 64
FEAT = 3 * NFILT            # 192
CONV_PAD = 4 * NFILT        # 256 lanes: [k3 | k1 | k2 | zero-pad]
ENC_DIM = 200
ENC_PAD = 256               # ENC_DIM padded to a full 2-vreg lane width
MATCH_IN = 4 * ENC_DIM      # 800
F32 = jnp.float32


# --------------------------------------------------------------------------
# Fused kernel: one-hot -> (embed*conv) matmul -> masked max-pool -> Linear
#               -> Match head, for 2*BT sentences (BT (x,y) pairs) per step.
# --------------------------------------------------------------------------
def _cnn_kernel(tok_ref, table_ref, bpack_ref, wla_ref, bla_ref,
                wm_ref, bm_ref, wd_ref, bd_ref, out_ref):
    R = tok_ref.shape[0]          # 2*BT*PAD_SEQ flattened (element, position) rows
    bt = out_ref.shape[0]         # BT pairs in this tile
    ne = 2 * bt                   # encoded sentences (BT x's then BT y's)

    tok = tok_ref[...]            # (R, 3) int32 window-slot tokens, -1 = pad/OOB

    # One-hot selection over the 3 conv-window slots (pad token -1 -> zero row).
    viota = jax.lax.broadcasted_iota(jnp.int32, (R, VOCAB_PAD), 1)
    one_hot = lambda c: jnp.where(viota == tok[:, c:c + 1], 1.0, 0.0).astype(F32)
    sel = jnp.concatenate([one_hot(0), one_hot(1), one_hot(2)], axis=1)   # (R,192)

    # Embedding + all three convs in a single MXU matmul.
    # Column layout of table: [k3-filters | k1-filters | k2-filters | zeros].
    y = jnp.dot(sel, table_ref[...], preferred_element_type=F32)         # (R,256)
    y3 = y.reshape(ne, PAD_SEQ, CONV_PAD)

    # Mask invalid conv-output positions, then max-pool over all 32 rows.
    # Valid output positions: k3,k1 -> p < 30 ; k2 -> p < 31.
    pos = jax.lax.broadcasted_iota(jnp.int32, (1, PAD_SEQ, CONV_PAD), 1)
    lane = jax.lax.broadcasted_iota(jnp.int32, (1, PAD_SEQ, CONV_PAD), 2)
    limit = jnp.where(lane < 2 * NFILT, SEQ_LEN, SEQ_LEN + 1)
    mask = jnp.where(pos < limit, 0.0, -1e30)
    # Bias & ReLU commute with the max (bias constant over positions).
    feat = jnp.maximum(jnp.max(y3 + mask, axis=1) + bpack_ref[...], 0.0)  # (ne,256)

    # Encoder head: Linear(192,200) + ReLU (padded to 256x256, zero rows/cols).
    enc = jnp.maximum(
        jnp.dot(feat, wla_ref[...], preferred_element_type=F32) + bla_ref[...],
        0.0)                                                              # (ne,256)

    # Match head: cat([x, y, |x-y|, x*y]) folded into 4 partial matmuls.
    xe = enc[0:bt]
    ye = enc[bt:ne]
    diff = jnp.abs(xe - ye)
    prod = xe * ye
    h = (jnp.dot(xe,   wm_ref[0], preferred_element_type=F32)
         + jnp.dot(ye,   wm_ref[1], preferred_element_type=F32)
         + jnp.dot(diff, wm_ref[2], preferred_element_type=F32)
         + jnp.dot(prod, wm_ref[3], preferred_element_type=F32)
         + bm_ref[...])
    h = jnp.maximum(h, 0.0)                                               # (bt,256)
    # TODO(synk): Dropout(0.2) -> identity (eval mode).

    # Linear(200, 1) as VPU multiply + lane reduction; broadcast the scalar
    # across 128 lanes so the store is a full unmasked vreg store.
    res = jnp.sum(h * wd_ref[...], axis=1, keepdims=True) + bd_ref[...]   # (bt,1)
    out_ref[...] = jnp.broadcast_to(res, (bt, 128))


# --------------------------------------------------------------------------
# Wrapper: token prep + weight packing/folding + single pallas_call
# --------------------------------------------------------------------------
def cnn_forward(tokens_x, tokens_y, p):
    B = tokens_x.shape[0]
    # BT capped at 64 (VMEM on v7x); aim for >= 2 grid steps when B allows it.
    BT = max(8, min(64, ((B + 1) // 2 + 7) // 8 * 8))
    G = (B + BT - 1) // BT
    Bp = G * BT
    R = 2 * BT * PAD_SEQ

    def prep(tok):
        # Window-slot token streams for padded positions p = 0..31:
        #   slot0[p] = token at p, slot1[p] = token at p+1, slot2[p] = token at p+2
        # (out-of-range / conv zero-pad positions -> -1 -> zero embedding row).
        t = tok.astype(jnp.int32)
        slot0 = jnp.pad(t, ((0, 0), (1, 1)), constant_values=-1)
        slot1 = jnp.pad(t, ((0, 0), (0, 2)), constant_values=-1)
        slot2 = jnp.pad(t[:, 1:], ((0, 0), (0, 3)), constant_values=-1)
        s = jnp.stack([slot0, slot1, slot2], axis=-1)                 # (B, 32, 3)
        s = jnp.pad(s, ((0, Bp - B), (0, 0), (0, 0)), constant_values=-1)
        return s.reshape(G, BT, PAD_SEQ, 3)

    # Per tile: BT x-sentences followed by BT y-sentences, contiguously.
    tok = jnp.stack([prep(tokens_x), prep(tokens_y)], axis=1)         # (G,2,BT,32,3)
    tok = tok.reshape(G * 2 * BT * PAD_SEQ, 3)

    # ---- weight packing (tiny, plain-JAX glue, done once per call) ----
    embed_p = jnp.zeros((VOCAB_PAD, EMBED_LEN), F32).at[:VOCAB].set(
        p["embed"].astype(F32))
    z64 = jnp.zeros((EMBED_LEN, NFILT), F32)
    # Per window-slot conv weights, columns [k3 | k1 | k2 | zeros].
    slot_w = [
        jnp.concatenate([p["w3a"], z64,     p["w2a"], z64], axis=1),  # token @ p
        jnp.concatenate([p["w3b"], p["w1"], p["w2b"], z64], axis=1),  # token @ p+1
        jnp.concatenate([p["w3c"], z64,     z64,      z64], axis=1),  # token @ p+2
    ]
    # Fold the embedding table into the conv weights: (sel @ E) @ W == sel @ (E @ W).
    table = jnp.concatenate([embed_p @ w for w in slot_w], axis=0)    # (192, 256)

    zb = jnp.zeros((1, NFILT), F32)
    bpack = jnp.concatenate([p["b3"], p["b1"], p["b2"], zb], axis=1)  # (1, 256)

    # Linear(192,200): rows permuted to the kernel's [k3|k1|k2] feature order,
    # zero-padded to 256x256 (extra rows/cols are inert).
    wla_p = jnp.zeros((CONV_PAD, ENC_PAD), F32)
    wla_p = wla_p.at[0:64,    :ENC_DIM].set(p["wla"][128:192])
    wla_p = wla_p.at[64:128,  :ENC_DIM].set(p["wla"][0:64])
    wla_p = wla_p.at[128:192, :ENC_DIM].set(p["wla"][64:128])
    bla_p = jnp.zeros((1, ENC_PAD), F32).at[:, :ENC_DIM].set(p["bla"])

    wm4_p = jnp.pad(p["wm"].reshape(4, ENC_DIM, ENC_DIM),
                    ((0, 0), (0, ENC_PAD - ENC_DIM), (0, ENC_PAD - ENC_DIM)))
    bm_p = jnp.zeros((1, ENC_PAD), F32).at[:, :ENC_DIM].set(p["bm"])
    wd_p = jnp.zeros((1, ENC_PAD), F32).at[:, :ENC_DIM].set(
        p["wd"].reshape(1, ENC_DIM))

    const2 = lambda g: (0, 0)
    flops = G * (2 * R * FEAT * CONV_PAD            # fused embed+conv matmul
                 + 2 * (2 * BT) * CONV_PAD * ENC_PAD  # encoder Linear
                 + 2 * 4 * BT * ENC_PAD * ENC_PAD     # match Linear (4 blocks)
                 + 4 * BT * ENC_PAD)                  # final reduce
    bytes_accessed = 4 * (tok.size + table.size + bpack.size + wla_p.size
                          + bla_p.size + wm4_p.size + bm_p.size + wd_p.size + 1
                          + Bp * 128)

    out = pl.pallas_call(
        _cnn_kernel,
        out_shape=jax.ShapeDtypeStruct((Bp, 128), F32),
        grid_spec=pltpu.PrefetchScalarGridSpec(
            num_scalar_prefetch=0,
            grid=(G,),
            in_specs=[
                pl.BlockSpec((R, 3), lambda g: (g, 0)),                    # tokens
                pl.BlockSpec((3 * VOCAB_PAD, CONV_PAD), const2),           # table
                pl.BlockSpec((1, CONV_PAD), const2),                       # conv bias
                pl.BlockSpec((CONV_PAD, ENC_PAD), const2),                 # la W
                pl.BlockSpec((1, ENC_PAD), const2),                        # la b
                pl.BlockSpec((4, ENC_PAD, ENC_PAD), lambda g: (0, 0, 0)),  # match W
                pl.BlockSpec((1, ENC_PAD), const2),                        # match b
                pl.BlockSpec((1, ENC_PAD), const2),                        # wd^T
                pl.BlockSpec((1, 1), const2),                              # bd
            ],
            out_specs=pl.BlockSpec((BT, 128), lambda g: (g, 0)),
        ),
        compiler_params=pltpu.CompilerParams(
            dimension_semantics=("parallel",),
            vmem_limit_bytes=48 * 1024 * 1024),
        cost_estimate=pl.CostEstimate(flops=flops, transcendentals=0,
                                      bytes_accessed=bytes_accessed),
    )(tok, table, bpack, wla_p, bla_p, wm4_p, bm_p, wd_p, p["bd"])
    return out[:B, 0:1]


# --------------------------------------------------------------------------
# Pure-JAX reference (same math / PyTorch semantics) for the correctness check
# --------------------------------------------------------------------------
def reference_forward(tokens_x, tokens_y, p):
    def enc(tokens):
        emb = jnp.take(p["embed"], tokens, axis=0).astype(F32)
        xp = jnp.pad(emb, ((0, 0), (1, 1), (0, 0)))
        mm = lambda a, w: jnp.einsum("bse,ef->bsf", a, w)
        h1 = jnp.maximum(mm(xp[:, 1:1 + SEQ_LEN], p["w1"]) + p["b1"], 0).max(axis=1)
        h2 = jnp.maximum(mm(xp[:, 0:SEQ_LEN + 1], p["w2a"])
                         + mm(xp[:, 1:SEQ_LEN + 2], p["w2b"]) + p["b2"], 0).max(axis=1)
        h3 = jnp.maximum(mm(xp[:, 0:SEQ_LEN], p["w3a"])
                         + mm(xp[:, 1:SEQ_LEN + 1], p["w3b"])
                         + mm(xp[:, 2:SEQ_LEN + 2], p["w3c"]) + p["b3"], 0).max(axis=1)
        feat = jnp.concatenate([h1, h2, h3], axis=1)
        return jnp.maximum(feat @ p["wla"] + p["bla"], 0)

    xe, ye = enc(tokens_x), enc(tokens_y)
    z = jnp.concatenate([xe, ye, jnp.abs(xe - ye), xe * ye], axis=1)
    h = jnp.maximum(z @ p["wm"] + p["bm"], 0)
    return h @ p["wd"] + p["bd"]


# --------------------------------------------------------------------------
def init_params(key):
    ks = jax.random.split(key, 16)
    n = lambda k, shape, s=0.1: (s * jax.random.normal(k, shape)).astype(F32)
    return {
        "embed": n(ks[0], (VOCAB, EMBED_LEN), 1.0),
        "w1":  n(ks[1], (EMBED_LEN, NFILT)),  "b1": n(ks[2], (1, NFILT)),
        "w2a": n(ks[3], (EMBED_LEN, NFILT)),  "w2b": n(ks[4], (EMBED_LEN, NFILT)),
        "b2":  n(ks[5], (1, NFILT)),
        "w3a": n(ks[6], (EMBED_LEN, NFILT)),  "w3b": n(ks[7], (EMBED_LEN, NFILT)),
        "w3c": n(ks[8], (EMBED_LEN, NFILT)),  "b3": n(ks[9], (1, NFILT)),
        "wla": n(ks[10], (FEAT, ENC_DIM)),    "bla": n(ks[11], (1, ENC_DIM)),
        "wm":  n(ks[12], (MATCH_IN, ENC_DIM)), "bm": n(ks[13], (1, ENC_DIM)),
        "wd":  n(ks[14], (ENC_DIM, 1)),       "bd": n(ks[15], (1, 1)),
    }


if __name__ == "__main__":
    key = jax.random.PRNGKey(0)
    kp, kx, ky = jax.random.split(key, 3)
    params = init_params(kp)

    B = 2
    tokens_x = jax.random.randint(kx, (B, SEQ_LEN), 0, VOCAB, dtype=jnp.int32)
    tokens_y = jax.random.randint(ky, (B, SEQ_LEN), 0, VOCAB, dtype=jnp.int32)

    fwd = jax.jit(cnn_forward)
    out = jax.block_until_ready(fwd(tokens_x, tokens_y, params))
    ref = jax.block_until_ready(reference_forward(tokens_x, tokens_y, params))

    assert out.shape == (B, 1), out.shape
    assert jnp.allclose(out, ref, atol=1e-3, rtol=1e-3), (out, ref)
    print("KERNEL_OK")
</pallas_src>

<mosaic_0001>
module attributes {stable_mosaic.version = 11 : i64} {
  func.func @_cnn_kernel(%arg0: i32, %arg1: memref<512x3xi32, #tpu.memory_space<vmem>>, %arg2: memref<192x256xf32, #tpu.memory_space<vmem>>, %arg3: memref<1x256xf32, #tpu.memory_space<vmem>>, %arg4: memref<256x256xf32, #tpu.memory_space<vmem>>, %arg5: memref<1x256xf32, #tpu.memory_space<vmem>>, %arg6: memref<4x256x256xf32, #tpu.memory_space<vmem>>, %arg7: memref<1x256xf32, #tpu.memory_space<vmem>>, %arg8: memref<1x256xf32, #tpu.memory_space<vmem>>, %arg9: memref<1x1xf32, #tpu.memory_space<vmem>>, %arg10: memref<8x128xf32, #tpu.memory_space<vmem>>) attributes {dimension_semantics = [#tpu.dimension_semantics<parallel>], iteration_bounds = array<i64: 1>, scalar_prefetch = 0 : i64, scratch_operands = 0 : i64, tpu.core_type = #tpu.core_type<tc>, window_params = [{transform_indices = @transform_0, window_bounds = array<i64: 512, 3>}, {pipeline_mode = #tpu.pipeline_mode<synchronous>, transform_indices = @transform_1, window_bounds = array<i64: 192, 256>}, {pipeline_mode = #tpu.pipeline_mode<synchronous>, transform_indices = @transform_2, window_bounds = array<i64: 1, 256>}, {pipeline_mode = #tpu.pipeline_mode<synchronous>, transform_indices = @transform_3, window_bounds = array<i64: 256, 256>}, {pipeline_mode = #tpu.pipeline_mode<synchronous>, transform_indices = @transform_4, window_bounds = array<i64: 1, 256>}, {pipeline_mode = #tpu.pipeline_mode<synchronous>, transform_indices = @transform_5, window_bounds = array<i64: 4, 256, 256>}, {pipeline_mode = #tpu.pipeline_mode<synchronous>, transform_indices = @transform_6, window_bounds = array<i64: 1, 256>}, {pipeline_mode = #tpu.pipeline_mode<synchronous>, transform_indices = @transform_7, window_bounds = array<i64: 1, 256>}, {pipeline_mode = #tpu.pipeline_mode<synchronous>, transform_indices = @transform_8, window_bounds = array<i64: 1, 1>}, {transform_indices = @transform_9, window_bounds = array<i64: 8, 128>}]} {
    %c0 = arith.constant 0 : index
    %c0_0 = arith.constant 0 : index
    %0 = vector.load %arg1[%c0, %c0_0] : memref<512x3xi32, #tpu.memory_space<vmem>>, vector<512x3xi32>
    %1 = tpu.iota {dimensions = array<i32: 1>} : vector<512x64xi32>
    %2 = vector.extract_strided_slice %0 {offsets = [0, 0], sizes = [512, 1], strides = [1, 1]} : vector<512x3xi32> to vector<512x1xi32>
    %3 = vector.broadcast %2 : vector<512x1xi32> to vector<512x64xi32>
    %4 = arith.cmpi eq, %1, %3 : vector<512x64xi32>
    %cst = arith.constant 1.000000e+00 : f32
    %cst_1 = arith.constant 0.000000e+00 : f32
    %5 = vector.broadcast %cst : f32 to vector<512x64xf32>
    %6 = vector.broadcast %cst_1 : f32 to vector<512x64xf32>
    %7 = arith.select %4, %5, %6 : vector<512x64xi1>, vector<512x64xf32>
    %8 = vector.extract_strided_slice %0 {offsets = [0, 1], sizes = [512, 1], strides = [1, 1]} : vector<512x3xi32> to vector<512x1xi32>
    %9 = vector.broadcast %8 : vector<512x1xi32> to vector<512x64xi32>
    %10 = arith.cmpi eq, %1, %9 : vector<512x64xi32>
    %cst_2 = arith.constant 1.000000e+00 : f32
    %cst_3 = arith.constant 0.000000e+00 : f32
    %11 = vector.broadcast %cst_2 : f32 to vector<512x64xf32>
    %12 = vector.broadcast %cst_3 : f32 to vector<512x64xf32>
    %13 = arith.select %10, %11, %12 : vector<512x64xi1>, vector<512x64xf32>
    %14 = vector.extract_strided_slice %0 {offsets = [0, 2], sizes = [512, 1], strides = [1, 1]} : vector<512x3xi32> to vector<512x1xi32>
    %15 = vector.broadcast %14 : vector<512x1xi32> to vector<512x64xi32>
    %16 = arith.cmpi eq, %1, %15 : vector<512x64xi32>
    %cst_4 = arith.constant 1.000000e+00 : f32
    %cst_5 = arith.constant 0.000000e+00 : f32
    %17 = vector.broadcast %cst_4 : f32 to vector<512x64xf32>
    %18 = vector.broadcast %cst_5 : f32 to vector<512x64xf32>
    %19 = arith.select %16, %17, %18 : vector<512x64xi1>, vector<512x64xf32>
    %20 = tpu.concatenate %7, %13, %19 in 1 : vector<512x64xf32>, vector<512x64xf32>, vector<512x64xf32> -> vector<512x192xf32>
    %c0_6 = arith.constant 0 : index
    %c0_7 = arith.constant 0 : index
    %21 = vector.load %arg2[%c0_6, %c0_7] : memref<192x256xf32, #tpu.memory_space<vmem>>, vector<192x256xf32>
    %cst_8 = arith.constant dense<0.000000e+00> : vector<512x256xf32>
    %22 = tpu.matmul %20, %21, %cst_8 {dimension_numbers = #tpu.dot_dimension_numbers<[1], [0], [0], [1], [0, 0, 1, 1], [], []>} : vector<512x192xf32>, vector<192x256xf32>, vector<512x256xf32> -> vector<512x256xf32>
    %23 = vector.shape_cast %22 : vector<512x256xf32> to vector<16x32x256xf32>
    %24 = tpu.iota {dimensions = array<i32: 1>} : vector<1x32x256xi32>
    %25 = tpu.iota {dimensions = array<i32: 2>} : vector<1x32x256xi32>
    %c128_i32 = arith.constant 128 : i32
    %26 = vector.broadcast %c128_i32 : i32 to vector<1x32x256xi32>
    %27 = arith.cmpi slt, %25, %26 : vector<1x32x256xi32>
    %c30_i32 = arith.constant 30 : i32
    %c31_i32 = arith.constant 31 : i32
    %28 = vector.broadcast %c30_i32 : i32 to vector<1x32x256xi32>
    %29 = vector.broadcast %c31_i32 : i32 to vector<1x32x256xi32>
    %30 = arith.select %27, %28, %29 : vector<1x32x256xi1>, vector<1x32x256xi32>
    %31 = arith.cmpi slt, %24, %30 : vector<1x32x256xi32>
    %cst_9 = arith.constant 0.000000e+00 : f32
    %cst_10 = arith.constant -1.000000e+30 : f32
    %32 = vector.broadcast %cst_9 : f32 to vector<1x32x256xf32>
    %33 = vector.broadcast %cst_10 : f32 to vector<1x32x256xf32>
    %34 = arith.select %31, %32, %33 : vector<1x32x256xi1>, vector<1x32x256xf32>
    %35 = vector.broadcast %34 : vector<1x32x256xf32> to vector<16x32x256xf32>
    %36 = arith.addf %23, %35 : vector<16x32x256xf32>
    %cst_11 = arith.constant dense<0xFF800000> : vector<16x256xf32>
    %37 = vector.multi_reduction <maximumf>, %36, %cst_11 [1] : vector<16x32x256xf32> to vector<16x256xf32>
    %c0_12 = arith.constant 0 : index
    %c0_13 = arith.constant 0 : index
    %38 = vector.load %arg3[%c0_12, %c0_13] : memref<1x256xf32, #tpu.memory_space<vmem>>, vector<1x256xf32>
    %39 = vector.broadcast %38 : vector<1x256xf32> to vector<16x256xf32>
    %40 = arith.addf %37, %39 : vector<16x256xf32>
    %cst_14 = arith.constant 0.000000e+00 : f32
    %41 = vector.broadcast %cst_14 : f32 to vector<16x256xf32>
    %42 = arith.maximumf %40, %41 : vector<16x256xf32>
    %c0_15 = arith.constant 0 : index
    %c0_16 = arith.constant 0 : index
    %43 = vector.load %arg4[%c0_15, %c0_16] : memref<256x256xf32, #tpu.memory_space<vmem>>, vector<256x256xf32>
    %cst_17 = arith.constant dense<0.000000e+00> : vector<16x256xf32>
    %44 = tpu.matmul %42, %43, %cst_17 {dimension_numbers = #tpu.dot_dimension_numbers<[1], [0], [0], [1], [0, 0, 1, 1], [], []>} : vector<16x256xf32>, vector<256x256xf32>, vector<16x256xf32> -> vector<16x256xf32>
    %c0_18 = arith.constant 0 : index
    %c0_19 = arith.constant 0 : index
    %45 = vector.load %arg5[%c0_18, %c0_19] : memref<1x256xf32, #tpu.memory_space<vmem>>, vector<1x256xf32>
    %46 = vector.broadcast %45 : vector<1x256xf32> to vector<16x256xf32>
    %47 = arith.addf %44, %46 : vector<16x256xf32>
    %cst_20 = arith.constant 0.000000e+00 : f32
    %48 = vector.broadcast %cst_20 : f32 to vector<16x256xf32>
    %49 = arith.maximumf %47, %48 : vector<16x256xf32>
    %50 = vector.extract_strided_slice %49 {offsets = [0, 0], sizes = [8, 256], strides = [1, 1]} : vector<16x256xf32> to vector<8x256xf32>
    %51 = vector.extract_strided_slice %49 {offsets = [8, 0], sizes = [8, 256], strides = [1, 1]} : vector<16x256xf32> to vector<8x256xf32>
    %52 = arith.subf %50, %51 : vector<8x256xf32>
    %53 = math.absf %52 : vector<8x256xf32>
    %54 = arith.mulf %50, %51 : vector<8x256xf32>
    %c0_21 = arith.constant 0 : index
    %c0_22 = arith.constant 0 : index
    %c0_23 = arith.constant 0 : index
    %55 = vector.load %arg6[%c0_21, %c0_22, %c0_23] : memref<4x256x256xf32, #tpu.memory_space<vmem>>, vector<1x256x256xf32>
    %56 = vector.shape_cast %55 : vector<1x256x256xf32> to vector<256x256xf32>
    %cst_24 = arith.constant dense<0.000000e+00> : vector<8x256xf32>
    %57 = tpu.matmul %50, %56, %cst_24 {dimension_numbers = #tpu.dot_dimension_numbers<[1], [0], [0], [1], [0, 0, 1, 1], [], []>} : vector<8x256xf32>, vector<256x256xf32>, vector<8x256xf32> -> vector<8x256xf32>
    %c1 = arith.constant 1 : index
    %c0_25 = arith.constant 0 : index
    %c0_26 = arith.constant 0 : index
    %58 = vector.load %arg6[%c1, %c0_25, %c0_26] : memref<4x256x256xf32, #tpu.memory_space<vmem>>, vector<1x256x256xf32>
    %59 = vector.shape_cast %58 : vector<1x256x256xf32> to vector<256x256xf32>
    %cst_27 = arith.constant dense<0.000000e+00> : vector<8x256xf32>
    %60 = tpu.matmul %51, %59, %cst_27 {dimension_numbers = #tpu.dot_dimension_numbers<[1], [0], [0], [1], [0, 0, 1, 1], [], []>} : vector<8x256xf32>, vector<256x256xf32>, vector<8x256xf32> -> vector<8x256xf32>
    %61 = arith.addf %57, %60 : vector<8x256xf32>
    %c2 = arith.constant 2 : index
    %c0_28 = arith.constant 0 : index
    %c0_29 = arith.constant 0 : index
    %62 = vector.load %arg6[%c2, %c0_28, %c0_29] : memref<4x256x256xf32, #tpu.memory_space<vmem>>, vector<1x256x256xf32>
    %63 = vector.shape_cast %62 : vector<1x256x256xf32> to vector<256x256xf32>
    %cst_30 = arith.constant dense<0.000000e+00> : vector<8x256xf32>
    %64 = tpu.matmul %53, %63, %cst_30 {dimension_numbers = #tpu.dot_dimension_numbers<[1], [0], [0], [1], [0, 0, 1, 1], [], []>} : vector<8x256xf32>, vector<256x256xf32>, vector<8x256xf32> -> vector<8x256xf32>
    %65 = arith.addf %61, %64 : vector<8x256xf32>
    %c3 = arith.constant 3 : index
    %c0_31 = arith.constant 0 : index
    %c0_32 = arith.constant 0 : index
    %66 = vector.load %arg6[%c3, %c0_31, %c0_32] : memref<4x256x256xf32, #tpu.memory_space<vmem>>, vector<1x256x256xf32>
    %67 = vector.shape_cast %66 : vector<1x256x256xf32> to vector<256x256xf32>
    %cst_33 = arith.constant dense<0.000000e+00> : vector<8x256xf32>
    %68 = tpu.matmul %54, %67, %cst_33 {dimension_numbers = #tpu.dot_dimension_numbers<[1], [0], [0], [1], [0, 0, 1, 1], [], []>} : vector<8x256xf32>, vector<256x256xf32>, vector<8x256xf32> -> vector<8x256xf32>
    %69 = arith.addf %65, %68 : vector<8x256xf32>
    %c0_34 = arith.constant 0 : index
    %c0_35 = arith.constant 0 : index
    %70 = vector.load %arg7[%c0_34, %c0_35] : memref<1x256xf32, #tpu.memory_space<vmem>>, vector<1x256xf32>
    %71 = vector.broadcast %70 : vector<1x256xf32> to vector<8x256xf32>
    %72 = arith.addf %69, %71 : vector<8x256xf32>
    %cst_36 = arith.constant 0.000000e+00 : f32
    %73 = vector.broadcast %cst_36 : f32 to vector<8x256xf32>
    %74 = arith.maximumf %72, %73 : vector<8x256xf32>
    %c0_37 = arith.constant 0 : index
    %c0_38 = arith.constant 0 : index
    %75 = vector.load %arg8[%c0_37, %c0_38] : memref<1x256xf32, #tpu.memory_space<vmem>>, vector<1x256xf32>
    %76 = vector.broadcast %75 : vector<1x256xf32> to vector<8x256xf32>
    %77 = arith.mulf %74, %76 : vector<8x256xf32>
    %cst_39 = arith.constant dense<0.000000e+00> : vector<8xf32>
    %78 = vector.multi_reduction <add>, %77, %cst_39 [1] : vector<8x256xf32> to vector<8xf32>
    %79 = vector.shape_cast %78 : vector<8xf32> to vector<8x1xf32>
    %c0_40 = arith.constant 0 : index
    %c0_41 = arith.constant 0 : index
    %80 = vector.load %arg9[%c0_40, %c0_41] : memref<1x1xf32, #tpu.memory_space<vmem>>, vector<1x1xf32>
    %81 = vector.broadcast %80 : vector<1x1xf32> to vector<8x1xf32>
    %82 = arith.addf %79, %81 : vector<8x1xf32>
    %83 = vector.shape_cast %82 : vector<8x1xf32> to vector<8x1xf32>
    %84 = vector.broadcast %83 : vector<8x1xf32> to vector<8x128xf32>
    %c0_42 = arith.constant 0 : index
    %c0_43 = arith.constant 0 : index
    %85 = vector.load %arg10[%c0_42, %c0_43] : memref<8x128xf32, #tpu.memory_space<vmem>>, vector<8x128xf32>
    tpu.vector_store %arg10[%c0_42, %c0_43], %84 {strides = array<i32>} : memref<8x128xf32, #tpu.memory_space<vmem>>, vector<8x128xf32>,
    return
  }
  func.func @transform_0(%arg0: i32) -> (i32, i32) {
    %c0_i32 = arith.constant 0 : i32
    %c0_i32_0 = arith.constant 0 : i32
    return %arg0, %c0_i32 : i32, i32
  }
  func.func @transform_1(%arg0: i32) -> (i32, i32) {
    %c0_i32 = arith.constant 0 : i32
    %c0_i32_0 = arith.constant 0 : i32
    %c0_i32_1 = arith.constant 0 : i32
    return %c0_i32, %c0_i32_0 : i32, i32
  }
  func.func @transform_2(%arg0: i32) -> (i32, i32) {
    %c0_i32 = arith.constant 0 : i32
    %c0_i32_0 = arith.constant 0 : i32
    %c0_i32_1 = arith.constant 0 : i32
    return %c0_i32, %c0_i32_0 : i32, i32
  }
  func.func @transform_3(%arg0: i32) -> (i32, i32) {
    %c0_i32 = arith.constant 0 : i32
    %c0_i32_0 = arith.constant 0 : i32
    %c0_i32_1 = arith.constant 0 : i32
    return %c0_i32, %c0_i32_0 : i32, i32
  }
  func.func @transform_4(%arg0: i32) -> (i32, i32) {
    %c0_i32 = arith.constant 0 : i32
    %c0_i32_0 = arith.constant 0 : i32
    %c0_i32_1 = arith.constant 0 : i32
    return %c0_i32, %c0_i32_0 : i32, i32
  }
  func.func @transform_5(%arg0: i32) -> (i32, i32, i32) {
    %c0_i32 = arith.constant 0 : i32
    %c0_i32_0 = arith.constant 0 : i32
    %c0_i32_1 = arith.constant 0 : i32
    %c0_i32_2 = arith.constant 0 : i32
    return %c0_i32, %c0_i32_0, %c0_i32_1 : i32, i32, i32
  }
  func.func @transform_6(%arg0: i32) -> (i32, i32) {
    %c0_i32 = arith.constant 0 : i32
    %c0_i32_0 = arith.constant 0 : i32
    %c0_i32_1 = arith.constant 0 : i32
    return %c0_i32, %c0_i32_0 : i32, i32
  }
  func.func @transform_7(%arg0: i32) -> (i32, i32) {
    %c0_i32 = arith.constant 0 : i32
    %c0_i32_0 = arith.constant 0 : i32
    %c0_i32_1 = arith.constant 0 : i32
    return %c0_i32, %c0_i32_0 : i32, i32
  }
  func.func @transform_8(%arg0: i32) -> (i32, i32) {
    %c0_i32 = arith.constant 0 : i32
    %c0_i32_0 = arith.constant 0 : i32
    %c0_i32_1 = arith.constant 0 : i32
    return %c0_i32, %c0_i32_0 : i32, i32
  }
  func.func @transform_9(%arg0: i32) -> (i32, i32) {
    %c0_i32 = arith.constant 0 : i32
    %c0_i32_0 = arith.constant 0 : i32
    return %arg0, %c0_i32 : i32, i32
  }
}

</mosaic_0001>

<llo_original>
// kernel: cnn_forward.1
$region0: #{cnn_forward.1}
  #allocation0 [shape = 'u32[]', space=smem, size = 0x4, offset = 0x4, fixed_abs, tag = 'smem constant byte address 0x4 - core index']
  #allocation1 [shape = 'u32[144,128]{1,0:T(1,128)}', space=vmem, size = 0x12000, scoped, tag = 'internal scratch']
  #allocation2 [shape = 'f32[1,1]{1,0:T(1,128)S(1)}', space=vmem, size = 0x200, scoped, tag = 'scoped memory for cnn_forward.1']
  %s0 = inlined_call_operand.vmem [shape: s32[512,3], index: 0, kind: input, shape index: {}]
  %s1 = inlined_call_operand.vmem [shape: f32[192,256], index: 1, kind: input, shape index: {}]
  %s2 = inlined_call_operand.vmem [shape: f32[1,256], index: 2, kind: input, shape index: {}]
  %s3 = inlined_call_operand.vmem [shape: f32[256,256], index: 3, kind: input, shape index: {}]
  %s4 = inlined_call_operand.vmem [shape: f32[1,256], index: 4, kind: input, shape index: {}]
  %s5 = inlined_call_operand.vmem [shape: f32[4,256,256], index: 5, kind: input, shape index: {}]
  %s6 = inlined_call_operand.vmem [shape: f32[1,256], index: 6, kind: input, shape index: {}]
  %s7 = inlined_call_operand.vmem [shape: f32[1,256], index: 7, kind: input, shape index: {}]
  %s8 = inlined_call_operand.<no memory space> [shape: f32[1,1], index: 8, kind: input, shape index: {}]
  %s9 = inlined_call_operand.vmem [shape: f32[8,128], index: 9, kind: output, shape index: {}]
  %s10 = sld [smem:[#allocation0]]
  $region46: #{cnn_forward.1} parent=0
    _
  %s12 = ssub.s32 1, %s10
  %s13 = scalar_select 0, %s12, %s10
  %v14 = vstv %s8
  %15 = vst [vmem:[#allocation2] sm:$0x1] %v14
  // Predicated region
  $region2: #{cnn_forward.1} parent=0 // pred_check
    _
  $region3: #{cnn_forward.1} parent=0 // pred_check_branch
    %17 = sbr.rel (0) target = $region5
  $region4: #{cnn_forward.1} parent=0 // pred_region
    _
  $region5: #{cnn_forward.1} parent=0 // pred_fallthru
    _
  // Predicated region
  $region6: #{cnn_forward.1} parent=0 // pred_check
    _
  $region7: #{cnn_forward.1} parent=0 // pred_check_branch
    %19 = sbr.rel (0) target = $region9
  $region8: #{cnn_forward.1} parent=0 // pred_region
    _
  $region9: #{cnn_forward.1} parent=0 // pred_fallthru
    _
  // Predicated region
  $region10: #{cnn_forward.1} parent=0 // pred_check
    _
  $region11: #{cnn_forward.1} parent=0 // pred_check_branch
    %21 = sbr.rel (0) target = $region13
  $region12: #{cnn_forward.1} parent=0 // pred_region
    _
  $region13: #{cnn_forward.1} parent=0 // pred_fallthru
    _
  // Predicated region
  $region14: #{cnn_forward.1} parent=0 // pred_check
    _
  $region15: #{cnn_forward.1} parent=0 // pred_check_branch
    %23 = sbr.rel (0) target = $region17
  $region16: #{cnn_forward.1} parent=0 // pred_region
    _
  $region17: #{cnn_forward.1} parent=0 // pred_fallthru
    _
  // Predicated region
  $region18: #{cnn_forward.1} parent=0 // pred_check
    _
  $region19: #{cnn_forward.1} parent=0 // pred_check_branch
    %25 = sbr.rel (0) target = $region21
  $region20: #{cnn_forward.1} parent=0 // pred_region
    _
  $region21: #{cnn_forward.1} parent=0 // pred_fallthru
    _
  // Predicated region
  $region22: #{cnn_forward.1} parent=0 // pred_check
    _
  $region23: #{cnn_forward.1} parent=0 // pred_check_branch
    %27 = sbr.rel (0) target = $region25
  $region24: #{cnn_forward.1} parent=0 // pred_region
    _
  $region25: #{cnn_forward.1} parent=0 // pred_fallthru
    _
  // Predicated region
  $region26: #{cnn_forward.1} parent=0 // pred_check
    _
  $region27: #{cnn_forward.1} parent=0 // pred_check_branch
    %29 = sbr.rel (0) target = $region29
  $region28: #{cnn_forward.1} parent=0 // pred_region
    _
  $region29: #{cnn_forward.1} parent=0 // pred_fallthru
    _
  // Predicated region
  $region30: #{cnn_forward.1} parent=0 // pred_check
    _
  $region31: #{cnn_forward.1} parent=0 // pred_check_branch
    %31 = sbr.rel (0) target = $region33
  $region32: #{cnn_forward.1} parent=0 // pred_region
    _
  $region33: #{cnn_forward.1} parent=0 // pred_fallthru
    _
  // Predicated region
  $region34: #{cnn_forward.1} parent=0 // pred_check
    _
  $region35: #{cnn_forward.1} parent=0 // pred_check_branch
    %33 = sbr.rel (0) target = $region37
  $region36: #{cnn_forward.1} parent=0 // pred_region
    _
  $region37: #{cnn_forward.1} parent=0 // pred_fallthru
    _
  %v34 = vld [vmem:[%s0] sm:$0xff]
  %v35 = vld [vmem:[%s0 + $0x8] sm:$0xff]
  %v36 = vld [vmem:[%s0 + $0x10] sm:$0xff]
  %v37 = vld [vmem:[%s0 + $0x18] sm:$0xff]
  %v38 = vld [vmem:[%s0 + $0x20] sm:$0xff]
  %v39 = vld [vmem:[%s0 + $0x28] sm:$0xff]
  %v40 = vld [vmem:[%s0 + $0x30] sm:$0xff]
  %v41 = vld [vmem:[%s0 + $0x38] sm:$0xff]
  %v42 = vld [vmem:[%s0 + $0x40] sm:$0xff]
  %v43 = vld [vmem:[%s0 + $0x48] sm:$0xff]
  %v44 = vld [vmem:[%s0 + $0x50] sm:$0xff]
  %v45 = vld [vmem:[%s0 + $0x58] sm:$0xff]
  %v46 = vld [vmem:[%s0 + $0x60] sm:$0xff]
  %v47 = vld [vmem:[%s0 + $0x68] sm:$0xff]
  %v48 = vld [vmem:[%s0 + $0x70] sm:$0xff]
  %v49 = vld [vmem:[%s0 + $0x78] sm:$0xff]
  %v50 = vld [vmem:[%s0 + $0x80] sm:$0xff]
  %v51 = vld [vmem:[%s0 + $0x88] sm:$0xff]
  %v52 = vld [vmem:[%s0 + $0x90] sm:$0xff]
  %v53 = vld [vmem:[%s0 + $0x98] sm:$0xff]
  %v54 = vld [vmem:[%s0 + $0xa0] sm:$0xff]
  %v55 = vld [vmem:[%s0 + $0xa8] sm:$0xff]
  %v56 = vld [vmem:[%s0 + $0xb0] sm:$0xff]
  %v57 = vld [vmem:[%s0 + $0xb8] sm:$0xff]
  %v58 = vld [vmem:[%s0 + $0xc0] sm:$0xff]
  %v59 = vld [vmem:[%s0 + $0xc8] sm:$0xff]
  %v60 = vld [vmem:[%s0 + $0xd0] sm:$0xff]
  %v61 = vld [vmem:[%s0 + $0xd8] sm:$0xff]
  %v62 = vld [vmem:[%s0 + $0xe0] sm:$0xff]
  %v63 = vld [vmem:[%s0 + $0xe8] sm:$0xff]
  %v64 = vld [vmem:[%s0 + $0xf0] sm:$0xff]
  %v65 = vld [vmem:[%s0 + $0xf8] sm:$0xff]
  %v66 = vld [vmem:[%s0 + $0x100] sm:$0xff]
  %v67 = vld [vmem:[%s0 + $0x108] sm:$0xff]
  %v68 = vld [vmem:[%s0 + $0x110] sm:$0xff]
  %v69 = vld [vmem:[%s0 + $0x118] sm:$0xff]
  %v70 = vld [vmem:[%s0 + $0x120] sm:$0xff]
  %v71 = vld [vmem:[%s0 + $0x128] sm:$0xff]
  %v72 = vld [vmem:[%s0 + $0x130] sm:$0xff]
  %v73 = vld [vmem:[%s0 + $0x138] sm:$0xff]
  %v74 = vld [vmem:[%s0 + $0x140] sm:$0xff]
  %v75 = vld [vmem:[%s0 + $0x148] sm:$0xff]
  %v76 = vld [vmem:[%s0 + $0x150] sm:$0xff]
  %v77 = vld [vmem:[%s0 + $0x158] sm:$0xff]
  %v78 = vld [vmem:[%s0 + $0x160] sm:$0xff]
  %v79 = vld [vmem:[%s0 + $0x168] sm:$0xff]
  %v80 = vld [vmem:[%s0 + $0x170] sm:$0xff]
  %v81 = vld [vmem:[%s0 + $0x178] sm:$0xff]
  %v82 = vld [vmem:[%s0 + $0x180] sm:$0xff]
  %v83 = vld [vmem:[%s0 + $0x188] sm:$0xff]
  %v84 = vld [vmem:[%s0 + $0x190] sm:$0xff]
  %v85 = vld [vmem:[%s0 + $0x198] sm:$0xff]
  %v86 = vld [vmem:[%s0 + $0x1a0] sm:$0xff]
  %v87 = vld [vmem:[%s0 + $0x1a8] sm:$0xff]
  %v88 = vld [vmem:[%s0 + $0x1b0] sm:$0xff]
  %v89 = vld [vmem:[%s0 + $0x1b8] sm:$0xff]
  %v90 = vld [vmem:[%s0 + $0x1c0] sm:$0xff]
  %v91 = vld [vmem:[%s0 + $0x1c8] sm:$0xff]
  %v92 = vld [vmem:[%s0 + $0x1d0] sm:$0xff]
  %v93 = vld [vmem:[%s0 + $0x1d8] sm:$0xff]
  %v94 = vld [vmem:[%s0 + $0x1e0] sm:$0xff]
  %v95 = vld [vmem:[%s0 + $0x1e8] sm:$0xff]
  %v96 = vld [vmem:[%s0 + $0x1f0] sm:$0xff]
  %v97 = vld [vmem:[%s0 + $0x1f8] sm:$0xff]
  %v98 = vlaneseq
  %v99 = vand.u32 %v98, 127
  %100 = vset.pattern.permute.xlu0 0
  %101 = vperm.xlu0 %100, %v34
  %v102 = vpop.permute.xlu0 %101
  %103 = vset.pattern.permute.xlu0 0
  %104 = vperm.xlu0 %103, %v35
  %v105 = vpop.permute.xlu0 %104
  %106 = vset.pattern.permute.xlu0 0
  %107 = vperm.xlu0 %106, %v36
  %v108 = vpop.permute.xlu0 %107
  %109 = vset.pattern.permute.xlu0 0
  %110 = vperm.xlu0 %109, %v37
  %v111 = vpop.permute.xlu0 %110
  %112 = vset.pattern.permute.xlu0 0
  %113 = vperm.xlu0 %112, %v38
  %v114 = vpop.permute.xlu0 %113
  %115 = vset.pattern.permute.xlu0 0
  %116 = vperm.xlu0 %115, %v39
  %v117 = vpop.permute.xlu0 %116
  %118 = vset.pattern.permute.xlu0 0
  %119 = vperm.xlu0 %118, %v40
  %v120 = vpop.permute.xlu0 %119
  %121 = vset.pattern.permute.xlu0 0
  %122 = vperm.xlu0 %121, %v41
  %v123 = vpop.permute.xlu0 %122
  %124 = vset.pattern.permute.xlu0 0
  %125 = vperm.xlu0 %124, %v42
  %v126 = vpop.permute.xlu0 %125
  %127 = vset.pattern.permute.xlu0 0
  %128 = vperm.xlu0 %127, %v43
  %v129 = vpop.permute.xlu0 %128
  %130 = vset.pattern.permute.xlu0 0
  %131 = vperm.xlu0 %130, %v44
  %v132 = vpop.permute.xlu0 %131
  %133 = vset.pattern.permute.xlu0 0
  %134 = vperm.xlu0 %133, %v45
  %v135 = vpop.permute.xlu0 %134
  %136 = vset.pattern.permute.xlu0 0
  %137 = vperm.xlu0 %136, %v46
  %v138 = vpop.permute.xlu0 %137
  %139 = vset.pattern.permute.xlu0 0
  %140 = vperm.xlu0 %139, %v47
  %v141 = vpop.permute.xlu0 %140
  %142 = vset.pattern.permute.xlu0 0
  %143 = vperm.xlu0 %142, %v48
  %v144 = vpop.permute.xlu0 %143
  %145 = vset.pattern.permute.xlu0 0
  %146 = vperm.xlu0 %145, %v49
  %v147 = vpop.permute.xlu0 %146
  %148 = vset.pattern.permute.xlu0 0
  %149 = vperm.xlu0 %148, %v50
  %v150 = vpop.permute.xlu0 %149
  %151 = vset.pattern.permute.xlu0 0
  %152 = vperm.xlu0 %151, %v51
  %v153 = vpop.permute.xlu0 %152
  %154 = vset.pattern.permute.xlu0 0
  %155 = vperm.xlu0 %154, %v52
  %v156 = vpop.permute.xlu0 %155
  %157 = vset.pattern.permute.xlu0 0
  %158 = vperm.xlu0 %157, %v53
  %v159 = vpop.permute.xlu0 %158
  %160 = vset.pattern.permute.xlu0 0
  %161 = vperm.xlu0 %160, %v54
  %v162 = vpop.permute.xlu0 %161
  %163 = vset.pattern.permute.xlu0 0
  %164 = vperm.xlu0 %163, %v55
  %v165 = vpop.permute.xlu0 %164
  %166 = vset.pattern.permute.xlu0 0
  %167 = vperm.xlu0 %166, %v56
  %v168 = vpop.permute.xlu0 %167
  %169 = vset.pattern.permute.xlu0 0
  %170 = vperm.xlu0 %169, %v57
  %v171 = vpop.permute.xlu0 %170
  %172 = vset.pattern.permute.xlu0 0
  %173 = vperm.xlu0 %172, %v58
  %v174 = vpop.permute.xlu0 %173
  %175 = vset.pattern.permute.xlu0 0
  %176 = vperm.xlu0 %175, %v59
  %v177 = vpop.permute.xlu0 %176
  %178 = vset.pattern.permute.xlu0 0
  %179 = vperm.xlu0 %178, %v60
  %v180 = vpop.permute.xlu0 %179
  %181 = vset.pattern.permute.xlu0 0
  %182 = vperm.xlu0 %181, %v61
  %v183 = vpop.permute.xlu0 %182
  %184 = vset.pattern.permute.xlu0 0
  %185 = vperm.xlu0 %184, %v62
  %v186 = vpop.permute.xlu0 %185
  %187 = vset.pattern.permute.xlu0 0
  %188 = vperm.xlu0 %187, %v63
  %v189 = vpop.permute.xlu0 %188
  %190 = vset.pattern.permute.xlu0 0
  %191 = vperm.xlu0 %190, %v64
  %v192 = vpop.permute.xlu0 %191
  %193 = vset.pattern.permute.xlu0 0
  %194 = vperm.xlu0 %193, %v65
  %v195 = vpop.permute.xlu0 %194
  %196 = vset.pattern.permute.xlu0 0
  %197 = vperm.xlu0 %196, %v66
  %v198 = vpop.permute.xlu0 %197
  %199 = vset.pattern.permute.xlu0 0
  %200 = vperm.xlu0 %199, %v67
  %v201 = vpop.permute.xlu0 %200
  %202 = vset.pattern.permute.xlu0 0
  %203 = vperm.xlu0 %202, %v68
  %v204 = vpop.permute.xlu0 %203
  %205 = vset.pattern.permute.xlu0 0
  %206 = vperm.xlu0 %205, %v69
  %v207 = vpop.permute.xlu0 %206
  %208 = vset.pattern.permute.xlu0 0
  %209 = vperm.xlu0 %208, %v70
  %v210 = vpop.permute.xlu0 %209
  %211 = vset.pattern.permute.xlu0 0
  %212 = vperm.xlu0 %211, %v71
  %v213 = vpop.permute.xlu0 %212
  %214 = vset.pattern.permute.xlu0 0
  %215 = vperm.xlu0 %214, %v72
  %v216 = vpop.permute.xlu0 %215
  %217 = vset.pattern.permute.xlu0 0
  %218 = vperm.xlu0 %217, %v73
  %v219 = vpop.permute.xlu0 %218
  %220 = vset.pattern.permute.xlu0 0
  %221 = vperm.xlu0 %220, %v74
  %v222 = vpop.permute.xlu0 %221
  %223 = vset.pattern.permute.xlu0 0
  %224 = vperm.xlu0 %223, %v75
  %v225 = vpop.permute.xlu0 %224
  %226 = vset.pattern.permute.xlu0 0
  %227 = vperm.xlu0 %226, %v76
  %v228 = vpop.permute.xlu0 %227
  %229 = vset.pattern.permute.xlu0 0
  %230 = vperm.xlu0 %229, %v77
  %v231 = vpop.permute.xlu0 %230
  %232 = vset.pattern.permute.xlu0 0
  %233 = vperm.xlu0 %232, %v78
  %v234 = vpop.permute.xlu0 %233
  %235 = vset.pattern.permute.xlu0 0
  %236 = vperm.xlu0 %235, %v79
  %v237 = vpop.permute.xlu0 %236
  %238 = vset.pattern.permute.xlu0 0
  %239 = vperm.xlu0 %238, %v80
  %v240 = vpop.permute.xlu0 %239
  %241 = vset.pattern.permute.xlu0 0
  %242 = vperm.xlu0 %241, %v81
  %v243 = vpop.permute.xlu0 %242
  %244 = vset.pattern.permute.xlu0 0
  %245 = vperm.xlu0 %244, %v82
  %v246 = vpop.permute.xlu0 %245
  %247 = vset.pattern.permute.xlu0 0
  %248 = vperm.xlu0 %247, %v83
  %v249 = vpop.permute.xlu0 %248
  %250 = vset.pattern.permute.xlu0 0
  %251 = vperm.xlu0 %250, %v84
  %v252 = vpop.permute.xlu0 %251
  %253 = vset.pattern.permute.xlu0 0
  %254 = vperm.xlu0 %253, %v85
  %v255 = vpop.permute.xlu0 %254
  %256 = vset.pattern.permute.xlu0 0
  %257 = vperm.xlu0 %256, %v86
  %v258 = vpop.permute.xlu0 %257
  %259 = vset.pattern.permute.xlu0 0
  %260 = vperm.xlu0 %259, %v87
  %v261 = vpop.permute.xlu0 %260
  %262 = vset.pattern.permute.xlu0 0
  %263 = vperm.xlu0 %262, %v88
  %v264 = vpop.permute.xlu0 %263
  %265 = vset.pattern.permute.xlu0 0
  %266 = vperm.xlu0 %265, %v89
  %v267 = vpop.permute.xlu0 %266
  %268 = vset.pattern.permute.xlu0 0
  %269 = vperm.xlu0 %268, %v90
  %v270 = vpop.permute.xlu0 %269
  %271 = vset.pattern.permute.xlu0 0
  %272 = vperm.xlu0 %271, %v91
  %v273 = vpop.permute.xlu0 %272
  %274 = vset.pattern.permute.xlu0 0
  %275 = vperm.xlu0 %274, %v92
  %v276 = vpop.permute.xlu0 %275
  %277 = vset.pattern.permute.xlu0 0
  %278 = vperm.xlu0 %277, %v93
  %v279 = vpop.permute.xlu0 %278
  %280 = vset.pattern.permute.xlu0 0
  %281 = vperm.xlu0 %280, %v94
  %v282 = vpop.permute.xlu0 %281
  %283 = vset.pattern.permute.xlu0 0
  %284 = vperm.xlu0 %283, %v95
  %v285 = vpop.permute.xlu0 %284
  %286 = vset.pattern.permute.xlu0 0
  %287 = vperm.xlu0 %286, %v96
  %v288 = vpop.permute.xlu0 %287
  %289 = vset.pattern.permute.xlu0 0
  %290 = vperm.xlu0 %289, %v97
  %v291 = vpop.permute.xlu0 %290
  %vm292 = vcmp.eq.s32.totalorder %v99, %v102
  %vm293 = vcmp.eq.s32.totalorder %v99, %v105
  %vm294 = vcmp.eq.s32.totalorder %v99, %v108
  %vm295 = vcmp.eq.s32.totalorder %v99, %v111
  %vm296 = vcmp.eq.s32.totalorder %v99, %v114
  %vm297 = vcmp.eq.s32.totalorder %v99, %v117
  %vm298 = vcmp.eq.s32.totalorder %v99, %v120
  %vm299 = vcmp.eq.s32.totalorder %v99, %v123
  %vm300 = vcmp.eq.s32.totalorder %v99, %v126
  %vm301 = vcmp.eq.s32.totalorder %v99, %v129
  %vm302 = vcmp.eq.s32.totalorder %v99, %v132
  %vm303 = vcmp.eq.s32.totalorder %v99, %v135
  %vm304 = vcmp.eq.s32.totalorder %v99, %v138
  %vm305 = vcmp.eq.s32.totalorder %v99, %v141
  %vm306 = vcmp.eq.s32.totalorder %v99, %v144
  %vm307 = vcmp.eq.s32.totalorder %v99, %v147
  %vm308 = vcmp.eq.s32.totalorder %v99, %v150
  %vm309 = vcmp.eq.s32.totalorder %v99, %v153
  %vm310 = vcmp.eq.s32.totalorder %v99, %v156
  %vm311 = vcmp.eq.s32.totalorder %v99, %v159
  %vm312 = vcmp.eq.s32.totalorder %v99, %v162
  %vm313 = vcmp.eq.s32.totalorder %v99, %v165
  %vm314 = vcmp.eq.s32.totalorder %v99, %v168
  %vm315 = vcmp.eq.s32.totalorder %v99, %v171
  %vm316 = vcmp.eq.s32.totalorder %v99, %v174
  %vm317 = vcmp.eq.s32.totalorder %v99, %v177
  %vm318 = vcmp.eq.s32.totalorder %v99, %v180
  %vm319 = vcmp.eq.s32.totalorder %v99, %v183
  %vm320 = vcmp.eq.s32.totalorder %v99, %v186
  %vm321 = vcmp.eq.s32.totalorder %v99, %v189
  %vm322 = vcmp.eq.s32.totalorder %v99, %v192
  %vm323 = vcmp.eq.s32.totalorder %v99, %v195
  %vm324 = vcmp.eq.s32.totalorder %v99, %v198
  %vm325 = vcmp.eq.s32.totalorder %v99, %v201
  %vm326 = vcmp.eq.s32.totalorder %v99, %v204
  %vm327 = vcmp.eq.s32.totalorder %v99, %v207
  %vm328 = vcmp.eq.s32.totalorder %v99, %v210
  %vm329 = vcmp.eq.s32.totalorder %v99, %v213
  %vm330 = vcmp.eq.s32.totalorder %v99, %v216
  %vm331 = vcmp.eq.s32.totalorder %v99, %v219
  %vm332 = vcmp.eq.s32.totalorder %v99, %v222
  %vm333 = vcmp.eq.s32.totalorder %v99, %v225
  %vm334 = vcmp.eq.s32.totalorder %v99, %v228
  %vm335 = vcmp.eq.s32.totalorder %v99, %v231
  %vm336 = vcmp.eq.s32.totalorder %v99, %v234
  %vm337 = vcmp.eq.s32.totalorder %v99, %v237
  %vm338 = vcmp.eq.s32.totalorder %v99, %v240
  %vm339 = vcmp.eq.s32.totalorder %v99, %v243
  %vm340 = vcmp.eq.s32.totalorder %v99, %v246
  %vm341 = vcmp.eq.s32.totalorder %v99, %v249
  %vm342 = vcmp.eq.s32.totalorder %v99, %v252
  %vm343 = vcmp.eq.s32.totalorder %v99, %v255
  %vm344 = vcmp.eq.s32.totalorder %v99, %v258
  %vm345 = vcmp.eq.s32.totalorder %v99, %v261
  %vm346 = vcmp.eq.s32.totalorder %v99, %v264
  %vm347 = vcmp.eq.s32.totalorder %v99, %v267
  %vm348 = vcmp.eq.s32.totalorder %v99, %v270
  %vm349 = vcmp.eq.s32.totalorder %v99, %v273
  %vm350 = vcmp.eq.s32.totalorder %v99, %v276
  %vm351 = vcmp.eq.s32.totalorder %v99, %v279
  %vm352 = vcmp.eq.s32.totalorder %v99, %v282
  %vm353 = vcmp.eq.s32.totalorder %v99, %v285
  %vm354 = vcmp.eq.s32.totalorder %v99, %v288
  %vm355 = vcmp.eq.s32.totalorder %v99, %v291
  %v356 = vsel %vm292, 1.0, 0.0
  %v357 = vsel %vm293, 1.0, 0.0
  %v358 = vsel %vm294, 1.0, 0.0
  %v359 = vsel %vm295, 1.0, 0.0
  %v360 = vsel %vm296, 1.0, 0.0
  %v361 = vsel %vm297, 1.0, 0.0
  %v362 = vsel %vm298, 1.0, 0.0
  %v363 = vsel %vm299, 1.0, 0.0
  %v364 = vsel %vm300, 1.0, 0.0
  %v365 = vsel %vm301, 1.0, 0.0
  %v366 = vsel %vm302, 1.0, 0.0
  %v367 = vsel %vm303, 1.0, 0.0
  %v368 = vsel %vm304, 1.0, 0.0
  %v369 = vsel %vm305, 1.0, 0.0
  %v370 = vsel %vm306, 1.0, 0.0
  %v371 = vsel %vm307, 1.0, 0.0
  %v372 = vsel %vm308, 1.0, 0.0
  %v373 = vsel %vm309, 1.0, 0.0
  %v374 = vsel %vm310, 1.0, 0.0
  %v375 = vsel %vm311, 1.0, 0.0
  %v376 = vsel %vm312, 1.0, 0.0
  %v377 = vsel %vm313, 1.0, 0.0
  %v378 = vsel %vm314, 1.0, 0.0
  %v379 = vsel %vm315, 1.0, 0.0
  %v380 = vsel %vm316, 1.0, 0.0
  %v381 = vsel %vm317, 1.0, 0.0
  %v382 = vsel %vm318, 1.0, 0.0
  %v383 = vsel %vm319, 1.0, 0.0
  %v384 = vsel %vm320, 1.0, 0.0
  %v385 = vsel %vm321, 1.0, 0.0
  %v386 = vsel %vm322, 1.0, 0.0
  %v387 = vsel %vm323, 1.0, 0.0
  %v388 = vsel %vm324, 1.0, 0.0
  %v389 = vsel %vm325, 1.0, 0.0
  %v390 = vsel %vm326, 1.0, 0.0
  %v391 = vsel %vm327, 1.0, 0.0
  %v392 = vsel %vm328, 1.0, 0.0
  %v393 = vsel %vm329, 1.0, 0.0
  %v394 = vsel %vm330, 1.0, 0.0
  %v395 = vsel %vm331, 1.0, 0.0
  %v396 = vsel %vm332, 1.0, 0.0
  %v397 = vsel %vm333, 1.0, 0.0
  %v398 = vsel %vm334, 1.0, 0.0
  %v399 = vsel %vm335, 1.0, 0.0
  %v400 = vsel %vm336, 1.0, 0.0
  %v401 = vsel %vm337, 1.0, 0.0
  %v402 = vsel %vm338, 1.0, 0.0
  %v403 = vsel %vm339, 1.0, 0.0
  %v404 = vsel %vm340, 1.0, 0.0
  %v405 = vsel %vm341, 1.0, 0.0
  %v406 = vsel %vm342, 1.0, 0.0
  %v407 = vsel %vm343, 1.0, 0.0
  %v408 = vsel %vm344, 1.0, 0.0
  %v409 = vsel %vm345, 1.0, 0.0
  %v410 = vsel %vm346, 1.0, 0.0
  %v411 = vsel %vm347, 1.0, 0.0
  %v412 = vsel %vm348, 1.0, 0.0
  %v413 = vsel %vm349, 1.0, 0.0
  %v414 = vsel %vm350, 1.0, 0.0
  %v415 = vsel %vm351, 1.0, 0.0
  %v416 = vsel %vm352, 1.0, 0.0
  %v417 = vsel %vm353, 1.0, 0.0
  %v418 = vsel %vm354, 1.0, 0.0
  %v419 = vsel %vm355, 1.0, 0.0
  %420 = vset.pattern.permute.xlu0 1
  %421 = vperm.xlu0 %420, %v34
  %v422 = vpop.permute.xlu0 %421
  %423 = vset.pattern.permute.xlu0 1
  %424 = vperm.xlu0 %423, %v35
  %v425 = vpop.permute.xlu0 %424
  %426 = vset.pattern.permute.xlu0 1
  %427 = vperm.xlu0 %426, %v36
  %v428 = vpop.permute.xlu0 %427
  %429 = vset.pattern.permute.xlu0 1
  %430 = vperm.xlu0 %429, %v37
  %v431 = vpop.permute.xlu0 %430
  %432 = vset.pattern.permute.xlu0 1
  %433 = vperm.xlu0 %432, %v38
  %v434 = vpop.permute.xlu0 %433
  %435 = vset.pattern.permute.xlu0 1
  %436 = vperm.xlu0 %435, %v39
  %v437 = vpop.permute.xlu0 %436
  %438 = vset.pattern.permute.xlu0 1
  %439 = vperm.xlu0 %438, %v40
  %v440 = vpop.permute.xlu0 %439
  %441 = vset.pattern.permute.xlu0 1
  %442 = vperm.xlu0 %441, %v41
  %v443 = vpop.permute.xlu0 %442
  %444 = vset.pattern.permute.xlu0 1
  %445 = vperm.xlu0 %444, %v42
  %v446 = vpop.permute.xlu0 %445
  %447 = vset.pattern.permute.xlu0 1
  %448 = vperm.xlu0 %447, %v43
  %v449 = vpop.permute.xlu0 %448
  %450 = vset.pattern.permute.xlu0 1
  %451 = vperm.xlu0 %450, %v44
  %v452 = vpop.permute.xlu0 %451
  %453 = vset.pattern.permute.xlu0 1
  %454 = vperm.xlu0 %453, %v45
  %v455 = vpop.permute.xlu0 %454
  %456 = vset.pattern.permute.xlu0 1
  %457 = vperm.xlu0 %456, %v46
  %v458 = vpop.permute.xlu0 %457
  %459 = vset.pattern.permute.xlu0 1
  %460 = vperm.xlu0 %459, %v47
  %v461 = vpop.permute.xlu0 %460
  %462 = vset.pattern.permute.xlu0 1
  %463 = vperm.xlu0 %462, %v48
  %v464 = vpop.permute.xlu0 %463
  %465 = vset.pattern.permute.xlu0 1
  %466 = vperm.xlu0 %465, %v49
  %v467 = vpop.permute.xlu0 %466
  %468 = vset.pattern.permute.xlu0 1
  %469 = vperm.xlu0 %468, %v50
  %v470 = vpop.permute.xlu0 %469
  %471 = vset.pattern.permute.xlu0 1
  %472 = vperm.xlu0 %471, %v51
  %v473 = vpop.permute.xlu0 %472
  %474 = vset.pattern.permute.xlu0 1
  %475 = vperm.xlu0 %474, %v52
  %v476 = vpop.permute.xlu0 %475
  %477 = vset.pattern.permute.xlu0 1
  %478 = vperm.xlu0 %477, %v53
  %v479 = vpop.permute.xlu0 %478
  %480 = vset.pattern.permute.xlu0 1
  %481 = vperm.xlu0 %480, %v54
  %v482 = vpop.permute.xlu0 %481
  %483 = vset.pattern.permute.xlu0 1
  %484 = vperm.xlu0 %483, %v55
  %v485 = vpop.permute.xlu0 %484
  %486 = vset.pattern.permute.xlu0 1
  %487 = vperm.xlu0 %486, %v56
  %v488 = vpop.permute.xlu0 %487
  %489 = vset.pattern.permute.xlu0 1
  %490 = vperm.xlu0 %489, %v57
  %v491 = vpop.permute.xlu0 %490
  %492 = vset.pattern.permute.xlu0 1
  %493 = vperm.xlu0 %492, %v58
  %v494 = vpop.permute.xlu0 %493
  %495 = vset.pattern.permute.xlu0 1
  %496 = vperm.xlu0 %495, %v59
  %v497 = vpop.permute.xlu0 %496
  %498 = vset.pattern.permute.xlu0 1
  %499 = vperm.xlu0 %498, %v60
  %v500 = vpop.permute.xlu0 %499
  %501 = vset.pattern.permute.xlu0 1
  %502 = vperm.xlu0 %501, %v61
  %v503 = vpop.permute.xlu0 %502
  %504 = vset.pattern.permute.xlu0 1
  %505 = vperm.xlu0 %504, %v62
  %v506 = vpop.permute.xlu0 %505
  %507 = vset.pattern.permute.xlu0 1
  %508 = vperm.xlu0 %507, %v63
  %v509 = vpop.permute.xlu0 %508
  %510 = vset.pattern.permute.xlu0 1
  %511 = vperm.xlu0 %510, %v64
  %v512 = vpop.permute.xlu0 %511
  %513 = vset.pattern.permute.xlu0 1
  %514 = vperm.xlu0 %513, %v65
  %v515 = vpop.permute.xlu0 %514
  %516 = vset.pattern.permute.xlu0 1
  %517 = vperm.xlu0 %516, %v66
  %v518 = vpop.permute.xlu0 %517
  %519 = vset.pattern.permute.xlu0 1
  %520 = vperm.xlu0 %519, %v67
  %v521 = vpop.permute.xlu0 %520
  %522 = vset.pattern.permute.xlu0 1
  %523 = vperm.xlu0 %522, %v68
  %v524 = vpop.permute.xlu0 %523
  %525 = vset.pattern.permute.xlu0 1
  %526 = vperm.xlu0 %525, %v69
  %v527 = vpop.permute.xlu0 %526
  %528 = vset.pattern.permute.xlu0 1
  %529 = vperm.xlu0 %528, %v70
  %v530 = vpop.permute.xlu0 %529
  %531 = vset.pattern.permute.xlu0 1
  %532 = vperm.xlu0 %531, %v71
  %v533 = vpop.permute.xlu0 %532
  %534 = vset.pattern.permute.xlu0 1
  %535 = vperm.xlu0 %534, %v72
  %v536 = vpop.permute.xlu0 %535
  %537 = vset.pattern.permute.xlu0 1
  %538 = vperm.xlu0 %537, %v73
  %v539 = vpop.permute.xlu0 %538
  %540 = vset.pattern.permute.xlu0 1
  %541 = vperm.xlu0 %540, %v74
  %v542 = vpop.permute.xlu0 %541
  %543 = vset.pattern.permute.xlu0 1
  %544 = vperm.xlu0 %543, %v75
  %v545 = vpop.permute.xlu0 %544
  %546 = vset.pattern.permute.xlu0 1
  %547 = vperm.xlu0 %546, %v76
  %v548 = vpop.permute.xlu0 %547
  %549 = vset.pattern.permute.xlu0 1
  %550 = vperm.xlu0 %549, %v77
  %v551 = vpop.permute.xlu0 %550
  %552 = vset.pattern.permute.xlu0 1
  %553 = vperm.xlu0 %552, %v78
  %v554 = vpop.permute.xlu0 %553
  %555 = vset.pattern.permute.xlu0 1
  %556 = vperm.xlu0 %555, %v79
  %v557 = vpop.permute.xlu0 %556
  %558 = vset.pattern.permute.xlu0 1
  %559 = vperm.xlu0 %558, %v80
  %v560 = vpop.permute.xlu0 %559
  %561 = vset.pattern.permute.xlu0 1
  %562 = vperm.xlu0 %561, %v81
  %v563 = vpop.permute.xlu0 %562
  %564 = vset.pattern.permute.xlu0 1
  %565 = vperm.xlu0 %564, %v82
  %v566 = vpop.permute.xlu0 %565
  %567 = vset.pattern.permute.xlu0 1
  %568 = vperm.xlu0 %567, %v83
  %v569 = vpop.permute.xlu0 %568
  %570 = vset.pattern.permute.xlu0 1
  %571 = vperm.xlu0 %570, %v84
  %v572 = vpop.permute.xlu0 %571
  %573 = vset.pattern.permute.xlu0 1
  %574 = vperm.xlu0 %573, %v85
  %v575 = vpop.permute.xlu0 %574
  %576 = vset.pattern.permute.xlu0 1
  %577 = vperm.xlu0 %576, %v86
  %v578 = vpop.permute.xlu0 %577
  %579 = vset.pattern.permute.xlu0 1
  %580 = vperm.xlu0 %579, %v87
  %v581 = vpop.permute.xlu0 %580
  %582 = vset.pattern.permute.xlu0 1
  %583 = vperm.xlu0 %582, %v88
  %v584 = vpop.permute.xlu0 %583
  %585 = vset.pattern.permute.xlu0 1
  %586 = vperm.xlu0 %585, %v89
  %v587 = vpop.permute.xlu0 %586
  %588 = vset.pattern.permute.xlu0 1
  %589 = vperm.xlu0 %588, %v90
  %v590 = vpop.permute.xlu0 %589
  %591 = vset.pattern.permute.xlu0 1
  %592 = vperm.xlu0 %591, %v91
  %v593 = vpop.permute.xlu0 %592
  %594 = vset.pattern.permute.xlu0 1
  %595 = vperm.xlu0 %594, %v92
  %v596 = vpop.permute.xlu0 %595
  %597 = vset.pattern.permute.xlu0 1
  %598 = vperm.xlu0 %597, %v93
  %v599 = vpop.permute.xlu0 %598
  %600 = vset.pattern.permute.xlu0 1
  %601 = vperm.xlu0 %600, %v94
  %v602 = vpop.permute.xlu0 %601
  %603 = vset.pattern.permute.xlu0 1
  %604 = vperm.xlu0 %603, %v95
  %v605 = vpop.permute.xlu0 %604
  %606 = vset.pattern.permute.xlu0 1
  %607 = vperm.xlu0 %606, %v96
  %v608 = vpop.permute.xlu0 %607
  %609 = vset.pattern.permute.xlu0 1
  %610 = vperm.xlu0 %609, %v97
  %v611 = vpop.permute.xlu0 %610
  %vm612 = vcmp.eq.s32.totalorder %v99, %v422
  %vm613 = vcmp.eq.s32.totalorder %v99, %v425
  %vm614 = vcmp.eq.s32.totalorder %v99, %v428
  %vm615 = vcmp.eq.s32.totalorder %v99, %v431
  %vm616 = vcmp.eq.s32.totalorder %v99, %v434
  %vm617 = vcmp.eq.s32.totalorder %v99, %v437
  %vm618 = vcmp.eq.s32.totalorder %v99, %v440
  %vm619 = vcmp.eq.s32.totalorder %v99, %v443
  %vm620 = vcmp.eq.s32.totalorder %v99, %v446
  %vm621 = vcmp.eq.s32.totalorder %v99, %v449
  %vm622 = vcmp.eq.s32.totalorder %v99, %v452
  %vm623 = vcmp.eq.s32.totalorder %v99, %v455
  %vm624 = vcmp.eq.s32.totalorder %v99, %v458
  %vm625 = vcmp.eq.s32.totalorder %v99, %v461
  %vm626 = vcmp.eq.s32.totalorder %v99, %v464
  %vm627 = vcmp.eq.s32.totalorder %v99, %v467
  %vm628 = vcmp.eq.s32.totalorder %v99, %v470
  %vm629 = vcmp.eq.s32.totalorder %v99, %v473
  %vm630 = vcmp.eq.s32.totalorder %v99, %v476
  %vm631 = vcmp.eq.s32.totalorder %v99, %v479
  %vm632 = vcmp.eq.s32.totalorder %v99, %v482
  %vm633 = vcmp.eq.s32.totalorder %v99, %v485
  %vm634 = vcmp.eq.s32.totalorder %v99, %v488
  %vm635 = vcmp.eq.s32.totalorder %v99, %v491
  %vm636 = vcmp.eq.s32.totalorder %v99, %v494
  %vm637 = vcmp.eq.s32.totalorder %v99, %v497
  %vm638 = vcmp.eq.s32.totalorder %v99, %v500
  %vm639 = vcmp.eq.s32.totalorder %v99, %v503
  %vm640 = vcmp.eq.s32.totalorder %v99, %v506
  %vm641 = vcmp.eq.s32.totalorder %v99, %v509
  %vm642 = vcmp.eq.s32.totalorder %v99, %v512
  %vm643 = vcmp.eq.s32.totalorder %v99, %v515
  %vm644 = vcmp.eq.s32.totalorder %v99, %v518
  %vm645 = vcmp.eq.s32.totalorder %v99, %v521
  %vm646 = vcmp.eq.s32.totalorder %v99, %v524
  %vm647 = vcmp.eq.s32.totalorder %v99, %v527
  %vm648 = vcmp.eq.s32.totalorder %v99, %v530
  %vm649 = vcmp.eq.s32.totalorder %v99, %v533
  %vm650 = vcmp.eq.s32.totalorder %v99, %v536
  %vm651 = vcmp.eq.s32.totalorder %v99, %v539
  %vm652 = vcmp.eq.s32.totalorder %v99, %v542
  %vm653 = vcmp.eq.s32.totalorder %v99, %v545
  %vm654 = vcmp.eq.s32.totalorder %v99, %v548
  %vm655 = vcmp.eq.s32.totalorder %v99, %v551
  %vm656 = vcmp.eq.s32.totalorder %v99, %v554
  %vm657 = vcmp.eq.s32.totalorder %v99, %v557
  %vm658 = vcmp.eq.s32.totalorder %v99, %v560
  %vm659 = vcmp.eq.s32.totalorder %v99, %v563
  %vm660 = vcmp.eq.s32.totalorder %v99, %v566
  %vm661 = vcmp.eq.s32.totalorder %v99, %v569
  %vm662 = vcmp.eq.s32.totalorder %v99, %v572
  %vm663 = vcmp.eq.s32.totalorder %v99, %v575
  %vm664 = vcmp.eq.s32.totalorder %v99, %v578
  %vm665 = vcmp.eq.s32.totalorder %v99, %v581
  %vm666 = vcmp.eq.s32.totalorder %v99, %v584
  %vm667 = vcmp.eq.s32.totalorder %v99, %v587
  %vm668 = vcmp.eq.s32.totalorder %v99, %v590
  %vm669 = vcmp.eq.s32.totalorder %v99, %v593
  %vm670 = vcmp.eq.s32.totalorder %v99, %v596
  %vm671 = vcmp.eq.s32.totalorder %v99, %v599
  %vm672 = vcmp.eq.s32.totalorder %v99, %v602
  %vm673 = vcmp.eq.s32.totalorder %v99, %v605
  %vm674 = vcmp.eq.s32.totalorder %v99, %v608
  %vm675 = vcmp.eq.s32.totalorder %v99, %v611
  %v676 = vsel %vm612, 1.0, 0.0
  %v677 = vsel %vm613, 1.0, 0.0
  %v678 = vsel %vm614, 1.0, 0.0
  %v679 = vsel %vm615, 1.0, 0.0
  %v680 = vsel %vm616, 1.0, 0.0
  %v681 = vsel %vm617, 1.0, 0.0
  %v682 = vsel %vm618, 1.0, 0.0
  %v683 = vsel %vm619, 1.0, 0.0
  %v684 = vsel %vm620, 1.0, 0.0
  %v685 = vsel %vm621, 1.0, 0.0
  %v686 = vsel %vm622, 1.0, 0.0
  %v687 = vsel %vm623, 1.0, 0.0
  %v688 = vsel %vm624, 1.0, 0.0
  %v689 = vsel %vm625, 1.0, 0.0
  %v690 = vsel %vm626, 1.0, 0.0
  %v691 = vsel %vm627, 1.0, 0.0
  %v692 = vsel %vm628, 1.0, 0.0
  %v693 = vsel %vm629, 1.0, 0.0
  %v694 = vsel %vm630, 1.0, 0.0
  %v695 = vsel %vm631, 1.0, 0.0
  %v696 = vsel %vm632, 1.0, 0.0
  %v697 = vsel %vm633, 1.0, 0.0
  %v698 = vsel %vm634, 1.0, 0.0
  %v699 = vsel %vm635, 1.0, 0.0
  %v700 = vsel %vm636, 1.0, 0.0
  %v701 = vsel %vm637, 1.0, 0.0
  %v702 = vsel %vm638, 1.0, 0.0
  %v703 = vsel %vm639, 1.0, 0.0
  %v704 = vsel %vm640, 1.0, 0.0
  %v705 = vsel %vm641, 1.0, 0.0
  %v706 = vsel %vm642, 1.0, 0.0
  %v707 = vsel %vm643, 1.0, 0.0
  %v708 = vsel %vm644, 1.0, 0.0
  %v709 = vsel %vm645, 1.0, 0.0
  %v710 = vsel %vm646, 1.0, 0.0
  %v711 = vsel %vm647, 1.0, 0.0
  %v712 = vsel %vm648, 1.0, 0.0
  %v713 = vsel %vm649, 1.0, 0.0
  %v714 = vsel %vm650, 1.0, 0.0
  %v715 = vsel %vm651, 1.0, 0.0
  %v716 = vsel %vm652, 1.0, 0.0
  %v717 = vsel %vm653, 1.0, 0.0
  %v718 = vsel %vm654, 1.0, 0.0
  %v719 = vsel %vm655, 1.0, 0.0
  %v720 = vsel %vm656, 1.0, 0.0
  %v721 = vsel %vm657, 1.0, 0.0
  %v722 = vsel %vm658, 1.0, 0.0
  %v723 = vsel %vm659, 1.0, 0.0
  %v724 = vsel %vm660, 1.0, 0.0
  %v725 = vsel %vm661, 1.0, 0.0
  %v726 = vsel %vm662, 1.0, 0.0
  %v727 = vsel %vm663, 1.0, 0.0
  %v728 = vsel %vm664, 1.0, 0.0
  %v729 = vsel %vm665, 1.0, 0.0
  %v730 = vsel %vm666, 1.0, 0.0
  %v731 = vsel %vm667, 1.0, 0.0
  %v732 = vsel %vm668, 1.0, 0.0
  %v733 = vsel %vm669, 1.0, 0.0
  %v734 = vsel %vm670, 1.0, 0.0
  %v735 = vsel %vm671, 1.0, 0.0
  %v736 = vsel %vm672, 1.0, 0.0
  %v737 = vsel %vm673, 1.0, 0.0
  %v738 = vsel %vm674, 1.0, 0.0
  %v739 = vsel %vm675, 1.0, 0.0
  %740 = vset.pattern.permute.xlu0 2
  %741 = vperm.xlu0 %740, %v34
  %v742 = vpop.permute.xlu0 %741
  %743 = vset.pattern.permute.xlu0 2
  %744 = vperm.xlu0 %743, %v35
  %v745 = vpop.permute.xlu0 %744
  %746 = vset.pattern.permute.xlu0 2
  %747 = vperm.xlu0 %746, %v36
  %v748 = vpop.permute.xlu0 %747
  %749 = vset.pattern.permute.xlu0 2
  %750 = vperm.xlu0 %749, %v37
  %v751 = vpop.permute.xlu0 %750
  %752 = vset.pattern.permute.xlu0 2
  %753 = vperm.xlu0 %752, %v38
  %v754 = vpop.permute.xlu0 %753
  %755 = vset.pattern.permute.xlu0 2
  %756 = vperm.xlu0 %755, %v39
  %v757 = vpop.permute.xlu0 %756
  %758 = vset.pattern.permute.xlu0 2
  %759 = vperm.xlu0 %758, %v40
  %v760 = vpop.permute.xlu0 %759
  %761 = vset.pattern.permute.xlu0 2
  %762 = vperm.xlu0 %761, %v41
  %v763 = vpop.permute.xlu0 %762
  %764 = vset.pattern.permute.xlu0 2
  %765 = vperm.xlu0 %764, %v42
  %v766 = vpop.permute.xlu0 %765
  %767 = vset.pattern.permute.xlu0 2
  %768 = vperm.xlu0 %767, %v43
  %v769 = vpop.permute.xlu0 %768
  %770 = vset.pattern.permute.xlu0 2
  %771 = vperm.xlu0 %770, %v44
  %v772 = vpop.permute.xlu0 %771
  %773 = vset.pattern.permute.xlu0 2
  %774 = vperm.xlu0 %773, %v45
  %v775 = vpop.permute.xlu0 %774
  %776 = vset.pattern.permute.xlu0 2
  %777 = vperm.xlu0 %776, %v46
  %v778 = vpop.permute.xlu0 %777
  %779 = vset.pattern.permute.xlu0 2
  %780 = vperm.xlu0 %779, %v47
  %v781 = vpop.permute.xlu0 %780
  %782 = vset.pattern.permute.xlu0 2
  %783 = vperm.xlu0 %782, %v48
  %v784 = vpop.permute.xlu0 %783
  %785 = vset.pattern.permute.xlu0 2
  %786 = vperm.xlu0 %785, %v49
  %v787 = vpop.permute.xlu0 %786
  %788 = vset.pattern.permute.xlu0 2
  %789 = vperm.xlu0 %788, %v50
  %v790 = vpop.permute.xlu0 %789
  %791 = vset.pattern.permute.xlu0 2
  %792 = vperm.xlu0 %791, %v51
  %v793 = vpop.permute.xlu0 %792
  %794 = vset.pattern.permute.xlu0 2
  %795 = vperm.xlu0 %794, %v52
  %v796 = vpop.permute.xlu0 %795
  %797 = vset.pattern.permute.xlu0 2
  %798 = vperm.xlu0 %797, %v53
  %v799 = vpop.permute.xlu0 %798
  %800 = vset.pattern.permute.xlu0 2
  %801 = vperm.xlu0 %800, %v54
  %v802 = vpop.permute.xlu0 %801
  %803 = vset.pattern.permute.xlu0 2
  %804 = vperm.xlu0 %803, %v55
  %v805 = vpop.permute.xlu0 %804
  %806 = vset.pattern.permute.xlu0 2
  %807 = vperm.xlu0 %806, %v56
  %v808 = vpop.permute.xlu0 %807
  %809 = vset.pattern.permute.xlu0 2
  %810 = vperm.xlu0 %809, %v57
  %v811 = vpop.permute.xlu0 %810
  %812 = vset.pattern.permute.xlu0 2
  %813 = vperm.xlu0 %812, %v58
  %v814 = vpop.permute.xlu0 %813
  %815 = vset.pattern.permute.xlu0 2
  %816 = vperm.xlu0 %815, %v59
  %v817 = vpop.permute.xlu0 %816
  %818 = vset.pattern.permute.xlu0 2
  %819 = vperm.xlu0 %818, %v60
  %v820 = vpop.permute.xlu0 %819
  %821 = vset.pattern.permute.xlu0 2
  %822 = vperm.xlu0 %821, %v61
  %v823 = vpop.permute.xlu0 %822
  %824 = vset.pattern.permute.xlu0 2
  %825 = vperm.xlu0 %824, %v62
  %v826 = vpop.permute.xlu0 %825
  %827 = vset.pattern.permute.xlu0 2
  %828 = vperm.xlu0 %827, %v63
  %v829 = vpop.permute.xlu0 %828
  %830 = vset.pattern.permute.xlu0 2
  %831 = vperm.xlu0 %830, %v64
  %v832 = vpop.permute.xlu0 %831
  %833 = vset.pattern.permute.xlu0 2
  %834 = vperm.xlu0 %833, %v65
  %v835 = vpop.permute.xlu0 %834
  %836 = vset.pattern.permute.xlu0 2
  %837 = vperm.xlu0 %836, %v66
  %v838 = vpop.permute.xlu0 %837
  %839 = vset.pattern.permute.xlu0 2
  %840 = vperm.xlu0 %839, %v67
  %v841 = vpop.permute.xlu0 %840
  %842 = vset.pattern.permute.xlu0 2
  %843 = vperm.xlu0 %842, %v68
  %v844 = vpop.permute.xlu0 %843
  %845 = vset.pattern.permute.xlu0 2
  %846 = vperm.xlu0 %845, %v69
  %v847 = vpop.permute.xlu0 %846
  %848 = vset.pattern.permute.xlu0 2
  %849 = vperm.xlu0 %848, %v70
  %v850 = vpop.permute.xlu0 %849
  %851 = vset.pattern.permute.xlu0 2
  %852 = vperm.xlu0 %851, %v71
  %v853 = vpop.permute.xlu0 %852
  %854 = vset.pattern.permute.xlu0 2
  %855 = vperm.xlu0 %854, %v72
  %v856 = vpop.permute.xlu0 %855
  %857 = vset.pattern.permute.xlu0 2
  %858 = vperm.xlu0 %857, %v73
  %v859 = vpop.permute.xlu0 %858
  %860 = vset.pattern.permute.xlu0 2
  %861 = vperm.xlu0 %860, %v74
  %v862 = vpop.permute.xlu0 %861
  %863 = vset.pattern.permute.xlu0 2
  %864 = vperm.xlu0 %863, %v75
  %v865 = vpop.permute.xlu0 %864
  %866 = vset.pattern.permute.xlu0 2
  %867 = vperm.xlu0 %866, %v76
  %v868 = vpop.permute.xlu0 %867
  %869 = vset.pattern.permute.xlu0 2
  %870 = vperm.xlu0 %869, %v77
  %v871 = vpop.permute.xlu0 %870
  %872 = vset.pattern.permute.xlu0 2
  %873 = vperm.xlu0 %872, %v78
  %v874 = vpop.permute.xlu0 %873
  %875 = vset.pattern.permute.xlu0 2
  %876 = vperm.xlu0 %875, %v79
  %v877 = vpop.permute.xlu0 %876
  %878 = vset.pattern.permute.xlu0 2
  %879 = vperm.xlu0 %878, %v80
  %v880 = vpop.permute.xlu0 %879
  %881 = vset.pattern.permute.xlu0 2
  %882 = vperm.xlu0 %881, %v81
  %v883 = vpop.permute.xlu0 %882
  %884 = vset.pattern.permute.xlu0 2
  %885 = vperm.xlu0 %884, %v82
  %v886 = vpop.permute.xlu0 %885
  %887 = vset.pattern.permute.xlu0 2
  %888 = vperm.xlu0 %887, %v83
  %v889 = vpop.permute.xlu0 %888
  %890 = vset.pattern.permute.xlu0 2
  %891 = vperm.xlu0 %890, %v84
  %v892 = vpop.permute.xlu0 %891
  %893 = vset.pattern.permute.xlu0 2
  %894 = vperm.xlu0 %893, %v85
  %v895 = vpop.permute.xlu0 %894
  %896 = vset.pattern.permute.xlu0 2
  %897 = vperm.xlu0 %896, %v86
  %v898 = vpop.permute.xlu0 %897
  %899 = vset.pattern.permute.xlu0 2
  %900 = vperm.xlu0 %899, %v87
  %v901 = vpop.permute.xlu0 %900
  %902 = vset.pattern.permute.xlu0 2
  %903 = vperm.xlu0 %902, %v88
  %v904 = vpop.permute.xlu0 %903
  %905 = vset.pattern.permute.xlu0 2
  %906 = vperm.xlu0 %905, %v89
  %v907 = vpop.permute.xlu0 %906
  %908 = vset.pattern.permute.xlu0 2
  %909 = vperm.xlu0 %908, %v90
  %v910 = vpop.permute.xlu0 %909
  %911 = vset.pattern.permute.xlu0 2
  %912 = vperm.xlu0 %911, %v91
  %v913 = vpop.permute.xlu0 %912
  %914 = vset.pattern.permute.xlu0 2
  %915 = vperm.xlu0 %914, %v92
  %v916 = vpop.permute.xlu0 %915
  %917 = vset.pattern.permute.xlu0 2
  %918 = vperm.xlu0 %917, %v93
  %v919 = vpop.permute.xlu0 %918
  %920 = vset.pattern.permute.xlu0 2
  %921 = vperm.xlu0 %920, %v94
  %v922 = vpop.permute.xlu0 %921
  %923 = vset.pattern.permute.xlu0 2
  %924 = vperm.xlu0 %923, %v95
  %v925 = vpop.permute.xlu0 %924
  %926 = vset.pattern.permute.xlu0 2
  %927 = vperm.xlu0 %926, %v96
  %v928 = vpop.permute.xlu0 %927
  %929 = vset.pattern.permute.xlu0 2
  %930 = vperm.xlu0 %929, %v97
  %v931 = vpop.permute.xlu0 %930
  %vm932 = vcmp.eq.s32.totalorder %v99, %v742
  %vm933 = vcmp.eq.s32.totalorder %v99, %v745
  %vm934 = vcmp.eq.s32.totalorder %v99, %v748
  %vm935 = vcmp.eq.s32.totalorder %v99, %v751
  %vm936 = vcmp.eq.s32.totalorder %v99, %v754
  %vm937 = vcmp.eq.s32.totalorder %v99, %v757
  %vm938 = vcmp.eq.s32.totalorder %v99, %v760
  %vm939 = vcmp.eq.s32.totalorder %v99, %v763
  %vm940 = vcmp.eq.s32.totalorder %v99, %v766
  %vm941 = vcmp.eq.s32.totalorder %v99, %v769
  %vm942 = vcmp.eq.s32.totalorder %v99, %v772
  %vm943 = vcmp.eq.s32.totalorder %v99, %v775
  %vm944 = vcmp.eq.s32.totalorder %v99, %v778
  %vm945 = vcmp.eq.s32.totalorder %v99, %v781
  %vm946 = vcmp.eq.s32.totalorder %v99, %v784
  %vm947 = vcmp.eq.s32.totalorder %v99, %v787
  %vm948 = vcmp.eq.s32.totalorder %v99, %v790
  %vm949 = vcmp.eq.s32.totalorder %v99, %v793
  %vm950 = vcmp.eq.s32.totalorder %v99, %v796
  %vm951 = vcmp.eq.s32.totalorder %v99, %v799
  %vm952 = vcmp.eq.s32.totalorder %v99, %v802
  %vm953 = vcmp.eq.s32.totalorder %v99, %v805
  %vm954 = vcmp.eq.s32.totalorder %v99, %v808
  %vm955 = vcmp.eq.s32.totalorder %v99, %v811
  %vm956 = vcmp.eq.s32.totalorder %v99, %v814
  %vm957 = vcmp.eq.s32.totalorder %v99, %v817
  %vm958 = vcmp.eq.s32.totalorder %v99, %v820
  %vm959 = vcmp.eq.s32.totalorder %v99, %v823
  %vm960 = vcmp.eq.s32.totalorder %v99, %v826
  %vm961 = vcmp.eq.s32.totalorder %v99, %v829
  %vm962 = vcmp.eq.s32.totalorder %v99, %v832
  %vm963 = vcmp.eq.s32.totalorder %v99, %v835
  %vm964 = vcmp.eq.s32.totalorder %v99, %v838
  %vm965 = vcmp.eq.s32.totalorder %v99, %v841
  %vm966 = vcmp.eq.s32.totalorder %v99, %v844
  %vm967 = vcmp.eq.s32.totalorder %v99, %v847
  %vm968 = vcmp.eq.s32.totalorder %v99, %v850
  %vm969 = vcmp.eq.s32.totalorder %v99, %v853
  %vm970 = vcmp.eq.s32.totalorder %v99, %v856
  %vm971 = vcmp.eq.s32.totalorder %v99, %v859
  %vm972 = vcmp.eq.s32.totalorder %v99, %v862
  %vm973 = vcmp.eq.s32.totalorder %v99, %v865
  %vm974 = vcmp.eq.s32.totalorder %v99, %v868
  %vm975 = vcmp.eq.s32.totalorder %v99, %v871
  %vm976 = vcmp.eq.s32.totalorder %v99, %v874
  %vm977 = vcmp.eq.s32.totalorder %v99, %v877
  %vm978 = vcmp.eq.s32.totalorder %v99, %v880
  %vm979 = vcmp.eq.s32.totalorder %v99, %v883
  %vm980 = vcmp.eq.s32.totalorder %v99, %v886
  %vm981 = vcmp.eq.s32.totalorder %v99, %v889
  %vm982 = vcmp.eq.s32.totalorder %v99, %v892
  %vm983 = vcmp.eq.s32.totalorder %v99, %v895
  %vm984 = vcmp.eq.s32.totalorder %v99, %v898
  %vm985 = vcmp.eq.s32.totalorder %v99, %v901
  %vm986 = vcmp.eq.s32.totalorder %v99, %v904
  %vm987 = vcmp.eq.s32.totalorder %v99, %v907
  %vm988 = vcmp.eq.s32.totalorder %v99, %v910
  %vm989 = vcmp.eq.s32.totalorder %v99, %v913
  %vm990 = vcmp.eq.s32.totalorder %v99, %v916
  %vm991 = vcmp.eq.s32.totalorder %v99, %v919
  %vm992 = vcmp.eq.s32.totalorder %v99, %v922
  %vm993 = vcmp.eq.s32.totalorder %v99, %v925
  %vm994 = vcmp.eq.s32.totalorder %v99, %v928
  %vm995 = vcmp.eq.s32.totalorder %v99, %v931
  %v996 = vsel %vm932, 1.0, 0.0
  %v997 = vsel %vm933, 1.0, 0.0
  %v998 = vsel %vm934, 1.0, 0.0
  %v999 = vsel %vm935, 1.0, 0.0
  %v1000 = vsel %vm936, 1.0, 0.0
  %v1001 = vsel %vm937, 1.0, 0.0
  %v1002 = vsel %vm938, 1.0, 0.0
  %v1003 = vsel %vm939, 1.0, 0.0
  %v1004 = vsel %vm940, 1.0, 0.0
  %v1005 = vsel %vm941, 1.0, 0.0
  %v1006 = vsel %vm942, 1.0, 0.0
  %v1007 = vsel %vm943, 1.0, 0.0
  %v1008 = vsel %vm944, 1.0, 0.0
  %v1009 = vsel %vm945, 1.0, 0.0
  %v1010 = vsel %vm946, 1.0, 0.0
  %v1011 = vsel %vm947, 1.0, 0.0
  %v1012 = vsel %vm948, 1.0, 0.0
  %v1013 = vsel %vm949, 1.0, 0.0
  %v1014 = vsel %vm950, 1.0, 0.0
  %v1015 = vsel %vm951, 1.0, 0.0
  %v1016 = vsel %vm952, 1.0, 0.0
  %v1017 = vsel %vm953, 1.0, 0.0
  %v1018 = vsel %vm954, 1.0, 0.0
  %v1019 = vsel %vm955, 1.0, 0.0
  %v1020 = vsel %vm956, 1.0, 0.0
  %v1021 = vsel %vm957, 1.0, 0.0
  %v1022 = vsel %vm958, 1.0, 0.0
  %v1023 = vsel %vm959, 1.0, 0.0
  %v1024 = vsel %vm960, 1.0, 0.0
  %v1025 = vsel %vm961, 1.0, 0.0
  %v1026 = vsel %vm962, 1.0, 0.0
  %v1027 = vsel %vm963, 1.0, 0.0
  %v1028 = vsel %vm964, 1.0, 0.0
  %v1029 = vsel %vm965, 1.0, 0.0
  %v1030 = vsel %vm966, 1.0, 0.0
  %v1031 = vsel %vm967, 1.0, 0.0
  %v1032 = vsel %vm968, 1.0, 0.0
  %v1033 = vsel %vm969, 1.0, 0.0
  %v1034 = vsel %vm970, 1.0, 0.0
  %v1035 = vsel %vm971, 1.0, 0.0
  %v1036 = vsel %vm972, 1.0, 0.0
  %v1037 = vsel %vm973, 1.0, 0.0
  %v1038 = vsel %vm974, 1.0, 0.0
  %v1039 = vsel %vm975, 1.0, 0.0
  %v1040 = vsel %vm976, 1.0, 0.0
  %v1041 = vsel %vm977, 1.0, 0.0
  %v1042 = vsel %vm978, 1.0, 0.0
  %v1043 = vsel %vm979, 1.0, 0.0
  %v1044 = vsel %vm980, 1.0, 0.0
  %v1045 = vsel %vm981, 1.0, 0.0
  %v1046 = vsel %vm982, 1.0, 0.0
  %v1047 = vsel %vm983, 1.0, 0.0
  %v1048 = vsel %vm984, 1.0, 0.0
  %v1049 = vsel %vm985, 1.0, 0.0
  %v1050 = vsel %vm986, 1.0, 0.0
  %v1051 = vsel %vm987, 1.0, 0.0
  %v1052 = vsel %vm988, 1.0, 0.0
  %v1053 = vsel %vm989, 1.0, 0.0
  %v1054 = vsel %vm990, 1.0, 0.0
  %v1055 = vsel %vm991, 1.0, 0.0
  %v1056 = vsel %vm992, 1.0, 0.0
  %v1057 = vsel %vm993, 1.0, 0.0
  %v1058 = vsel %vm994, 1.0, 0.0
  %v1059 = vsel %vm995, 1.0, 0.0
  %1124 = vrot.lane.b32.xlu0 %v676, 64
  %v1125 = vpop.permute.xlu0 %1124
  %1126 = vrot.lane.b32.xlu0 %v677, 64
  %v1127 = vpop.permute.xlu0 %1126
  %1128 = vrot.lane.b32.xlu0 %v678, 64
  %v1129 = vpop.permute.xlu0 %1128
  %1130 = vrot.lane.b32.xlu0 %v679, 64
  %v1131 = vpop.permute.xlu0 %1130
  %1132 = vrot.lane.b32.xlu0 %v680, 64
  %v1133 = vpop.permute.xlu0 %1132
  %1134 = vrot.lane.b32.xlu0 %v681, 64
  %v1135 = vpop.permute.xlu0 %1134
  %1136 = vrot.lane.b32.xlu0 %v682, 64
  %v1137 = vpop.permute.xlu0 %1136
  %1138 = vrot.lane.b32.xlu0 %v683, 64
  %v1139 = vpop.permute.xlu0 %1138
  %1140 = vrot.lane.b32.xlu0 %v684, 64
  %v1141 = vpop.permute.xlu0 %1140
  %1142 = vrot.lane.b32.xlu0 %v685, 64
  %v1143 = vpop.permute.xlu0 %1142
  %1144 = vrot.lane.b32.xlu0 %v686, 64
  %v1145 = vpop.permute.xlu0 %1144
  %1146 = vrot.lane.b32.xlu0 %v687, 64
  %v1147 = vpop.permute.xlu0 %1146
  %1148 = vrot.lane.b32.xlu0 %v688, 64
  %v1149 = vpop.permute.xlu0 %1148
  %1150 = vrot.lane.b32.xlu0 %v689, 64
  %v1151 = vpop.permute.xlu0 %1150
  %1152 = vrot.lane.b32.xlu0 %v690, 64
  %v1153 = vpop.permute.xlu0 %1152
  %1154 = vrot.lane.b32.xlu0 %v691, 64
  %v1155 = vpop.permute.xlu0 %1154
  %1156 = vrot.lane.b32.xlu0 %v692, 64
  %v1157 = vpop.permute.xlu0 %1156
  %1158 = vrot.lane.b32.xlu0 %v693, 64
  %v1159 = vpop.permute.xlu0 %1158
  %1160 = vrot.lane.b32.xlu0 %v694, 64
  %v1161 = vpop.permute.xlu0 %1160
  %1162 = vrot.lane.b32.xlu0 %v695, 64
  %v1163 = vpop.permute.xlu0 %1162
  %1164 = vrot.lane.b32.xlu0 %v696, 64
  %v1165 = vpop.permute.xlu0 %1164
  %1166 = vrot.lane.b32.xlu0 %v697, 64
  %v1167 = vpop.permute.xlu0 %1166
  %1168 = vrot.lane.b32.xlu0 %v698, 64
  %v1169 = vpop.permute.xlu0 %1168
  %1170 = vrot.lane.b32.xlu0 %v699, 64
  %v1171 = vpop.permute.xlu0 %1170
  %1172 = vrot.lane.b32.xlu0 %v700, 64
  %v1173 = vpop.permute.xlu0 %1172
  %1174 = vrot.lane.b32.xlu0 %v701, 64
  %v1175 = vpop.permute.xlu0 %1174
  %1176 = vrot.lane.b32.xlu0 %v702, 64
  %v1177 = vpop.permute.xlu0 %1176
  %1178 = vrot.lane.b32.xlu0 %v703, 64
  %v1179 = vpop.permute.xlu0 %1178
  %1180 = vrot.lane.b32.xlu0 %v704, 64
  %v1181 = vpop.permute.xlu0 %1180
  %1182 = vrot.lane.b32.xlu0 %v705, 64
  %v1183 = vpop.permute.xlu0 %1182
  %1184 = vrot.lane.b32.xlu0 %v706, 64
  %v1185 = vpop.permute.xlu0 %1184
  %1186 = vrot.lane.b32.xlu0 %v707, 64
  %v1187 = vpop.permute.xlu0 %1186
  %1188 = vrot.lane.b32.xlu0 %v708, 64
  %v1189 = vpop.permute.xlu0 %1188
  %1190 = vrot.lane.b32.xlu0 %v709, 64
  %v1191 = vpop.permute.xlu0 %1190
  %1192 = vrot.lane.b32.xlu0 %v710, 64
  %v1193 = vpop.permute.xlu0 %1192
  %1194 = vrot.lane.b32.xlu0 %v711, 64
  %v1195 = vpop.permute.xlu0 %1194
  %1196 = vrot.lane.b32.xlu0 %v712, 64
  %v1197 = vpop.permute.xlu0 %1196
  %1198 = vrot.lane.b32.xlu0 %v713, 64
  %v1199 = vpop.permute.xlu0 %1198
  %1200 = vrot.lane.b32.xlu0 %v714, 64
  %v1201 = vpop.permute.xlu0 %1200
  %1202 = vrot.lane.b32.xlu0 %v715, 64
  %v1203 = vpop.permute.xlu0 %1202
  %1204 = vrot.lane.b32.xlu0 %v716, 64
  %v1205 = vpop.permute.xlu0 %1204
  %1206 = vrot.lane.b32.xlu0 %v717, 64
  %v1207 = vpop.permute.xlu0 %1206
  %1208 = vrot.lane.b32.xlu0 %v718, 64
  %v1209 = vpop.permute.xlu0 %1208
  %1210 = vrot.lane.b32.xlu0 %v719, 64
  %v1211 = vpop.permute.xlu0 %1210
  %1212 = vrot.lane.b32.xlu0 %v720, 64
  %v1213 = vpop.permute.xlu0 %1212
  %1214 = vrot.lane.b32.xlu0 %v721, 64
  %v1215 = vpop.permute.xlu0 %1214
  %1216 = vrot.lane.b32.xlu0 %v722, 64
  %v1217 = vpop.permute.xlu0 %1216
  %1218 = vrot.lane.b32.xlu0 %v723, 64
  %v1219 = vpop.permute.xlu0 %1218
  %1220 = vrot.lane.b32.xlu0 %v724, 64
  %v1221 = vpop.permute.xlu0 %1220
  %1222 = vrot.lane.b32.xlu0 %v725, 64
  %v1223 = vpop.permute.xlu0 %1222
  %1224 = vrot.lane.b32.xlu0 %v726, 64
  %v1225 = vpop.permute.xlu0 %1224
  %1226 = vrot.lane.b32.xlu0 %v727, 64
  %v1227 = vpop.permute.xlu0 %1226
  %1228 = vrot.lane.b32.xlu0 %v728, 64
  %v1229 = vpop.permute.xlu0 %1228
  %1230 = vrot.lane.b32.xlu0 %v729, 64
  %v1231 = vpop.permute.xlu0 %1230
  %1232 = vrot.lane.b32.xlu0 %v730, 64
  %v1233 = vpop.permute.xlu0 %1232
  %1234 = vrot.lane.b32.xlu0 %v731, 64
  %v1235 = vpop.permute.xlu0 %1234
  %1236 = vrot.lane.b32.xlu0 %v732, 64
  %v1237 = vpop.permute.xlu0 %1236
  %1238 = vrot.lane.b32.xlu0 %v733, 64
  %v1239 = vpop.permute.xlu0 %1238
  %1240 = vrot.lane.b32.xlu0 %v734, 64
  %v1241 = vpop.permute.xlu0 %1240
  %1242 = vrot.lane.b32.xlu0 %v735, 64
  %v1243 = vpop.permute.xlu0 %1242
  %1244 = vrot.lane.b32.xlu0 %v736, 64
  %v1245 = vpop.permute.xlu0 %1244
  %1246 = vrot.lane.b32.xlu0 %v737, 64
  %v1247 = vpop.permute.xlu0 %1246
  %1248 = vrot.lane.b32.xlu0 %v738, 64
  %v1249 = vpop.permute.xlu0 %1248
  %1250 = vrot.lane.b32.xlu0 %v739, 64
  %v1251 = vpop.permute.xlu0 %1250
  %vm1316 = vcmask 523264
  %v1317 = vsel %vm1316, %v356, %v1125
  %v1318 = vsel %vm1316, %v357, %v1127
  %v1319 = vsel %vm1316, %v358, %v1129
  %v1320 = vsel %vm1316, %v359, %v1131
  %v1321 = vsel %vm1316, %v360, %v1133
  %v1322 = vsel %vm1316, %v361, %v1135
  %v1323 = vsel %vm1316, %v362, %v1137
  %v1324 = vsel %vm1316, %v363, %v1139
  %v1325 = vsel %vm1316, %v364, %v1141
  %v1326 = vsel %vm1316, %v365, %v1143
  %v1327 = vsel %vm1316, %v366, %v1145
  %v1328 = vsel %vm1316, %v367, %v1147
  %v1329 = vsel %vm1316, %v368, %v1149
  %v1330 = vsel %vm1316, %v369, %v1151
  %v1331 = vsel %vm1316, %v370, %v1153
  %v1332 = vsel %vm1316, %v371, %v1155
  %v1333 = vsel %vm1316, %v372, %v1157
  %v1334 = vsel %vm1316, %v373, %v1159
  %v1335 = vsel %vm1316, %v374, %v1161
  %v1336 = vsel %vm1316, %v375, %v1163
  %v1337 = vsel %vm1316, %v376, %v1165
  %v1338 = vsel %vm1316, %v377, %v1167
  %v1339 = vsel %vm1316, %v378, %v1169
  %v1340 = vsel %vm1316, %v379, %v1171
  %v1341 = vsel %vm1316, %v380, %v1173
  %v1342 = vsel %vm1316, %v381, %v1175
  %v1343 = vsel %vm1316, %v382, %v1177
  %v1344 = vsel %vm1316, %v383, %v1179
  %v1345 = vsel %vm1316, %v384, %v1181
  %v1346 = vsel %vm1316, %v385, %v1183
  %v1347 = vsel %vm1316, %v386, %v1185
  %v1348 = vsel %vm1316, %v387, %v1187
  %v1349 = vsel %vm1316, %v388, %v1189
  %v1350 = vsel %vm1316, %v389, %v1191
  %v1351 = vsel %vm1316, %v390, %v1193
  %v1352 = vsel %vm1316, %v391, %v1195
  %v1353 = vsel %vm1316, %v392, %v1197
  %v1354 = vsel %vm1316, %v393, %v1199
  %v1355 = vsel %vm1316, %v394, %v1201
  %v1356 = vsel %vm1316, %v395, %v1203
  %v1357 = vsel %vm1316, %v396, %v1205
  %v1358 = vsel %vm1316, %v397, %v1207
  %v1359 = vsel %vm1316, %v398, %v1209
  %v1360 = vsel %vm1316, %v399, %v1211
  %v1361 = vsel %vm1316, %v400, %v1213
  %v1362 = vsel %vm1316, %v401, %v1215
  %v1363 = vsel %vm1316, %v402, %v1217
  %v1364 = vsel %vm1316, %v403, %v1219
  %v1365 = vsel %vm1316, %v404, %v1221
  %v1366 = vsel %vm1316, %v405, %v1223
  %v1367 = vsel %vm1316, %v406, %v1225
  %v1368 = vsel %vm1316, %v407, %v1227
  %v1369 = vsel %vm1316, %v408, %v1229
  %v1370 = vsel %vm1316, %v409, %v1231
  %v1371 = vsel %vm1316, %v410, %v1233
  %v1372 = vsel %vm1316, %v411, %v1235
  %v1373 = vsel %vm1316, %v412, %v1237
  %v1374 = vsel %vm1316, %v413, %v1239
  %v1375 = vsel %vm1316, %v414, %v1241
  %v1376 = vsel %vm1316, %v415, %v1243
  %v1377 = vsel %vm1316, %v416, %v1245
  %v1378 = vsel %vm1316, %v417, %v1247
  %v1379 = vsel %vm1316, %v418, %v1249
  %v1380 = vsel %vm1316, %v419, %v1251
  %v1381 = vld [vmem:[%s1] sm:$0xff]
  %v1382 = vld [vmem:[%s1 + $0x8] sm:$0xff]
  %v1383 = vld [vmem:[%s1 + $0x10] sm:$0xff]
  %v1384 = vld [vmem:[%s1 + $0x18] sm:$0xff]
  %v1385 = vld [vmem:[%s1 + $0x20] sm:$0xff]
  %v1386 = vld [vmem:[%s1 + $0x28] sm:$0xff]
  %v1387 = vld [vmem:[%s1 + $0x30] sm:$0xff]
  %v1388 = vld [vmem:[%s1 + $0x38] sm:$0xff]
  %v1389 = vld [vmem:[%s1 + $0x40] sm:$0xff]
  %v1390 = vld [vmem:[%s1 + $0x48] sm:$0xff]
  %v1391 = vld [vmem:[%s1 + $0x50] sm:$0xff]
  %v1392 = vld [vmem:[%s1 + $0x58] sm:$0xff]
  %v1393 = vld [vmem:[%s1 + $0x60] sm:$0xff]
  %v1394 = vld [vmem:[%s1 + $0x68] sm:$0xff]
  %v1395 = vld [vmem:[%s1 + $0x70] sm:$0xff]
  %v1396 = vld [vmem:[%s1 + $0x78] sm:$0xff]
  %v1397 = vld [vmem:[%s1 + $0x80] sm:$0xff]
  %v1398 = vld [vmem:[%s1 + $0x88] sm:$0xff]
  %v1399 = vld [vmem:[%s1 + $0x90] sm:$0xff]
  %v1400 = vld [vmem:[%s1 + $0x98] sm:$0xff]
  %v1401 = vld [vmem:[%s1 + $0xa0] sm:$0xff]
  %v1402 = vld [vmem:[%s1 + $0xa8] sm:$0xff]
  %v1403 = vld [vmem:[%s1 + $0xb0] sm:$0xff]
  %v1404 = vld [vmem:[%s1 + $0xb8] sm:$0xff]
  %v1405 = vld [vmem:[%s1 + $0xc0] sm:$0xff]
  %v1406 = vld [vmem:[%s1 + $0xc8] sm:$0xff]
  %v1407 = vld [vmem:[%s1 + $0xd0] sm:$0xff]
  %v1408 = vld [vmem:[%s1 + $0xd8] sm:$0xff]
  %v1409 = vld [vmem:[%s1 + $0xe0] sm:$0xff]
  %v1410 = vld [vmem:[%s1 + $0xe8] sm:$0xff]
  %v1411 = vld [vmem:[%s1 + $0xf0] sm:$0xff]
  %v1412 = vld [vmem:[%s1 + $0xf8] sm:$0xff]
  %v1413 = vld [vmem:[%s1 + $0x100] sm:$0xff]
  %v1414 = vld [vmem:[%s1 + $0x108] sm:$0xff]
  %v1415 = vld [vmem:[%s1 + $0x110] sm:$0xff]
  %v1416 = vld [vmem:[%s1 + $0x118] sm:$0xff]
  %v1417 = vld [vmem:[%s1 + $0x120] sm:$0xff]
  %v1418 = vld [vmem:[%s1 + $0x128] sm:$0xff]
  %v1419 = vld [vmem:[%s1 + $0x130] sm:$0xff]
  %v1420 = vld [vmem:[%s1 + $0x138] sm:$0xff]
  %v1421 = vld [vmem:[%s1 + $0x140] sm:$0xff]
  %v1422 = vld [vmem:[%s1 + $0x148] sm:$0xff]
  %v1423 = vld [vmem:[%s1 + $0x150] sm:$0xff]
  %v1424 = vld [vmem:[%s1 + $0x158] sm:$0xff]
  %v1425 = vld [vmem:[%s1 + $0x160] sm:$0xff]
  %v1426 = vld [vmem:[%s1 + $0x168] sm:$0xff]
  %v1427 = vld [vmem:[%s1 + $0x170] sm:$0xff]
  %v1428 = vld [vmem:[%s1 + $0x178] sm:$0xff]
  %v1430 = vsel %vm1316, %v996, 0
  %v1433 = vsel %vm1316, %v997, 0
  %v1436 = vsel %vm1316, %v998, 0
  %v1439 = vsel %vm1316, %v999, 0
  %v1442 = vsel %vm1316, %v1000, 0
  %v1445 = vsel %vm1316, %v1001, 0
  %v1448 = vsel %vm1316, %v1002, 0
  %v1451 = vsel %vm1316, %v1003, 0
  %v1454 = vsel %vm1316, %v1004, 0
  %v1457 = vsel %vm1316, %v1005, 0
  %v1460 = vsel %vm1316, %v1006, 0
  %v1463 = vsel %vm1316, %v1007, 0
  %v1466 = vsel %vm1316, %v1008, 0
  %v1469 = vsel %vm1316, %v1009, 0
  %v1472 = vsel %vm1316, %v1010, 0
  %v1475 = vsel %vm1316, %v1011, 0
  %v1478 = vsel %vm1316, %v1012, 0
  %v1481 = vsel %vm1316, %v1013, 0
  %v1484 = vsel %vm1316, %v1014, 0
  %v1487 = vsel %vm1316, %v1015, 0
  %v1490 = vsel %vm1316, %v1016, 0
  %v1493 = vsel %vm1316, %v1017, 0
  %v1496 = vsel %vm1316, %v1018, 0
  %v1499 = vsel %vm1316, %v1019, 0
  %v1502 = vsel %vm1316, %v1020, 0
  %v1505 = vsel %vm1316, %v1021, 0
  %v1508 = vsel %vm1316, %v1022, 0
  %v1511 = vsel %vm1316, %v1023, 0
  %v1514 = vsel %vm1316, %v1024, 0
  %v1517 = vsel %vm1316, %v1025, 0
  %v1520 = vsel %vm1316, %v1026, 0
  %v1523 = vsel %vm1316, %v1027, 0
  %v1526 = vsel %vm1316, %v1028, 0
  %v1529 = vsel %vm1316, %v1029, 0
  %v1532 = vsel %vm1316, %v1030, 0
  %v1535 = vsel %vm1316, %v1031, 0
  %v1538 = vsel %vm1316, %v1032, 0
  %v1541 = vsel %vm1316, %v1033, 0
  %v1544 = vsel %vm1316, %v1034, 0
  %v1547 = vsel %vm1316, %v1035, 0
  %v1550 = vsel %vm1316, %v1036, 0
  %v1553 = vsel %vm1316, %v1037, 0
  %v1556 = vsel %vm1316, %v1038, 0
  %v1559 = vsel %vm1316, %v1039, 0
  %v1562 = vsel %vm1316, %v1040, 0
  %v1565 = vsel %vm1316, %v1041, 0
  %v1568 = vsel %vm1316, %v1042, 0
  %v1571 = vsel %vm1316, %v1043, 0
  %v1574 = vsel %vm1316, %v1044, 0
  %v1577 = vsel %vm1316, %v1045, 0
  %v1580 = vsel %vm1316, %v1046, 0
  %v1583 = vsel %vm1316, %v1047, 0
  %v1586 = vsel %vm1316, %v1048, 0
  %v1589 = vsel %vm1316, %v1049, 0
  %v1592 = vsel %vm1316, %v1050, 0
  %v1595 = vsel %vm1316, %v1051, 0
  %v1598 = vsel %vm1316, %v1052, 0
  %v1601 = vsel %vm1316, %v1053, 0
  %v1604 = vsel %vm1316, %v1054, 0
  %v1607 = vsel %vm1316, %v1055, 0
  %v1610 = vsel %vm1316, %v1056, 0
  %v1613 = vsel %vm1316, %v1057, 0
  %v1616 = vsel %vm1316, %v1058, 0
  %v1619 = vsel %vm1316, %v1059, 0
  %1621 = vmatprep.subr.mxu0 %v1412
  %1622 = vmatpush1.msra.mxu0 %v1411
  %1623 = vmatprep.subr.mxu0 %v1410
  %1624 = vmatpush1.msra.mxu0 %v1409
  %1625 = vmatprep.subr.mxu0 %v1408
  %1626 = vmatpush1.msra.mxu0 %v1407
  %1627 = vmatprep.subr.mxu0 %v1406
  %1628 = vmatpush1.msra.mxu0 %v1405
  %1629 = vmatprep.subr.mxu0 %v1404
  %1630 = vmatpush1.msra.mxu0 %v1403
  %1631 = vmatprep.subr.mxu0 %v1402
  %1632 = vmatpush1.msra.mxu0 %v1401
  %1633 = vmatprep.subr.mxu0 %v1400
  %1634 = vmatpush1.msra.mxu0 %v1399
  %1635 = vmatprep.subr.mxu0 %v1398
  %1636 = vmatpush1.msra.mxu0 %v1397
  %1637 = vmatprep.subr.mxu0 %v1396
  %1638 = vmatpush1.msra.mxu0 %v1395
  %1639 = vmatprep.subr.mxu0 %v1394
  %1640 = vmatpush1.msra.mxu0 %v1393
  %1641 = vmatprep.subr.mxu0 %v1392
  %1642 = vmatpush1.msra.mxu0 %v1391
  %1643 = vmatprep.subr.mxu0 %v1390
  %1644 = vmatpush1.msra.mxu0 %v1389
  %1645 = vmatprep.subr.mxu0 %v1388
  %1646 = vmatpush1.msra.mxu0 %v1387
  %1647 = vmatprep.subr.mxu0 %v1386
  %1648 = vmatpush1.msra.mxu0 %v1385
  %1649 = vmatprep.subr.mxu0 %v1384
  %1650 = vmatpush1.msra.mxu0 %v1383
  %1651 = vmatprep.subr.mxu0 %v1382
  %1652 = vmatpush1.msra.mxu0 %v1381
  %1653 = vmatprep.subr.mxu0 0.0
  %1654 = vmatpush2.msra.mxu0 0.0
  %1655 = vmatprep.subr.mxu0 0.0
  %1656 = vmatpush2.msra.mxu0 0.0
  %1657 = vmatprep.subr.mxu0 0.0
  %1658 = vmatpush2.msra.mxu0 0.0
  %1659 = vmatprep.subr.mxu0 0.0
  %1660 = vmatpush2.msra.mxu0 0.0
  %1661 = vmatprep.subr.mxu0 0.0
  %1662 = vmatpush2.msra.mxu0 0.0
  %1663 = vmatprep.subr.mxu0 0.0
  %1664 = vmatpush2.msra.mxu0 0.0
  %1665 = vmatprep.subr.mxu0 0.0
  %1666 = vmatpush2.msra.mxu0 0.0
  %1667 = vmatprep.subr.mxu0 0.0
  %1668 = vmatpush2.msra.mxu0 0.0
  %1669 = vmatprep.subr.mxu0 %v1428
  %1670 = vmatpush2.msra.mxu0 %v1427
  %1671 = vmatprep.subr.mxu0 %v1426
  %1672 = vmatpush2.msra.mxu0 %v1425
  %1673 = vmatprep.subr.mxu0 %v1424
  %1674 = vmatpush2.msra.mxu0 %v1423
  %1675 = vmatprep.subr.mxu0 %v1422
  %1676 = vmatpush2.msra.mxu0 %v1421
  %1677 = vmatprep.subr.mxu0 %v1420
  %1678 = vmatpush2.msra.mxu0 %v1419
  %1679 = vmatprep.subr.mxu0 %v1418
  %1680 = vmatpush2.msra.mxu0 %v1417
  %1681 = vmatprep.subr.mxu0 %v1416
  %1682 = vmatpush2.msra.mxu0 %v1415
  %1683 = vmatprep.subr.mxu0 %v1414
  %1684 = vmatpush2.msra.mxu0 %v1413
  %1685 = vmatprep.mubr.f32.mxu0 %v1430
  %1686 = vmatmul.mubr.f32.gmra.mxu0 %v1317
  %v1687 = vpop.f32.mrf.mxu0
  %v1688 = vadd.f32 0.0, %v1687
  %v1689 = vpop.f32.mrf.mxu0
  %v1690 = vadd.f32 0.0, %v1689
  %1691 = vmatprep.mubr.f32.mxu0 %v1433
  %1692 = vmatmul.mubr.f32.gmra.mxu0 %v1318
  %v1693 = vpop.f32.mrf.mxu0
  %v1694 = vadd.f32 0.0, %v1693
  %v1695 = vpop.f32.mrf.mxu0
  %v1696 = vadd.f32 0.0, %v1695
  %1697 = vmatprep.mubr.f32.mxu0 %v1436
  %1698 = vmatmul.mubr.f32.gmra.mxu0 %v1319
  %v1699 = vpop.f32.mrf.mxu0
  %v1700 = vadd.f32 0.0, %v1699
  %v1701 = vpop.f32.mrf.mxu0
  %v1702 = vadd.f32 0.0, %v1701
  %1703 = vmatprep.mubr.f32.mxu0 %v1439
  %1704 = vmatmul.mubr.f32.gmra.mxu0 %v1320
  %v1705 = vpop.f32.mrf.mxu0
  %v1706 = vadd.f32 0.0, %v1705
  %v1707 = vpop.f32.mrf.mxu0
  %v1708 = vadd.f32 0.0, %v1707
  %1709 = vmatprep.mubr.f32.mxu0 %v1442
  %1710 = vmatmul.mubr.f32.gmra.mxu0 %v1321
  %v1711 = vpop.f32.mrf.mxu0
  %v1712 = vadd.f32 0.0, %v1711
  %v1713 = vpop.f32.mrf.mxu0
  %v1714 = vadd.f32 0.0, %v1713
  %1715 = vmatprep.mubr.f32.mxu0 %v1445
  %1716 = vmatmul.mubr.f32.gmra.mxu0 %v1322
  %v1717 = vpop.f32.mrf.mxu0
  %v1718 = vadd.f32 0.0, %v1717
  %v1719 = vpop.f32.mrf.mxu0
  %v1720 = vadd.f32 0.0, %v1719
  %1721 = vmatprep.mubr.f32.mxu0 %v1448
  %1722 = vmatmul.mubr.f32.gmra.mxu0 %v1323
  %v1723 = vpop.f32.mrf.mxu0
  %v1724 = vadd.f32 0.0, %v1723
  %v1725 = vpop.f32.mrf.mxu0
  %v1726 = vadd.f32 0.0, %v1725
  %1727 = vmatprep.mubr.f32.mxu0 %v1451
  %1728 = vmatmul.mubr.f32.gmra.mxu0 %v1324
  %v1729 = vpop.f32.mrf.mxu0
  %v1730 = vadd.f32 0.0, %v1729
  %v1731 = vpop.f32.mrf.mxu0
  %v1732 = vadd.f32 0.0, %v1731
  %1733 = vmatprep.mubr.f32.mxu0 %v1454
  %1734 = vmatmul.mubr.f32.gmra.mxu0 %v1325
  %v1735 = vpop.f32.mrf.mxu0
  %v1736 = vadd.f32 0.0, %v1735
  %v1737 = vpop.f32.mrf.mxu0
  %v1738 = vadd.f32 0.0, %v1737
  %1739 = vmatprep.mubr.f32.mxu0 %v1457
  %1740 = vmatmul.mubr.f32.gmra.mxu0 %v1326
  %v1741 = vpop.f32.mrf.mxu0
  %v1742 = vadd.f32 0.0, %v1741
  %v1743 = vpop.f32.mrf.mxu0
  %v1744 = vadd.f32 0.0, %v1743
  %1745 = vmatprep.mubr.f32.mxu0 %v1460
  %1746 = vmatmul.mubr.f32.gmra.mxu0 %v1327
  %v1747 = vpop.f32.mrf.mxu0
  %v1748 = vadd.f32 0.0, %v1747
  %v1749 = vpop.f32.mrf.mxu0
  %v1750 = vadd.f32 0.0, %v1749
  %1751 = vmatprep.mubr.f32.mxu0 %v1463
  %1752 = vmatmul.mubr.f32.gmra.mxu0 %v1328
  %v1753 = vpop.f32.mrf.mxu0
  %v1754 = vadd.f32 0.0, %v1753
  %v1755 = vpop.f32.mrf.mxu0
  %v1756 = vadd.f32 0.0, %v1755
  %1757 = vmatprep.mubr.f32.mxu0 %v1466
  %1758 = vmatmul.mubr.f32.gmra.mxu0 %v1329
  %v1759 = vpop.f32.mrf.mxu0
  %v1760 = vadd.f32 0.0, %v1759
  %v1761 = vpop.f32.mrf.mxu0
  %v1762 = vadd.f32 0.0, %v1761
  %1763 = vmatprep.mubr.f32.mxu0 %v1469
  %1764 = vmatmul.mubr.f32.gmra.mxu0 %v1330
  %v1765 = vpop.f32.mrf.mxu0
  %v1766 = vadd.f32 0.0, %v1765
  %v1767 = vpop.f32.mrf.mxu0
  %v1768 = vadd.f32 0.0, %v1767
  %1769 = vmatprep.mubr.f32.mxu0 %v1472
  %1770 = vmatmul.mubr.f32.gmra.mxu0 %v1331
  %v1771 = vpop.f32.mrf.mxu0
  %v1772 = vadd.f32 0.0, %v1771
  %v1773 = vpop.f32.mrf.mxu0
  %v1774 = vadd.f32 0.0, %v1773
  %1775 = vmatprep.mubr.f32.mxu0 %v1475
  %1776 = vmatmul.mubr.f32.gmra.mxu0 %v1332
  %v1777 = vpop.f32.mrf.mxu0
  %v1778 = vadd.f32 0.0, %v1777
  %v1779 = vpop.f32.mrf.mxu0
  %v1780 = vadd.f32 0.0, %v1779
  %1781 = vmatprep.mubr.f32.mxu0 %v1478
  %1782 = vmatmul.mubr.f32.gmra.mxu0 %v1333
  %v1783 = vpop.f32.mrf.mxu0
  %v1784 = vadd.f32 0.0, %v1783
  %v1785 = vpop.f32.mrf.mxu0
  %v1786 = vadd.f32 0.0, %v1785
  %1787 = vmatprep.mubr.f32.mxu0 %v1481
  %1788 = vmatmul.mubr.f32.gmra.mxu0 %v1334
  %v1789 = vpop.f32.mrf.mxu0
  %v1790 = vadd.f32 0.0, %v1789
  %v1791 = vpop.f32.mrf.mxu0
  %v1792 = vadd.f32 0.0, %v1791
  %1793 = vmatprep.mubr.f32.mxu0 %v1484
  %1794 = vmatmul.mubr.f32.gmra.mxu0 %v1335
  %v1795 = vpop.f32.mrf.mxu0
  %v1796 = vadd.f32 0.0, %v1795
  %v1797 = vpop.f32.mrf.mxu0
  %v1798 = vadd.f32 0.0, %v1797
  %1799 = vmatprep.mubr.f32.mxu0 %v1487
  %1800 = vmatmul.mubr.f32.gmra.mxu0 %v1336
  %v1801 = vpop.f32.mrf.mxu0
  %v1802 = vadd.f32 0.0, %v1801
  %v1803 = vpop.f32.mrf.mxu0
  %v1804 = vadd.f32 0.0, %v1803
  %1805 = vmatprep.mubr.f32.mxu0 %v1490
  %1806 = vmatmul.mubr.f32.gmra.mxu0 %v1337
  %v1807 = vpop.f32.mrf.mxu0
  %v1808 = vadd.f32 0.0, %v1807
  %v1809 = vpop.f32.mrf.mxu0
  %v1810 = vadd.f32 0.0, %v1809
  %1811 = vmatprep.mubr.f32.mxu0 %v1493
  %1812 = vmatmul.mubr.f32.gmra.mxu0 %v1338
  %v1813 = vpop.f32.mrf.mxu0
  %v1814 = vadd.f32 0.0, %v1813
  %v1815 = vpop.f32.mrf.mxu0
  %v1816 = vadd.f32 0.0, %v1815
  %1817 = vmatprep.mubr.f32.mxu0 %v1496
  %1818 = vmatmul.mubr.f32.gmra.mxu0 %v1339
  %v1819 = vpop.f32.mrf.mxu0
  %v1820 = vadd.f32 0.0, %v1819
  %v1821 = vpop.f32.mrf.mxu0
  %v1822 = vadd.f32 0.0, %v1821
  %1823 = vmatprep.mubr.f32.mxu0 %v1499
  %1824 = vmatmul.mubr.f32.gmra.mxu0 %v1340
  %v1825 = vpop.f32.mrf.mxu0
  %v1826 = vadd.f32 0.0, %v1825
  %v1827 = vpop.f32.mrf.mxu0
  %v1828 = vadd.f32 0.0, %v1827
  %1829 = vmatprep.mubr.f32.mxu0 %v1502
  %1830 = vmatmul.mubr.f32.gmra.mxu0 %v1341
  %v1831 = vpop.f32.mrf.mxu0
  %v1832 = vadd.f32 0.0, %v1831
  %v1833 = vpop.f32.mrf.mxu0
  %v1834 = vadd.f32 0.0, %v1833
  %1835 = vmatprep.mubr.f32.mxu0 %v1505
  %1836 = vmatmul.mubr.f32.gmra.mxu0 %v1342
  %v1837 = vpop.f32.mrf.mxu0
  %v1838 = vadd.f32 0.0, %v1837
  %v1839 = vpop.f32.mrf.mxu0
  %v1840 = vadd.f32 0.0, %v1839
  %1841 = vmatprep.mubr.f32.mxu0 %v1508
  %1842 = vmatmul.mubr.f32.gmra.mxu0 %v1343
  %v1843 = vpop.f32.mrf.mxu0
  %v1844 = vadd.f32 0.0, %v1843
  %v1845 = vpop.f32.mrf.mxu0
  %v1846 = vadd.f32 0.0, %v1845
  %1847 = vmatprep.mubr.f32.mxu0 %v1511
  %1848 = vmatmul.mubr.f32.gmra.mxu0 %v1344
  %v1849 = vpop.f32.mrf.mxu0
  %v1850 = vadd.f32 0.0, %v1849
  %v1851 = vpop.f32.mrf.mxu0
  %v1852 = vadd.f32 0.0, %v1851
  %1853 = vmatprep.mubr.f32.mxu0 %v1514
  %1854 = vmatmul.mubr.f32.gmra.mxu0 %v1345
  %v1855 = vpop.f32.mrf.mxu0
  %v1856 = vadd.f32 0.0, %v1855
  %v1857 = vpop.f32.mrf.mxu0
  %v1858 = vadd.f32 0.0, %v1857
  %1859 = vmatprep.mubr.f32.mxu0 %v1517
  %1860 = vmatmul.mubr.f32.gmra.mxu0 %v1346
  %v1861 = vpop.f32.mrf.mxu0
  %v1862 = vadd.f32 0.0, %v1861
  %v1863 = vpop.f32.mrf.mxu0
  %v1864 = vadd.f32 0.0, %v1863
  %1865 = vmatprep.mubr.f32.mxu0 %v1520
  %1866 = vmatmul.mubr.f32.gmra.mxu0 %v1347
  %v1867 = vpop.f32.mrf.mxu0
  %v1868 = vadd.f32 0.0, %v1867
  %v1869 = vpop.f32.mrf.mxu0
  %v1870 = vadd.f32 0.0, %v1869
  %1871 = vmatprep.mubr.f32.mxu0 %v1523
  %1872 = vmatmul.mubr.f32.gmra.mxu0 %v1348
  %v1873 = vpop.f32.mrf.mxu0
  %v1874 = vadd.f32 0.0, %v1873
  %v1875 = vpop.f32.mrf.mxu0
  %v1876 = vadd.f32 0.0, %v1875
  %1877 = vmatprep.mubr.f32.mxu0 %v1526
  %1878 = vmatmul.mubr.f32.gmra.mxu0 %v1349
  %v1879 = vpop.f32.mrf.mxu0
  %v1880 = vadd.f32 0.0, %v1879
  %v1881 = vpop.f32.mrf.mxu0
  %v1882 = vadd.f32 0.0, %v1881
  %1883 = vmatprep.mubr.f32.mxu0 %v1529
  %1884 = vmatmul.mubr.f32.gmra.mxu0 %v1350
  %v1885 = vpop.f32.mrf.mxu0
  %v1886 = vadd.f32 0.0, %v1885
  %v1887 = vpop.f32.mrf.mxu0
  %v1888 = vadd.f32 0.0, %v1887
  %1889 = vmatprep.mubr.f32.mxu0 %v1532
  %1890 = vmatmul.mubr.f32.gmra.mxu0 %v1351
  %v1891 = vpop.f32.mrf.mxu0
  %v1892 = vadd.f32 0.0, %v1891
  %v1893 = vpop.f32.mrf.mxu0
  %v1894 = vadd.f32 0.0, %v1893
  %1895 = vmatprep.mubr.f32.mxu0 %v1535
  %1896 = vmatmul.mubr.f32.gmra.mxu0 %v1352
  %v1897 = vpop.f32.mrf.mxu0
  %v1898 = vadd.f32 0.0, %v1897
  %v1899 = vpop.f32.mrf.mxu0
  %v1900 = vadd.f32 0.0, %v1899
  %1901 = vmatprep.mubr.f32.mxu0 %v1538
  %1902 = vmatmul.mubr.f32.gmra.mxu0 %v1353
  %v1903 = vpop.f32.mrf.mxu0
  %v1904 = vadd.f32 0.0, %v1903
  %v1905 = vpop.f32.mrf.mxu0
  %v1906 = vadd.f32 0.0, %v1905
  %1907 = vmatprep.mubr.f32.mxu0 %v1541
  %1908 = vmatmul.mubr.f32.gmra.mxu0 %v1354
  %v1909 = vpop.f32.mrf.mxu0
  %v1910 = vadd.f32 0.0, %v1909
  %v1911 = vpop.f32.mrf.mxu0
  %v1912 = vadd.f32 0.0, %v1911
  %1913 = vmatprep.mubr.f32.mxu0 %v1544
  %1914 = vmatmul.mubr.f32.gmra.mxu0 %v1355
  %v1915 = vpop.f32.mrf.mxu0
  %v1916 = vadd.f32 0.0, %v1915
  %v1917 = vpop.f32.mrf.mxu0
  %v1918 = vadd.f32 0.0, %v1917
  %1919 = vmatprep.mubr.f32.mxu0 %v1547
  %1920 = vmatmul.mubr.f32.gmra.mxu0 %v1356
  %v1921 = vpop.f32.mrf.mxu0
  %v1922 = vadd.f32 0.0, %v1921
  %v1923 = vpop.f32.mrf.mxu0
  %v1924 = vadd.f32 0.0, %v1923
  %1925 = vmatprep.mubr.f32.mxu0 %v1550
  %1926 = vmatmul.mubr.f32.gmra.mxu0 %v1357
  %v1927 = vpop.f32.mrf.mxu0
  %v1928 = vadd.f32 0.0, %v1927
  %v1929 = vpop.f32.mrf.mxu0
  %v1930 = vadd.f32 0.0, %v1929
  %1931 = vmatprep.mubr.f32.mxu0 %v1553
  %1932 = vmatmul.mubr.f32.gmra.mxu0 %v1358
  %v1933 = vpop.f32.mrf.mxu0
  %v1934 = vadd.f32 0.0, %v1933
  %v1935 = vpop.f32.mrf.mxu0
  %v1936 = vadd.f32 0.0, %v1935
  %1937 = vmatprep.mubr.f32.mxu0 %v1556
  %1938 = vmatmul.mubr.f32.gmra.mxu0 %v1359
  %v1939 = vpop.f32.mrf.mxu0
  %v1940 = vadd.f32 0.0, %v1939
  %v1941 = vpop.f32.mrf.mxu0
  %v1942 = vadd.f32 0.0, %v1941
  %1943 = vmatprep.mubr.f32.mxu0 %v1559
  %1944 = vmatmul.mubr.f32.gmra.mxu0 %v1360
  %v1945 = vpop.f32.mrf.mxu0
  %v1946 = vadd.f32 0.0, %v1945
  %v1947 = vpop.f32.mrf.mxu0
  %v1948 = vadd.f32 0.0, %v1947
  %1949 = vmatprep.mubr.f32.mxu0 %v1562
  %1950 = vmatmul.mubr.f32.gmra.mxu0 %v1361
  %v1951 = vpop.f32.mrf.mxu0
  %v1952 = vadd.f32 0.0, %v1951
  %v1953 = vpop.f32.mrf.mxu0
  %v1954 = vadd.f32 0.0, %v1953
  %1955 = vmatprep.mubr.f32.mxu0 %v1565
  %1956 = vmatmul.mubr.f32.gmra.mxu0 %v1362
  %v1957 = vpop.f32.mrf.mxu0
  %v1958 = vadd.f32 0.0, %v1957
  %v1959 = vpop.f32.mrf.mxu0
  %v1960 = vadd.f32 0.0, %v1959
  %1961 = vmatprep.mubr.f32.mxu0 %v1568
  %1962 = vmatmul.mubr.f32.gmra.mxu0 %v1363
  %v1963 = vpop.f32.mrf.mxu0
  %v1964 = vadd.f32 0.0, %v1963
  %v1965 = vpop.f32.mrf.mxu0
  %v1966 = vadd.f32 0.0, %v1965
  %1967 = vmatprep.mubr.f32.mxu0 %v1571
  %1968 = vmatmul.mubr.f32.gmra.mxu0 %v1364
  %v1969 = vpop.f32.mrf.mxu0
  %v1970 = vadd.f32 0.0, %v1969
  %v1971 = vpop.f32.mrf.mxu0
  %v1972 = vadd.f32 0.0, %v1971
  %1973 = vmatprep.mubr.f32.mxu0 %v1574
  %1974 = vmatmul.mubr.f32.gmra.mxu0 %v1365
  %v1975 = vpop.f32.mrf.mxu0
  %v1976 = vadd.f32 0.0, %v1975
  %v1977 = vpop.f32.mrf.mxu0
  %v1978 = vadd.f32 0.0, %v1977
  %1979 = vmatprep.mubr.f32.mxu0 %v1577
  %1980 = vmatmul.mubr.f32.gmra.mxu0 %v1366
  %v1981 = vpop.f32.mrf.mxu0
  %v1982 = vadd.f32 0.0, %v1981
  %v1983 = vpop.f32.mrf.mxu0
  %v1984 = vadd.f32 0.0, %v1983
  %1985 = vmatprep.mubr.f32.mxu0 %v1580
  %1986 = vmatmul.mubr.f32.gmra.mxu0 %v1367
  %v1987 = vpop.f32.mrf.mxu0
  %v1988 = vadd.f32 0.0, %v1987
  %v1989 = vpop.f32.mrf.mxu0
  %v1990 = vadd.f32 0.0, %v1989
  %1991 = vmatprep.mubr.f32.mxu0 %v1583
  %1992 = vmatmul.mubr.f32.gmra.mxu0 %v1368
  %v1993 = vpop.f32.mrf.mxu0
  %v1994 = vadd.f32 0.0, %v1993
  %v1995 = vpop.f32.mrf.mxu0
  %v1996 = vadd.f32 0.0, %v1995
  %1997 = vmatprep.mubr.f32.mxu0 %v1586
  %1998 = vmatmul.mubr.f32.gmra.mxu0 %v1369
  %v1999 = vpop.f32.mrf.mxu0
  %v2000 = vadd.f32 0.0, %v1999
  %v2001 = vpop.f32.mrf.mxu0
  %v2002 = vadd.f32 0.0, %v2001
  %2003 = vmatprep.mubr.f32.mxu0 %v1589
  %2004 = vmatmul.mubr.f32.gmra.mxu0 %v1370
  %v2005 = vpop.f32.mrf.mxu0
  %v2006 = vadd.f32 0.0, %v2005
  %v2007 = vpop.f32.mrf.mxu0
  %v2008 = vadd.f32 0.0, %v2007
  %2009 = vmatprep.mubr.f32.mxu0 %v1592
  %2010 = vmatmul.mubr.f32.gmra.mxu0 %v1371
  %v2011 = vpop.f32.mrf.mxu0
  %v2012 = vadd.f32 0.0, %v2011
  %v2013 = vpop.f32.mrf.mxu0
  %v2014 = vadd.f32 0.0, %v2013
  %2015 = vmatprep.mubr.f32.mxu0 %v1595
  %2016 = vmatmul.mubr.f32.gmra.mxu0 %v1372
  %v2017 = vpop.f32.mrf.mxu0
  %v2018 = vadd.f32 0.0, %v2017
  %v2019 = vpop.f32.mrf.mxu0
  %v2020 = vadd.f32 0.0, %v2019
  %2021 = vmatprep.mubr.f32.mxu0 %v1598
  %2022 = vmatmul.mubr.f32.gmra.mxu0 %v1373
  %v2023 = vpop.f32.mrf.mxu0
  %v2024 = vadd.f32 0.0, %v2023
  %v2025 = vpop.f32.mrf.mxu0
  %v2026 = vadd.f32 0.0, %v2025
  %2027 = vmatprep.mubr.f32.mxu0 %v1601
  %2028 = vmatmul.mubr.f32.gmra.mxu0 %v1374
  %v2029 = vpop.f32.mrf.mxu0
  %v2030 = vadd.f32 0.0, %v2029
  %v2031 = vpop.f32.mrf.mxu0
  %v2032 = vadd.f32 0.0, %v2031
  %2033 = vmatprep.mubr.f32.mxu0 %v1604
  %2034 = vmatmul.mubr.f32.gmra.mxu0 %v1375
  %v2035 = vpop.f32.mrf.mxu0
  %v2036 = vadd.f32 0.0, %v2035
  %v2037 = vpop.f32.mrf.mxu0
  %v2038 = vadd.f32 0.0, %v2037
  %2039 = vmatprep.mubr.f32.mxu0 %v1607
  %2040 = vmatmul.mubr.f32.gmra.mxu0 %v1376
  %v2041 = vpop.f32.mrf.mxu0
  %v2042 = vadd.f32 0.0, %v2041
  %v2043 = vpop.f32.mrf.mxu0
  %v2044 = vadd.f32 0.0, %v2043
  %2045 = vmatprep.mubr.f32.mxu0 %v1610
  %2046 = vmatmul.mubr.f32.gmra.mxu0 %v1377
  %v2047 = vpop.f32.mrf.mxu0
  %v2048 = vadd.f32 0.0, %v2047
  %v2049 = vpop.f32.mrf.mxu0
  %v2050 = vadd.f32 0.0, %v2049
  %2051 = vmatprep.mubr.f32.mxu0 %v1613
  %2052 = vmatmul.mubr.f32.gmra.mxu0 %v1378
  %v2053 = vpop.f32.mrf.mxu0
  %v2054 = vadd.f32 0.0, %v2053
  %v2055 = vpop.f32.mrf.mxu0
  %v2056 = vadd.f32 0.0, %v2055
  %2057 = vmatprep.mubr.f32.mxu0 %v1616
  %2058 = vmatmul.mubr.f32.gmra.mxu0 %v1379
  %v2059 = vpop.f32.mrf.mxu0
  %v2060 = vadd.f32 0.0, %v2059
  %v2061 = vpop.f32.mrf.mxu0
  %v2062 = vadd.f32 0.0, %v2061
  %2063 = vmatprep.mubr.f32.mxu0 %v1619
  %2064 = vmatmul.mubr.f32.gmra.mxu0 %v1380
  %v2065 = vpop.f32.mrf.mxu0
  %v2066 = vadd.f32 0.0, %v2065
  %v2067 = vpop.f32.mrf.mxu0
  %v2068 = vadd.f32 0.0, %v2067
  %2069 = vdwg.mxu0
  %v2070 = vlaneseq
  %v2071 = vshrl.u32 %v2070, 7
  %v2072 = vadd.s32 %v2071, 8
  %v2073 = vadd.s32 %v2071, 16
  %v2074 = vadd.s32 %v2071, 24
  %v2075 = vadd.s32 %v99, 128
  %vm2076 = vcmp.lt.s32.totalorder %v99, 128
  %vm2077 = vcmp.lt.s32.totalorder %v2075, 128
  %v2078 = vsel %vm2076, 30, 31
  %v2079 = vsel %vm2077, 30, 31
  %vm2080 = vcmp.lt.s32.totalorder %v2071, %v2078
  %vm2081 = vcmp.lt.s32.totalorder %v2071, %v2079
  %vm2082 = vcmp.lt.s32.totalorder %v2072, %v2078
  %vm2083 = vcmp.lt.s32.totalorder %v2072, %v2079
  %vm2084 = vcmp.lt.s32.totalorder %v2073, %v2078
  %vm2085 = vcmp.lt.s32.totalorder %v2073, %v2079
  %vm2086 = vcmp.lt.s32.totalorder %v2074, %v2078
  %vm2087 = vcmp.lt.s32.totalorder %v2074, %v2079
  %v2088 = vsel %vm2080, 0.0, -1e+30
  %v2089 = vsel %vm2081, 0.0, -1e+30
  %v2090 = vsel %vm2082, 0.0, -1e+30
  %v2091 = vsel %vm2083, 0.0, -1e+30
  %v2092 = vsel %vm2084, 0.0, -1e+30
  %v2093 = vsel %vm2085, 0.0, -1e+30
  %v2094 = vsel %vm2086, 0.0, -1e+30
  %v2095 = vsel %vm2087, 0.0, -1e+30
  %v2096 = vadd.f32 %v1688, %v2088
  %v2097 = vadd.f32 %v1690, %v2089
  %v2098 = vadd.f32 %v1694, %v2090
  %v2099 = vadd.f32 %v1696, %v2091
  %v2100 = vadd.f32 %v1700, %v2092
  %v2101 = vadd.f32 %v1702, %v2093
  %v2102 = vadd.f32 %v1706, %v2094
  %v2103 = vadd.f32 %v1708, %v2095
  %v2104 = vadd.f32 %v1712, %v2088
  %v2105 = vadd.f32 %v1714, %v2089
  %v2106 = vadd.f32 %v1718, %v2090
  %v2107 = vadd.f32 %v1720, %v2091
  %v2108 = vadd.f32 %v1724, %v2092
  %v2109 = vadd.f32 %v1726, %v2093
  %v2110 = vadd.f32 %v1730, %v2094
  %v2111 = vadd.f32 %v1732, %v2095
  %v2112 = vadd.f32 %v1736, %v2088
  %v2113 = vadd.f32 %v1738, %v2089
  %v2114 = vadd.f32 %v1742, %v2090
  %v2115 = vadd.f32 %v1744, %v2091
  %v2116 = vadd.f32 %v1748, %v2092
  %v2117 = vadd.f32 %v1750, %v2093
  %v2118 = vadd.f32 %v1754, %v2094
  %v2119 = vadd.f32 %v1756, %v2095
  %v2120 = vadd.f32 %v1760, %v2088
  %v2121 = vadd.f32 %v1762, %v2089
  %v2122 = vadd.f32 %v1766, %v2090
  %v2123 = vadd.f32 %v1768, %v2091
  %v2124 = vadd.f32 %v1772, %v2092
  %v2125 = vadd.f32 %v1774, %v2093
  %v2126 = vadd.f32 %v1778, %v2094
  %v2127 = vadd.f32 %v1780, %v2095
  %v2128 = vadd.f32 %v1784, %v2088
  %v2129 = vadd.f32 %v1786, %v2089
  %v2130 = vadd.f32 %v1790, %v2090
  %v2131 = vadd.f32 %v1792, %v2091
  %v2132 = vadd.f32 %v1796, %v2092
  %v2133 = vadd.f32 %v1798, %v2093
  %v2134 = vadd.f32 %v1802, %v2094
  %v2135 = vadd.f32 %v1804, %v2095
  %v2136 = vadd.f32 %v1808, %v2088
  %v2137 = vadd.f32 %v1810, %v2089
  %v2138 = vadd.f32 %v1814, %v2090
  %v2139 = vadd.f32 %v1816, %v2091
  %v2140 = vadd.f32 %v1820, %v2092
  %v2141 = vadd.f32 %v1822, %v2093
  %v2142 = vadd.f32 %v1826, %v2094
  %v2143 = vadd.f32 %v1828, %v2095
  %v2144 = vadd.f32 %v1832, %v2088
  %v2145 = vadd.f32 %v1834, %v2089
  %v2146 = vadd.f32 %v1838, %v2090
  %v2147 = vadd.f32 %v1840, %v2091
  %v2148 = vadd.f32 %v1844, %v2092
  %v2149 = vadd.f32 %v1846, %v2093
  %v2150 = vadd.f32 %v1850, %v2094
  %v2151 = vadd.f32 %v1852, %v2095
  %v2152 = vadd.f32 %v1856, %v2088
  %v2153 = vadd.f32 %v1858, %v2089
  %v2154 = vadd.f32 %v1862, %v2090
  %v2155 = vadd.f32 %v1864, %v2091
  %v2156 = vadd.f32 %v1868, %v2092
  %v2157 = vadd.f32 %v1870, %v2093
  %v2158 = vadd.f32 %v1874, %v2094
  %v2159 = vadd.f32 %v1876, %v2095
  %v2160 = vadd.f32 %v1880, %v2088
  %v2161 = vadd.f32 %v1882, %v2089
  %v2162 = vadd.f32 %v1886, %v2090
  %v2163 = vadd.f32 %v1888, %v2091
  %v2164 = vadd.f32 %v1892, %v2092
  %v2165 = vadd.f32 %v1894, %v2093
  %v2166 = vadd.f32 %v1898, %v2094
  %v2167 = vadd.f32 %v1900, %v2095
  %v2168 = vadd.f32 %v1904, %v2088
  %v2169 = vadd.f32 %v1906, %v2089
  %v2170 = vadd.f32 %v1910, %v2090
  %v2171 = vadd.f32 %v1912, %v2091
  %v2172 = vadd.f32 %v1916, %v2092
  %v2173 = vadd.f32 %v1918, %v2093
  %v2174 = vadd.f32 %v1922, %v2094
  %v2175 = vadd.f32 %v1924, %v2095
  %v2176 = vadd.f32 %v1928, %v2088
  %v2177 = vadd.f32 %v1930, %v2089
  %v2178 = vadd.f32 %v1934, %v2090
  %v2179 = vadd.f32 %v1936, %v2091
  %v2180 = vadd.f32 %v1940, %v2092
  %v2181 = vadd.f32 %v1942, %v2093
  %v2182 = vadd.f32 %v1946, %v2094
  %v2183 = vadd.f32 %v1948, %v2095
  %v2184 = vadd.f32 %v1952, %v2088
  %v2185 = vadd.f32 %v1954, %v2089
  %v2186 = vadd.f32 %v1958, %v2090
  %v2187 = vadd.f32 %v1960, %v2091
  %v2188 = vadd.f32 %v1964, %v2092
  %v2189 = vadd.f32 %v1966, %v2093
  %v2190 = vadd.f32 %v1970, %v2094
  %v2191 = vadd.f32 %v1972, %v2095
  %v2192 = vadd.f32 %v1976, %v2088
  %v2193 = vadd.f32 %v1978, %v2089
  %v2194 = vadd.f32 %v1982, %v2090
  %v2195 = vadd.f32 %v1984, %v2091
  %v2196 = vadd.f32 %v1988, %v2092
  %v2197 = vadd.f32 %v1990, %v2093
  %v2198 = vadd.f32 %v1994, %v2094
  %v2199 = vadd.f32 %v1996, %v2095
  %v2200 = vadd.f32 %v2000, %v2088
  %v2201 = vadd.f32 %v2002, %v2089
  %v2202 = vadd.f32 %v2006, %v2090
  %v2203 = vadd.f32 %v2008, %v2091
  %v2204 = vadd.f32 %v2012, %v2092
  %v2205 = vadd.f32 %v2014, %v2093
  %v2206 = vadd.f32 %v2018, %v2094
  %v2207 = vadd.f32 %v2020, %v2095
  %v2208 = vadd.f32 %v2024, %v2088
  %v2209 = vadd.f32 %v2026, %v2089
  %v2210 = vadd.f32 %v2030, %v2090
  %v2211 = vadd.f32 %v2032, %v2091
  %v2212 = vadd.f32 %v2036, %v2092
  %v2213 = vadd.f32 %v2038, %v2093
  %v2214 = vadd.f32 %v2042, %v2094
  %v2215 = vadd.f32 %v2044, %v2095
  %v2216 = vadd.f32 %v2048, %v2088
  %v2217 = vadd.f32 %v2050, %v2089
  %v2218 = vadd.f32 %v2054, %v2090
  %v2219 = vadd.f32 %v2056, %v2091
  %v2220 = vadd.f32 %v2060, %v2092
  %v2221 = vadd.f32 %v2062, %v2093
  %v2222 = vadd.f32 %v2066, %v2094
  %v2223 = vadd.f32 %v2068, %v2095
  %v2224 = vmax.f32 %v2096, %v2098
  %v2225 = vmax.f32 %v2224, %v2100
  %v2226 = vmax.f32 %v2225, %v2102
  %v2227 = vrot.slane %v2226, 4
  %v2228 = vmax.f32 %v2226, %v2227
  %v2229 = vrot.slane %v2228, 2
  %v2230 = vmax.f32 %v2228, %v2229
  %v2231 = vrot.slane %v2230, 1
  %v2232 = vmax.f32 %v2230, %v2231
  %v2233 = vmax.f32 %v2097, %v2099
  %v2234 = vmax.f32 %v2233, %v2101
  %v2235 = vmax.f32 %v2234, %v2103
  %v2236 = vrot.slane %v2235, 4
  %v2237 = vmax.f32 %v2235, %v2236
  %v2238 = vrot.slane %v2237, 2
  %v2239 = vmax.f32 %v2237, %v2238
  %v2240 = vrot.slane %v2239, 1
  %v2241 = vmax.f32 %v2239, %v2240
  %v2242 = vmax.f32 %v2104, %v2106
  %v2243 = vmax.f32 %v2242, %v2108
  %v2244 = vmax.f32 %v2243, %v2110
  %v2245 = vrot.slane %v2244, 4
  %v2246 = vmax.f32 %v2244, %v2245
  %v2247 = vrot.slane %v2246, 2
  %v2248 = vmax.f32 %v2246, %v2247
  %v2249 = vrot.slane %v2248, 1
  %v2250 = vmax.f32 %v2248, %v2249
  %v2251 = vmax.f32 %v2105, %v2107
  %v2252 = vmax.f32 %v2251, %v2109
  %v2253 = vmax.f32 %v2252, %v2111
  %v2254 = vrot.slane %v2253, 4
  %v2255 = vmax.f32 %v2253, %v2254
  %v2256 = vrot.slane %v2255, 2
  %v2257 = vmax.f32 %v2255, %v2256
  %v2258 = vrot.slane %v2257, 1
  %v2259 = vmax.f32 %v2257, %v2258
  %v2260 = vmax.f32 %v2112, %v2114
  %v2261 = vmax.f32 %v2260, %v2116
  %v2262 = vmax.f32 %v2261, %v2118
  %v2263 = vrot.slane %v2262, 4
  %v2264 = vmax.f32 %v2262, %v2263
  %v2265 = vrot.slane %v2264, 2
  %v2266 = vmax.f32 %v2264, %v2265
  %v2267 = vrot.slane %v2266, 1
  %v2268 = vmax.f32 %v2266, %v2267
  %v2269 = vmax.f32 %v2113, %v2115
  %v2270 = vmax.f32 %v2269, %v2117
  %v2271 = vmax.f32 %v2270, %v2119
  %v2272 = vrot.slane %v2271, 4
  %v2273 = vmax.f32 %v2271, %v2272
  %v2274 = vrot.slane %v2273, 2
  %v2275 = vmax.f32 %v2273, %v2274
  %v2276 = vrot.slane %v2275, 1
  %v2277 = vmax.f32 %v2275, %v2276
  %v2278 = vmax.f32 %v2120, %v2122
  %v2279 = vmax.f32 %v2278, %v2124
  %v2280 = vmax.f32 %v2279, %v2126
  %v2281 = vrot.slane %v2280, 4
  %v2282 = vmax.f32 %v2280, %v2281
  %v2283 = vrot.slane %v2282, 2
  %v2284 = vmax.f32 %v2282, %v2283
  %v2285 = vrot.slane %v2284, 1
  %v2286 = vmax.f32 %v2284, %v2285
  %v2287 = vmax.f32 %v2121, %v2123
  %v2288 = vmax.f32 %v2287, %v2125
  %v2289 = vmax.f32 %v2288, %v2127
  %v2290 = vrot.slane %v2289, 4
  %v2291 = vmax.f32 %v2289, %v2290
  %v2292 = vrot.slane %v2291, 2
  %v2293 = vmax.f32 %v2291, %v2292
  %v2294 = vrot.slane %v2293, 1
  %v2295 = vmax.f32 %v2293, %v2294
  %v2296 = vmax.f32 %v2128, %v2130
  %v2297 = vmax.f32 %v2296, %v2132
  %v2298 = vmax.f32 %v2297, %v2134
  %v2299 = vrot.slane %v2298, 4
  %v2300 = vmax.f32 %v2298, %v2299
  %v2301 = vrot.slane %v2300, 2
  %v2302 = vmax.f32 %v2300, %v2301
  %v2303 = vrot.slane %v2302, 1
  %v2304 = vmax.f32 %v2302, %v2303
  %v2305 = vmax.f32 %v2129, %v2131
  %v2306 = vmax.f32 %v2305, %v2133
  %v2307 = vmax.f32 %v2306, %v2135
  %v2308 = vrot.slane %v2307, 4
  %v2309 = vmax.f32 %v2307, %v2308
  %v2310 = vrot.slane %v2309, 2
  %v2311 = vmax.f32 %v2309, %v2310
  %v2312 = vrot.slane %v2311, 1
  %v2313 = vmax.f32 %v2311, %v2312
  %v2314 = vmax.f32 %v2136, %v2138
  %v2315 = vmax.f32 %v2314, %v2140
  %v2316 = vmax.f32 %v2315, %v2142
  %v2317 = vrot.slane %v2316, 4
  %v2318 = vmax.f32 %v2316, %v2317
  %v2319 = vrot.slane %v2318, 2
  %v2320 = vmax.f32 %v2318, %v2319
  %v2321 = vrot.slane %v2320, 1
  %v2322 = vmax.f32 %v2320, %v2321
  %v2323 = vmax.f32 %v2137, %v2139
  %v2324 = vmax.f32 %v2323, %v2141
  %v2325 = vmax.f32 %v2324, %v2143
  %v2326 = vrot.slane %v2325, 4
  %v2327 = vmax.f32 %v2325, %v2326
  %v2328 = vrot.slane %v2327, 2
  %v2329 = vmax.f32 %v2327, %v2328
  %v2330 = vrot.slane %v2329, 1
  %v2331 = vmax.f32 %v2329, %v2330
  %v2332 = vmax.f32 %v2144, %v2146
  %v2333 = vmax.f32 %v2332, %v2148
  %v2334 = vmax.f32 %v2333, %v2150
  %v2335 = vrot.slane %v2334, 4
  %v2336 = vmax.f32 %v2334, %v2335
  %v2337 = vrot.slane %v2336, 2
  %v2338 = vmax.f32 %v2336, %v2337
  %v2339 = vrot.slane %v2338, 1
  %v2340 = vmax.f32 %v2338, %v2339
  %v2341 = vmax.f32 %v2145, %v2147
  %v2342 = vmax.f32 %v2341, %v2149
  %v2343 = vmax.f32 %v2342, %v2151
  %v2344 = vrot.slane %v2343, 4
  %v2345 = vmax.f32 %v2343, %v2344
  %v2346 = vrot.slane %v2345, 2
  %v2347 = vmax.f32 %v2345, %v2346
  %v2348 = vrot.slane %v2347, 1
  %v2349 = vmax.f32 %v2347, %v2348
  %v2350 = vmax.f32 %v2152, %v2154
  %v2351 = vmax.f32 %v2350, %v2156
  %v2352 = vmax.f32 %v2351, %v2158
  %v2353 = vrot.slane %v2352, 4
  %v2354 = vmax.f32 %v2352, %v2353
  %v2355 = vrot.slane %v2354, 2
  %v2356 = vmax.f32 %v2354, %v2355
  %v2357 = vrot.slane %v2356, 1
  %v2358 = vmax.f32 %v2356, %v2357
  %v2359 = vmax.f32 %v2153, %v2155
  %v2360 = vmax.f32 %v2359, %v2157
  %v2361 = vmax.f32 %v2360, %v2159
  %v2362 = vrot.slane %v2361, 4
  %v2363 = vmax.f32 %v2361, %v2362
  %v2364 = vrot.slane %v2363, 2
  %v2365 = vmax.f32 %v2363, %v2364
  %v2366 = vrot.slane %v2365, 1
  %v2367 = vmax.f32 %v2365, %v2366
  %v2368 = vmax.f32 %v2160, %v2162
  %v2369 = vmax.f32 %v2368, %v2164
  %v2370 = vmax.f32 %v2369, %v2166
  %v2371 = vrot.slane %v2370, 4
  %v2372 = vmax.f32 %v2370, %v2371
  %v2373 = vrot.slane %v2372, 2
  %v2374 = vmax.f32 %v2372, %v2373
  %v2375 = vrot.slane %v2374, 1
  %v2376 = vmax.f32 %v2374, %v2375
  %v2377 = vmax.f32 %v2161, %v2163
  %v2378 = vmax.f32 %v2377, %v2165
  %v2379 = vmax.f32 %v2378, %v2167
  %v2380 = vrot.slane %v2379, 4
  %v2381 = vmax.f32 %v2379, %v2380
  %v2382 = vrot.slane %v2381, 2
  %v2383 = vmax.f32 %v2381, %v2382
  %v2384 = vrot.slane %v2383, 1
  %v2385 = vmax.f32 %v2383, %v2384
  %v2386 = vmax.f32 %v2168, %v2170
  %v2387 = vmax.f32 %v2386, %v2172
  %v2388 = vmax.f32 %v2387, %v2174
  %v2389 = vrot.slane %v2388, 4
  %v2390 = vmax.f32 %v2388, %v2389
  %v2391 = vrot.slane %v2390, 2
  %v2392 = vmax.f32 %v2390, %v2391
  %v2393 = vrot.slane %v2392, 1
  %v2394 = vmax.f32 %v2392, %v2393
  %v2395 = vmax.f32 %v2169, %v2171
  %v2396 = vmax.f32 %v2395, %v2173
  %v2397 = vmax.f32 %v2396, %v2175
  %v2398 = vrot.slane %v2397, 4
  %v2399 = vmax.f32 %v2397, %v2398
  %v2400 = vrot.slane %v2399, 2
  %v2401 = vmax.f32 %v2399, %v2400
  %v2402 = vrot.slane %v2401, 1
  %v2403 = vmax.f32 %v2401, %v2402
  %v2404 = vmax.f32 %v2176, %v2178
  %v2405 = vmax.f32 %v2404, %v2180
  %v2406 = vmax.f32 %v2405, %v2182
  %v2407 = vrot.slane %v2406, 4
  %v2408 = vmax.f32 %v2406, %v2407
  %v2409 = vrot.slane %v2408, 2
  %v2410 = vmax.f32 %v2408, %v2409
  %v2411 = vrot.slane %v2410, 1
  %v2412 = vmax.f32 %v2410, %v2411
  %v2413 = vmax.f32 %v2177, %v2179
  %v2414 = vmax.f32 %v2413, %v2181
  %v2415 = vmax.f32 %v2414, %v2183
  %v2416 = vrot.slane %v2415, 4
  %v2417 = vmax.f32 %v2415, %v2416
  %v2418 = vrot.slane %v2417, 2
  %v2419 = vmax.f32 %v2417, %v2418
  %v2420 = vrot.slane %v2419, 1
  %v2421 = vmax.f32 %v2419, %v2420
  %v2422 = vmax.f32 %v2184, %v2186
  %v2423 = vmax.f32 %v2422, %v2188
  %v2424 = vmax.f32 %v2423, %v2190
  %v2425 = vrot.slane %v2424, 4
  %v2426 = vmax.f32 %v2424, %v2425
  %v2427 = vrot.slane %v2426, 2
  %v2428 = vmax.f32 %v2426, %v2427
  %v2429 = vrot.slane %v2428, 1
  %v2430 = vmax.f32 %v2428, %v2429
  %v2431 = vmax.f32 %v2185, %v2187
  %v2432 = vmax.f32 %v2431, %v2189
  %v2433 = vmax.f32 %v2432, %v2191
  %v2434 = vrot.slane %v2433, 4
  %v2435 = vmax.f32 %v2433, %v2434
  %v2436 = vrot.slane %v2435, 2
  %v2437 = vmax.f32 %v2435, %v2436
  %v2438 = vrot.slane %v2437, 1
  %v2439 = vmax.f32 %v2437, %v2438
  %v2440 = vmax.f32 %v2192, %v2194
  %v2441 = vmax.f32 %v2440, %v2196
  %v2442 = vmax.f32 %v2441, %v2198
  %v2443 = vrot.slane %v2442, 4
  %v2444 = vmax.f32 %v2442, %v2443
  %v2445 = vrot.slane %v2444, 2
  %v2446 = vmax.f32 %v2444, %v2445
  %v2447 = vrot.slane %v2446, 1
  %v2448 = vmax.f32 %v2446, %v2447
  %v2449 = vmax.f32 %v2193, %v2195
  %v2450 = vmax.f32 %v2449, %v2197
  %v2451 = vmax.f32 %v2450, %v2199
  %v2452 = vrot.slane %v2451, 4
  %v2453 = vmax.f32 %v2451, %v2452
  %v2454 = vrot.slane %v2453, 2
  %v2455 = vmax.f32 %v2453, %v2454
  %v2456 = vrot.slane %v2455, 1
  %v2457 = vmax.f32 %v2455, %v2456
  %v2458 = vmax.f32 %v2200, %v2202
  %v2459 = vmax.f32 %v2458, %v2204
  %v2460 = vmax.f32 %v2459, %v2206
  %v2461 = vrot.slane %v2460, 4
  %v2462 = vmax.f32 %v2460, %v2461
  %v2463 = vrot.slane %v2462, 2
  %v2464 = vmax.f32 %v2462, %v2463
  %v2465 = vrot.slane %v2464, 1
  %v2466 = vmax.f32 %v2464, %v2465
  %v2467 = vmax.f32 %v2201, %v2203
  %v2468 = vmax.f32 %v2467, %v2205
  %v2469 = vmax.f32 %v2468, %v2207
  %v2470 = vrot.slane %v2469, 4
  %v2471 = vmax.f32 %v2469, %v2470
  %v2472 = vrot.slane %v2471, 2
  %v2473 = vmax.f32 %v2471, %v2472
  %v2474 = vrot.slane %v2473, 1
  %v2475 = vmax.f32 %v2473, %v2474
  %v2476 = vmax.f32 %v2208, %v2210
  %v2477 = vmax.f32 %v2476, %v2212
  %v2478 = vmax.f32 %v2477, %v2214
  %v2479 = vrot.slane %v2478, 4
  %v2480 = vmax.f32 %v2478, %v2479
  %v2481 = vrot.slane %v2480, 2
  %v2482 = vmax.f32 %v2480, %v2481
  %v2483 = vrot.slane %v2482, 1
  %v2484 = vmax.f32 %v2482, %v2483
  %v2485 = vmax.f32 %v2209, %v2211
  %v2486 = vmax.f32 %v2485, %v2213
  %v2487 = vmax.f32 %v2486, %v2215
  %v2488 = vrot.slane %v2487, 4
  %v2489 = vmax.f32 %v2487, %v2488
  %v2490 = vrot.slane %v2489, 2
  %v2491 = vmax.f32 %v2489, %v2490
  %v2492 = vrot.slane %v2491, 1
  %v2493 = vmax.f32 %v2491, %v2492
  %v2494 = vmax.f32 %v2216, %v2218
  %v2495 = vmax.f32 %v2494, %v2220
  %v2496 = vmax.f32 %v2495, %v2222
  %v2497 = vrot.slane %v2496, 4
  %v2498 = vmax.f32 %v2496, %v2497
  %v2499 = vrot.slane %v2498, 2
  %v2500 = vmax.f32 %v2498, %v2499
  %v2501 = vrot.slane %v2500, 1
  %v2502 = vmax.f32 %v2500, %v2501
  %v2503 = vmax.f32 %v2217, %v2219
  %v2504 = vmax.f32 %v2503, %v2221
  %v2505 = vmax.f32 %v2504, %v2223
  %v2506 = vrot.slane %v2505, 4
  %v2507 = vmax.f32 %v2505, %v2506
  %v2508 = vrot.slane %v2507, 2
  %v2509 = vmax.f32 %v2507, %v2508
  %v2510 = vrot.slane %v2509, 1
  %v2511 = vmax.f32 %v2509, %v2510
  %v2512 = vld [vmem:[%s2] sm:$0x3]
  %v2514 = vlaneseq
  %v2515 = vshrl.u32 %v2514, 7
  %v2516 = vsub.s32 0, %v2515
  %v2517 = vrot.slane %v2512, %v2516
  %v2518 = vlaneseq
  %v2519 = vshrl.u32 %v2518, 7
  %v2520 = vsub.s32 1, %v2519
  %v2521 = vrot.slane %v2512, %v2520
  %v2524 = vadd.f32 %v2232, %v2517
  %v2525 = vadd.f32 %v2241, %v2521
  %v2526 = vadd.f32 %v2250, %v2517
  %v2527 = vadd.f32 %v2259, %v2521
  %v2528 = vadd.f32 %v2268, %v2517
  %v2529 = vadd.f32 %v2277, %v2521
  %v2530 = vadd.f32 %v2286, %v2517
  %v2531 = vadd.f32 %v2295, %v2521
  %v2532 = vadd.f32 %v2304, %v2517
  %v2533 = vadd.f32 %v2313, %v2521
  %v2534 = vadd.f32 %v2322, %v2517
  %v2535 = vadd.f32 %v2331, %v2521
  %v2536 = vadd.f32 %v2340, %v2517
  %v2537 = vadd.f32 %v2349, %v2521
  %v2538 = vadd.f32 %v2358, %v2517
  %v2539 = vadd.f32 %v2367, %v2521
  %v2540 = vadd.f32 %v2376, %v2517
  %v2541 = vadd.f32 %v2385, %v2521
  %v2542 = vadd.f32 %v2394, %v2517
  %v2543 = vadd.f32 %v2403, %v2521
  %v2544 = vadd.f32 %v2412, %v2517
  %v2545 = vadd.f32 %v2421, %v2521
  %v2546 = vadd.f32 %v2430, %v2517
  %v2547 = vadd.f32 %v2439, %v2521
  %v2548 = vadd.f32 %v2448, %v2517
  %v2549 = vadd.f32 %v2457, %v2521
  %v2550 = vadd.f32 %v2466, %v2517
  %v2551 = vadd.f32 %v2475, %v2521
  %v2552 = vadd.f32 %v2484, %v2517
  %v2553 = vadd.f32 %v2493, %v2521
  %v2554 = vadd.f32 %v2502, %v2517
  %v2555 = vadd.f32 %v2511, %v2521
  %v2556 = vmax.f32 %v2524, 0.0
  %v2557 = vmax.f32 %v2525, 0.0
  %v2558 = vmax.f32 %v2526, 0.0
  %v2559 = vmax.f32 %v2527, 0.0
  %v2560 = vmax.f32 %v2528, 0.0
  %v2561 = vmax.f32 %v2529, 0.0
  %v2562 = vmax.f32 %v2530, 0.0
  %v2563 = vmax.f32 %v2531, 0.0
  %v2564 = vmax.f32 %v2532, 0.0
  %v2565 = vmax.f32 %v2533, 0.0
  %v2566 = vmax.f32 %v2534, 0.0
  %v2567 = vmax.f32 %v2535, 0.0
  %v2568 = vmax.f32 %v2536, 0.0
  %v2569 = vmax.f32 %v2537, 0.0
  %v2570 = vmax.f32 %v2538, 0.0
  %v2571 = vmax.f32 %v2539, 0.0
  %v2572 = vmax.f32 %v2540, 0.0
  %v2573 = vmax.f32 %v2541, 0.0
  %v2574 = vmax.f32 %v2542, 0.0
  %v2575 = vmax.f32 %v2543, 0.0
  %v2576 = vmax.f32 %v2544, 0.0
  %v2577 = vmax.f32 %v2545, 0.0
  %v2578 = vmax.f32 %v2546, 0.0
  %v2579 = vmax.f32 %v2547, 0.0
  %v2580 = vmax.f32 %v2548, 0.0
  %v2581 = vmax.f32 %v2549, 0.0
  %v2582 = vmax.f32 %v2550, 0.0
  %v2583 = vmax.f32 %v2551, 0.0
  %v2584 = vmax.f32 %v2552, 0.0
  %v2585 = vmax.f32 %v2553, 0.0
  %v2586 = vmax.f32 %v2554, 0.0
  %v2587 = vmax.f32 %v2555, 0.0
  %v2588 = vld [vmem:[%s3] sm:$0xff]
  %v2589 = vld [vmem:[%s3 + $0x8] sm:$0xff]
  %v2590 = vld [vmem:[%s3 + $0x10] sm:$0xff]
  %v2591 = vld [vmem:[%s3 + $0x18] sm:$0xff]
  %v2592 = vld [vmem:[%s3 + $0x20] sm:$0xff]
  %v2593 = vld [vmem:[%s3 + $0x28] sm:$0xff]
  %v2594 = vld [vmem:[%s3 + $0x30] sm:$0xff]
  %v2595 = vld [vmem:[%s3 + $0x38] sm:$0xff]
  %v2596 = vld [vmem:[%s3 + $0x40] sm:$0xff]
  %v2597 = vld [vmem:[%s3 + $0x48] sm:$0xff]
  %v2598 = vld [vmem:[%s3 + $0x50] sm:$0xff]
  %v2599 = vld [vmem:[%s3 + $0x58] sm:$0xff]
  %v2600 = vld [vmem:[%s3 + $0x60] sm:$0xff]
  %v2601 = vld [vmem:[%s3 + $0x68] sm:$0xff]
  %v2602 = vld [vmem:[%s3 + $0x70] sm:$0xff]
  %v2603 = vld [vmem:[%s3 + $0x78] sm:$0xff]
  %v2604 = vld [vmem:[%s3 + $0x80] sm:$0xff]
  %v2605 = vld [vmem:[%s3 + $0x88] sm:$0xff]
  %v2606 = vld [vmem:[%s3 + $0x90] sm:$0xff]
  %v2607 = vld [vmem:[%s3 + $0x98] sm:$0xff]
  %v2608 = vld [vmem:[%s3 + $0xa0] sm:$0xff]
  %v2609 = vld [vmem:[%s3 + $0xa8] sm:$0xff]
  %v2610 = vld [vmem:[%s3 + $0xb0] sm:$0xff]
  %v2611 = vld [vmem:[%s3 + $0xb8] sm:$0xff]
  %v2612 = vld [vmem:[%s3 + $0xc0] sm:$0xff]
  %v2613 = vld [vmem:[%s3 + $0xc8] sm:$0xff]
  %v2614 = vld [vmem:[%s3 + $0xd0] sm:$0xff]
  %v2615 = vld [vmem:[%s3 + $0xd8] sm:$0xff]
  %v2616 = vld [vmem:[%s3 + $0xe0] sm:$0xff]
  %v2617 = vld [vmem:[%s3 + $0xe8] sm:$0xff]
  %v2618 = vld [vmem:[%s3 + $0xf0] sm:$0xff]
  %v2619 = vld [vmem:[%s3 + $0xf8] sm:$0xff]
  %v2620 = vld [vmem:[%s3 + $0x100] sm:$0xff]
  %v2621 = vld [vmem:[%s3 + $0x108] sm:$0xff]
  %v2622 = vld [vmem:[%s3 + $0x110] sm:$0xff]
  %v2623 = vld [vmem:[%s3 + $0x118] sm:$0xff]
  %v2624 = vld [vmem:[%s3 + $0x120] sm:$0xff]
  %v2625 = vld [vmem:[%s3 + $0x128] sm:$0xff]
  %v2626 = vld [vmem:[%s3 + $0x130] sm:$0xff]
  %v2627 = vld [vmem:[%s3 + $0x138] sm:$0xff]
  %v2628 = vld [vmem:[%s3 + $0x140] sm:$0xff]
  %v2629 = vld [vmem:[%s3 + $0x148] sm:$0xff]
  %v2630 = vld [vmem:[%s3 + $0x150] sm:$0xff]
  %v2631 = vld [vmem:[%s3 + $0x158] sm:$0xff]
  %v2632 = vld [vmem:[%s3 + $0x160] sm:$0xff]
  %v2633 = vld [vmem:[%s3 + $0x168] sm:$0xff]
  %v2634 = vld [vmem:[%s3 + $0x170] sm:$0xff]
  %v2635 = vld [vmem:[%s3 + $0x178] sm:$0xff]
  %v2636 = vld [vmem:[%s3 + $0x180] sm:$0xff]
  %v2637 = vld [vmem:[%s3 + $0x188] sm:$0xff]
  %v2638 = vld [vmem:[%s3 + $0x190] sm:$0xff]
  %v2639 = vld [vmem:[%s3 + $0x198] sm:$0xff]
  %v2640 = vld [vmem:[%s3 + $0x1a0] sm:$0xff]
  %v2641 = vld [vmem:[%s3 + $0x1a8] sm:$0xff]
  %v2642 = vld [vmem:[%s3 + $0x1b0] sm:$0xff]
  %v2643 = vld [vmem:[%s3 + $0x1b8] sm:$0xff]
  %v2644 = vld [vmem:[%s3 + $0x1c0] sm:$0xff]
  %v2645 = vld [vmem:[%s3 + $0x1c8] sm:$0xff]
  %v2646 = vld [vmem:[%s3 + $0x1d0] sm:$0xff]
  %v2647 = vld [vmem:[%s3 + $0x1d8] sm:$0xff]
  %v2648 = vld [vmem:[%s3 + $0x1e0] sm:$0xff]
  %v2649 = vld [vmem:[%s3 + $0x1e8] sm:$0xff]
  %v2650 = vld [vmem:[%s3 + $0x1f0] sm:$0xff]
  %v2651 = vld [vmem:[%s3 + $0x1f8] sm:$0xff]
  %v2652 = vld [vmem:[%s4] sm:$0x3]
  %v2654 = vlaneseq
  %v2655 = vshrl.u32 %v2654, 7
  %v2656 = vsub.s32 0, %v2655
  %v2657 = vrot.slane %v2652, %v2656
  %v2658 = vlaneseq
  %v2659 = vshrl.u32 %v2658, 7
  %v2660 = vsub.s32 1, %v2659
  %v2661 = vrot.slane %v2652, %v2660
  %v2696 = vrot.slane %v2558, 7
  %vm2697 = vcmask 1041409
  %v2698 = vsel %vm2697, %v2696, %v2556
  %v2699 = vrot.slane %v2560, 6
  %vm2700 = vcmask 1042434
  %v2701 = vsel %vm2700, %v2699, %v2698
  %v2702 = vrot.slane %v2562, 5
  %vm2703 = vcmask 1043459
  %v2704 = vsel %vm2703, %v2702, %v2701
  %v2705 = vrot.slane %v2564, 4
  %vm2706 = vcmask 1044484
  %v2707 = vsel %vm2706, %v2705, %v2704
  %v2708 = vrot.slane %v2566, 3
  %vm2709 = vcmask 1045509
  %v2710 = vsel %vm2709, %v2708, %v2707
  %v2711 = vrot.slane %v2568, 2
  %vm2712 = vcmask 1046534
  %v2713 = vsel %vm2712, %v2711, %v2710
  %v2714 = vrot.slane %v2570, 1
  %vm2715 = vcmask 1047559
  %v2716 = vsel %vm2715, %v2714, %v2713
  %v2717 = vrot.slane %v2559, 7
  %v2718 = vsel %vm2697, %v2717, %v2557
  %v2719 = vrot.slane %v2561, 6
  %v2720 = vsel %vm2700, %v2719, %v2718
  %v2721 = vrot.slane %v2563, 5
  %v2722 = vsel %vm2703, %v2721, %v2720
  %v2723 = vrot.slane %v2565, 4
  %v2724 = vsel %vm2706, %v2723, %v2722
  %v2725 = vrot.slane %v2567, 3
  %v2726 = vsel %vm2709, %v2725, %v2724
  %v2727 = vrot.slane %v2569, 2
  %v2728 = vsel %vm2712, %v2727, %v2726
  %v2729 = vrot.slane %v2571, 1
  %v2730 = vsel %vm2715, %v2729, %v2728
  %v2731 = vrot.slane %v2574, 7
  %v2732 = vsel %vm2697, %v2731, %v2572
  %v2733 = vrot.slane %v2576, 6
  %v2734 = vsel %vm2700, %v2733, %v2732
  %v2735 = vrot.slane %v2578, 5
  %v2736 = vsel %vm2703, %v2735, %v2734
  %v2737 = vrot.slane %v2580, 4
  %v2738 = vsel %vm2706, %v2737, %v2736
  %v2739 = vrot.slane %v2582, 3
  %v2740 = vsel %vm2709, %v2739, %v2738
  %v2741 = vrot.slane %v2584, 2
  %v2742 = vsel %vm2712, %v2741, %v2740
  %v2743 = vrot.slane %v2586, 1
  %v2744 = vsel %vm2715, %v2743, %v2742
  %v2745 = vrot.slane %v2575, 7
  %v2746 = vsel %vm2697, %v2745, %v2573
  %v2747 = vrot.slane %v2577, 6
  %v2748 = vsel %vm2700, %v2747, %v2746
  %v2749 = vrot.slane %v2579, 5
  %v2750 = vsel %vm2703, %v2749, %v2748
  %v2751 = vrot.slane %v2581, 4
  %v2752 = vsel %vm2706, %v2751, %v2750
  %v2753 = vrot.slane %v2583, 3
  %v2754 = vsel %vm2709, %v2753, %v2752
  %v2755 = vrot.slane %v2585, 2
  %v2756 = vsel %vm2712, %v2755, %v2754
  %v2757 = vrot.slane %v2587, 1
  %v2758 = vsel %vm2715, %v2757, %v2756
  %2763 = vmatprep.subr.mxu0 %v2619
  %2764 = vmatpush1.msra.mxu0 %v2618
  %2765 = vmatprep.subr.mxu0 %v2617
  %2766 = vmatpush1.msra.mxu0 %v2616
  %2767 = vmatprep.subr.mxu0 %v2615
  %2768 = vmatpush1.msra.mxu0 %v2614
  %2769 = vmatprep.subr.mxu0 %v2613
  %2770 = vmatpush1.msra.mxu0 %v2612
  %2771 = vmatprep.subr.mxu0 %v2611
  %2772 = vmatpush1.msra.mxu0 %v2610
  %2773 = vmatprep.subr.mxu0 %v2609
  %2774 = vmatpush1.msra.mxu0 %v2608
  %2775 = vmatprep.subr.mxu0 %v2607
  %2776 = vmatpush1.msra.mxu0 %v2606
  %2777 = vmatprep.subr.mxu0 %v2605
  %2778 = vmatpush1.msra.mxu0 %v2604
  %2779 = vmatprep.subr.mxu0 %v2603
  %2780 = vmatpush1.msra.mxu0 %v2602
  %2781 = vmatprep.subr.mxu0 %v2601
  %2782 = vmatpush1.msra.mxu0 %v2600
  %2783 = vmatprep.subr.mxu0 %v2599
  %2784 = vmatpush1.msra.mxu0 %v2598
  %2785 = vmatprep.subr.mxu0 %v2597
  %2786 = vmatpush1.msra.mxu0 %v2596
  %2787 = vmatprep.subr.mxu0 %v2595
  %2788 = vmatpush1.msra.mxu0 %v2594
  %2789 = vmatprep.subr.mxu0 %v2593
  %2790 = vmatpush1.msra.mxu0 %v2592
  %2791 = vmatprep.subr.mxu0 %v2591
  %2792 = vmatpush1.msra.mxu0 %v2590
  %2793 = vmatprep.subr.mxu0 %v2589
  %2794 = vmatpush1.msra.mxu0 %v2588
  %2795 = vmatprep.subr.mxu0 %v2651
  %2796 = vmatpush2.msra.mxu0 %v2650
  %2797 = vmatprep.subr.mxu0 %v2649
  %2798 = vmatpush2.msra.mxu0 %v2648
  %2799 = vmatprep.subr.mxu0 %v2647
  %2800 = vmatpush2.msra.mxu0 %v2646
  %2801 = vmatprep.subr.mxu0 %v2645
  %2802 = vmatpush2.msra.mxu0 %v2644
  %2803 = vmatprep.subr.mxu0 %v2643
  %2804 = vmatpush2.msra.mxu0 %v2642
  %2805 = vmatprep.subr.mxu0 %v2641
  %2806 = vmatpush2.msra.mxu0 %v2640
  %2807 = vmatprep.subr.mxu0 %v2639
  %2808 = vmatpush2.msra.mxu0 %v2638
  %2809 = vmatprep.subr.mxu0 %v2637
  %2810 = vmatpush2.msra.mxu0 %v2636
  %2811 = vmatprep.subr.mxu0 %v2635
  %2812 = vmatpush2.msra.mxu0 %v2634
  %2813 = vmatprep.subr.mxu0 %v2633
  %2814 = vmatpush2.msra.mxu0 %v2632
  %2815 = vmatprep.subr.mxu0 %v2631
  %2816 = vmatpush2.msra.mxu0 %v2630
  %2817 = vmatprep.subr.mxu0 %v2629
  %2818 = vmatpush2.msra.mxu0 %v2628
  %2819 = vmatprep.subr.mxu0 %v2627
  %2820 = vmatpush2.msra.mxu0 %v2626
  %2821 = vmatprep.subr.mxu0 %v2625
  %2822 = vmatpush2.msra.mxu0 %v2624
  %2823 = vmatprep.subr.mxu0 %v2623
  %2824 = vmatpush2.msra.mxu0 %v2622
  %2825 = vmatprep.subr.mxu0 %v2621
  %2826 = vmatpush2.msra.mxu0 %v2620
  %2827 = vmatprep.mubr.f32.mxu0 %v2730
  %2828 = vmatmul.mubr.f32.gmra.mxu0 %v2716
  %v2829 = vpop.f32.mrf.mxu0
  %v2830 = vadd.f32 %v2657, %v2829
  %v2831 = vpop.f32.mrf.mxu0
  %v2832 = vadd.f32 %v2661, %v2831
  %2833 = vmatprep.mubr.f32.mxu0 %v2758
  %2834 = vmatmul.mubr.f32.gmra.mxu0 %v2744
  %v2835 = vpop.f32.mrf.mxu0
  %v2836 = vadd.f32 %v2657, %v2835
  %v2837 = vpop.f32.mrf.mxu0
  %v2838 = vadd.f32 %v2661, %v2837
  %2839 = vdwg.mxu0
  %v2840 = vmax.f32 %v2830, 0.0
  %v2841 = vmax.f32 %v2832, 0.0
  %v2842 = vmax.f32 %v2836, 0.0
  %v2843 = vmax.f32 %v2838, 0.0
  %v2844 = vsub.f32 %v2840, %v2842
  %v2845 = vsub.f32 %v2841, %v2843
  %v2846 = vand.u32 2147483647, %v2844
  %v2847 = vand.u32 2147483647, %v2845
  %v2848 = vmul.f32 %v2840, %v2842
  %v2849 = vmul.f32 %v2841, %v2843
  %v2850 = vld [vmem:[%s5] sm:$0xff]
  %v2851 = vld [vmem:[%s5 + $0x8] sm:$0xff]
  %v2852 = vld [vmem:[%s5 + $0x10] sm:$0xff]
  %v2853 = vld [vmem:[%s5 + $0x18] sm:$0xff]
  %v2854 = vld [vmem:[%s5 + $0x20] sm:$0xff]
  %v2855 = vld [vmem:[%s5 + $0x28] sm:$0xff]
  %v2856 = vld [vmem:[%s5 + $0x30] sm:$0xff]
  %v2857 = vld [vmem:[%s5 + $0x38] sm:$0xff]
  %v2858 = vld [vmem:[%s5 + $0x40] sm:$0xff]
  %v2859 = vld [vmem:[%s5 + $0x48] sm:$0xff]
  %v2860 = vld [vmem:[%s5 + $0x50] sm:$0xff]
  %v2861 = vld [vmem:[%s5 + $0x58] sm:$0xff]
  %v2862 = vld [vmem:[%s5 + $0x60] sm:$0xff]
  %v2863 = vld [vmem:[%s5 + $0x68] sm:$0xff]
  %v2864 = vld [vmem:[%s5 + $0x70] sm:$0xff]
  %v2865 = vld [vmem:[%s5 + $0x78] sm:$0xff]
  %v2866 = vld [vmem:[%s5 + $0x80] sm:$0xff]
  %v2867 = vld [vmem:[%s5 + $0x88] sm:$0xff]
  %v2868 = vld [vmem:[%s5 + $0x90] sm:$0xff]
  %v2869 = vld [vmem:[%s5 + $0x98] sm:$0xff]
  %v2870 = vld [vmem:[%s5 + $0xa0] sm:$0xff]
  %v2871 = vld [vmem:[%s5 + $0xa8] sm:$0xff]
  %v2872 = vld [vmem:[%s5 + $0xb0] sm:$0xff]
  %v2873 = vld [vmem:[%s5 + $0xb8] sm:$0xff]
  %v2874 = vld [vmem:[%s5 + $0xc0] sm:$0xff]
  %v2875 = vld [vmem:[%s5 + $0xc8] sm:$0xff]
  %v2876 = vld [vmem:[%s5 + $0xd0] sm:$0xff]
  %v2877 = vld [vmem:[%s5 + $0xd8] sm:$0xff]
  %v2878 = vld [vmem:[%s5 + $0xe0] sm:$0xff]
  %v2879 = vld [vmem:[%s5 + $0xe8] sm:$0xff]
  %v2880 = vld [vmem:[%s5 + $0xf0] sm:$0xff]
  %v2881 = vld [vmem:[%s5 + $0xf8] sm:$0xff]
  %v2882 = vld [vmem:[%s5 + $0x100] sm:$0xff]
  %v2883 = vld [vmem:[%s5 + $0x108] sm:$0xff]
  %v2884 = vld [vmem:[%s5 + $0x110] sm:$0xff]
  %v2885 = vld [vmem:[%s5 + $0x118] sm:$0xff]
  %v2886 = vld [vmem:[%s5 + $0x120] sm:$0xff]
  %v2887 = vld [vmem:[%s5 + $0x128] sm:$0xff]
  %v2888 = vld [vmem:[%s5 + $0x130] sm:$0xff]
  %v2889 = vld [vmem:[%s5 + $0x138] sm:$0xff]
  %v2890 = vld [vmem:[%s5 + $0x140] sm:$0xff]
  %v2891 = vld [vmem:[%s5 + $0x148] sm:$0xff]
  %v2892 = vld [vmem:[%s5 + $0x150] sm:$0xff]
  %v2893 = vld [vmem:[%s5 + $0x158] sm:$0xff]
  %v2894 = vld [vmem:[%s5 + $0x160] sm:$0xff]
  %v2895 = vld [vmem:[%s5 + $0x168] sm:$0xff]
  %v2896 = vld [vmem:[%s5 + $0x170] sm:$0xff]
  %v2897 = vld [vmem:[%s5 + $0x178] sm:$0xff]
  %v2898 = vld [vmem:[%s5 + $0x180] sm:$0xff]
  %v2899 = vld [vmem:[%s5 + $0x188] sm:$0xff]
  %v2900 = vld [vmem:[%s5 + $0x190] sm:$0xff]
  %v2901 = vld [vmem:[%s5 + $0x198] sm:$0xff]
  %v2902 = vld [vmem:[%s5 + $0x1a0] sm:$0xff]
  %v2903 = vld [vmem:[%s5 + $0x1a8] sm:$0xff]
  %v2904 = vld [vmem:[%s5 + $0x1b0] sm:$0xff]
  %v2905 = vld [vmem:[%s5 + $0x1b8] sm:$0xff]
  %v2906 = vld [vmem:[%s5 + $0x1c0] sm:$0xff]
  %v2907 = vld [vmem:[%s5 + $0x1c8] sm:$0xff]
  %v2908 = vld [vmem:[%s5 + $0x1d0] sm:$0xff]
  %v2909 = vld [vmem:[%s5 + $0x1d8] sm:$0xff]
  %v2910 = vld [vmem:[%s5 + $0x1e0] sm:$0xff]
  %v2911 = vld [vmem:[%s5 + $0x1e8] sm:$0xff]
  %v2912 = vld [vmem:[%s5 + $0x1f0] sm:$0xff]
  %v2913 = vld [vmem:[%s5 + $0x1f8] sm:$0xff]
  %s2914 = scalar_lea.vmem %s5, 512
  %v2915 = vld [vmem:[%s2914] sm:$0xff]
  %v2916 = vld [vmem:[%s2914 + $0x8] sm:$0xff]
  %v2917 = vld [vmem:[%s2914 + $0x10] sm:$0xff]
  %v2918 = vld [vmem:[%s2914 + $0x18] sm:$0xff]
  %v2919 = vld [vmem:[%s2914 + $0x20] sm:$0xff]
  %v2920 = vld [vmem:[%s2914 + $0x28] sm:$0xff]
  %v2921 = vld [vmem:[%s2914 + $0x30] sm:$0xff]
  %v2922 = vld [vmem:[%s2914 + $0x38] sm:$0xff]
  %v2923 = vld [vmem:[%s2914 + $0x40] sm:$0xff]
  %v2924 = vld [vmem:[%s2914 + $0x48] sm:$0xff]
  %v2925 = vld [vmem:[%s2914 + $0x50] sm:$0xff]
  %v2926 = vld [vmem:[%s2914 + $0x58] sm:$0xff]
  %v2927 = vld [vmem:[%s2914 + $0x60] sm:$0xff]
  %v2928 = vld [vmem:[%s2914 + $0x68] sm:$0xff]
  %v2929 = vld [vmem:[%s2914 + $0x70] sm:$0xff]
  %v2930 = vld [vmem:[%s2914 + $0x78] sm:$0xff]
  %v2931 = vld [vmem:[%s2914 + $0x80] sm:$0xff]
  %v2932 = vld [vmem:[%s2914 + $0x88] sm:$0xff]
  %v2933 = vld [vmem:[%s2914 + $0x90] sm:$0xff]
  %v2934 = vld [vmem:[%s2914 + $0x98] sm:$0xff]
  %v2935 = vld [vmem:[%s2914 + $0xa0] sm:$0xff]
  %v2936 = vld [vmem:[%s2914 + $0xa8] sm:$0xff]
  %v2937 = vld [vmem:[%s2914 + $0xb0] sm:$0xff]
  %v2938 = vld [vmem:[%s2914 + $0xb8] sm:$0xff]
  %v2939 = vld [vmem:[%s2914 + $0xc0] sm:$0xff]
  %v2940 = vld [vmem:[%s2914 + $0xc8] sm:$0xff]
  %v2941 = vld [vmem:[%s2914 + $0xd0] sm:$0xff]
  %v2942 = vld [vmem:[%s2914 + $0xd8] sm:$0xff]
  %v2943 = vld [vmem:[%s2914 + $0xe0] sm:$0xff]
  %v2944 = vld [vmem:[%s2914 + $0xe8] sm:$0xff]
  %v2945 = vld [vmem:[%s2914 + $0xf0] sm:$0xff]
  %v2946 = vld [vmem:[%s2914 + $0xf8] sm:$0xff]
  %v2947 = vld [vmem:[%s2914 + $0x100] sm:$0xff]
  %v2948 = vld [vmem:[%s2914 + $0x108] sm:$0xff]
  %v2949 = vld [vmem:[%s2914 + $0x110] sm:$0xff]
  %v2950 = vld [vmem:[%s2914 + $0x118] sm:$0xff]
  %v2951 = vld [vmem:[%s2914 + $0x120] sm:$0xff]
  %v2952 = vld [vmem:[%s2914 + $0x128] sm:$0xff]
  %v2953 = vld [vmem:[%s2914 + $0x130] sm:$0xff]
  %v2954 = vld [vmem:[%s2914 + $0x138] sm:$0xff]
  %v2955 = vld [vmem:[%s2914 + $0x140] sm:$0xff]
  %v2956 = vld [vmem:[%s2914 + $0x148] sm:$0xff]
  %v2957 = vld [vmem:[%s2914 + $0x150] sm:$0xff]
  %v2958 = vld [vmem:[%s2914 + $0x158] sm:$0xff]
  %v2959 = vld [vmem:[%s2914 + $0x160] sm:$0xff]
  %v2960 = vld [vmem:[%s2914 + $0x168] sm:$0xff]
  %v2961 = vld [vmem:[%s2914 + $0x170] sm:$0xff]
  %v2962 = vld [vmem:[%s2914 + $0x178] sm:$0xff]
  %v2963 = vld [vmem:[%s2914 + $0x180] sm:$0xff]
  %v2964 = vld [vmem:[%s2914 + $0x188] sm:$0xff]
  %v2965 = vld [vmem:[%s2914 + $0x190] sm:$0xff]
  %v2966 = vld [vmem:[%s2914 + $0x198] sm:$0xff]
  %v2967 = vld [vmem:[%s2914 + $0x1a0] sm:$0xff]
  %v2968 = vld [vmem:[%s2914 + $0x1a8] sm:$0xff]
  %v2969 = vld [vmem:[%s2914 + $0x1b0] sm:$0xff]
  %v2970 = vld [vmem:[%s2914 + $0x1b8] sm:$0xff]
  %v2971 = vld [vmem:[%s2914 + $0x1c0] sm:$0xff]
  %v2972 = vld [vmem:[%s2914 + $0x1c8] sm:$0xff]
  %v2973 = vld [vmem:[%s2914 + $0x1d0] sm:$0xff]
  %v2974 = vld [vmem:[%s2914 + $0x1d8] sm:$0xff]
  %v2975 = vld [vmem:[%s2914 + $0x1e0] sm:$0xff]
  %v2976 = vld [vmem:[%s2914 + $0x1e8] sm:$0xff]
  %v2977 = vld [vmem:[%s2914 + $0x1f0] sm:$0xff]
  %v2978 = vld [vmem:[%s2914 + $0x1f8] sm:$0xff]
  %2979 = vmatprep.subr.mxu0 %v2946
  %2980 = vmatpush1.msra.mxu0 %v2945
  %2981 = vmatprep.subr.mxu0 %v2944
  %2982 = vmatpush1.msra.mxu0 %v2943
  %2983 = vmatprep.subr.mxu0 %v2942
  %2984 = vmatpush1.msra.mxu0 %v2941
  %2985 = vmatprep.subr.mxu0 %v2940
  %2986 = vmatpush1.msra.mxu0 %v2939
  %2987 = vmatprep.subr.mxu0 %v2938
  %2988 = vmatpush1.msra.mxu0 %v2937
  %2989 = vmatprep.subr.mxu0 %v2936
  %2990 = vmatpush1.msra.mxu0 %v2935
  %2991 = vmatprep.subr.mxu0 %v2934
  %2992 = vmatpush1.msra.mxu0 %v2933
  %2993 = vmatprep.subr.mxu0 %v2932
  %2994 = vmatpush1.msra.mxu0 %v2931
  %2995 = vmatprep.subr.mxu0 %v2930
  %2996 = vmatpush1.msra.mxu0 %v2929
  %2997 = vmatprep.subr.mxu0 %v2928
  %2998 = vmatpush1.msra.mxu0 %v2927
  %2999 = vmatprep.subr.mxu0 %v2926
  %3000 = vmatpush1.msra.mxu0 %v2925
  %3001 = vmatprep.subr.mxu0 %v2924
  %3002 = vmatpush1.msra.mxu0 %v2923
  %3003 = vmatprep.subr.mxu0 %v2922
  %3004 = vmatpush1.msra.mxu0 %v2921
  %3005 = vmatprep.subr.mxu0 %v2920
  %3006 = vmatpush1.msra.mxu0 %v2919
  %3007 = vmatprep.subr.mxu0 %v2918
  %3008 = vmatpush1.msra.mxu0 %v2917
  %3009 = vmatprep.subr.mxu0 %v2916
  %3010 = vmatpush1.msra.mxu0 %v2915
  %3011 = vmatprep.subr.mxu0 %v2978
  %3012 = vmatpush2.msra.mxu0 %v2977
  %3013 = vmatprep.subr.mxu0 %v2976
  %3014 = vmatpush2.msra.mxu0 %v2975
  %3015 = vmatprep.subr.mxu0 %v2974
  %3016 = vmatpush2.msra.mxu0 %v2973
  %3017 = vmatprep.subr.mxu0 %v2972
  %3018 = vmatpush2.msra.mxu0 %v2971
  %3019 = vmatprep.subr.mxu0 %v2970
  %3020 = vmatpush2.msra.mxu0 %v2969
  %3021 = vmatprep.subr.mxu0 %v2968
  %3022 = vmatpush2.msra.mxu0 %v2967
  %3023 = vmatprep.subr.mxu0 %v2966
  %3024 = vmatpush2.msra.mxu0 %v2965
  %3025 = vmatprep.subr.mxu0 %v2964
  %3026 = vmatpush2.msra.mxu0 %v2963
  %3027 = vmatprep.subr.mxu0 %v2962
  %3028 = vmatpush2.msra.mxu0 %v2961
  %3029 = vmatprep.subr.mxu0 %v2960
  %3030 = vmatpush2.msra.mxu0 %v2959
  %3031 = vmatprep.subr.mxu0 %v2958
  %3032 = vmatpush2.msra.mxu0 %v2957
  %3033 = vmatprep.subr.mxu0 %v2956
  %3034 = vmatpush2.msra.mxu0 %v2955
  %3035 = vmatprep.subr.mxu0 %v2954
  %3036 = vmatpush2.msra.mxu0 %v2953
  %3037 = vmatprep.subr.mxu0 %v2952
  %3038 = vmatpush2.msra.mxu0 %v2951
  %3039 = vmatprep.subr.mxu0 %v2950
  %3040 = vmatpush2.msra.mxu0 %v2949
  %3041 = vmatprep.subr.mxu0 %v2948
  %3042 = vmatpush2.msra.mxu0 %v2947
  %3043 = vmatprep.mubr.f32.mxu0 %v2843
  %3044 = vmatmul.mubr.f32.gmra.mxu0 %v2842
  %v3045 = vpop.f32.mrf.mxu0
  %v3046 = vadd.f32 0.0, %v3045
  %v3047 = vpop.f32.mrf.mxu0
  %v3048 = vadd.f32 0.0, %v3047
  %3049 = vdwg.mxu0
  %3050 = vmatprep.subr.mxu0 %v2881
  %3051 = vmatpush1.msra.mxu0 %v2880
  %3052 = vmatprep.subr.mxu0 %v2879
  %3053 = vmatpush1.msra.mxu0 %v2878
  %3054 = vmatprep.subr.mxu0 %v2877
  %3055 = vmatpush1.msra.mxu0 %v2876
  %3056 = vmatprep.subr.mxu0 %v2875
  %3057 = vmatpush1.msra.mxu0 %v2874
  %3058 = vmatprep.subr.mxu0 %v2873
  %3059 = vmatpush1.msra.mxu0 %v2872
  %3060 = vmatprep.subr.mxu0 %v2871
  %3061 = vmatpush1.msra.mxu0 %v2870
  %3062 = vmatprep.subr.mxu0 %v2869
  %3063 = vmatpush1.msra.mxu0 %v2868
  %3064 = vmatprep.subr.mxu0 %v2867
  %3065 = vmatpush1.msra.mxu0 %v2866
  %3066 = vmatprep.subr.mxu0 %v2865
  %3067 = vmatpush1.msra.mxu0 %v2864
  %3068 = vmatprep.subr.mxu0 %v2863
  %3069 = vmatpush1.msra.mxu0 %v2862
  %3070 = vmatprep.subr.mxu0 %v2861
  %3071 = vmatpush1.msra.mxu0 %v2860
  %3072 = vmatprep.subr.mxu0 %v2859
  %3073 = vmatpush1.msra.mxu0 %v2858
  %3074 = vmatprep.subr.mxu0 %v2857
  %3075 = vmatpush1.msra.mxu0 %v2856
  %3076 = vmatprep.subr.mxu0 %v2855
  %3077 = vmatpush1.msra.mxu0 %v2854
  %3078 = vmatprep.subr.mxu0 %v2853
  %3079 = vmatpush1.msra.mxu0 %v2852
  %3080 = vmatprep.subr.mxu0 %v2851
  %3081 = vmatpush1.msra.mxu0 %v2850
  %3082 = vmatprep.subr.mxu0 %v2913
  %3083 = vmatpush2.msra.mxu0 %v2912
  %3084 = vmatprep.subr.mxu0 %v2911
  %3085 = vmatpush2.msra.mxu0 %v2910
  %3086 = vmatprep.subr.mxu0 %v2909
  %3087 = vmatpush2.msra.mxu0 %v2908
  %3088 = vmatprep.subr.mxu0 %v2907
  %3089 = vmatpush2.msra.mxu0 %v2906
  %3090 = vmatprep.subr.mxu0 %v2905
  %3091 = vmatpush2.msra.mxu0 %v2904
  %3092 = vmatprep.subr.mxu0 %v2903
  %3093 = vmatpush2.msra.mxu0 %v2902
  %3094 = vmatprep.subr.mxu0 %v2901
  %3095 = vmatpush2.msra.mxu0 %v2900
  %3096 = vmatprep.subr.mxu0 %v2899
  %3097 = vmatpush2.msra.mxu0 %v2898
  %3098 = vmatprep.subr.mxu0 %v2897
  %3099 = vmatpush2.msra.mxu0 %v2896
  %3100 = vmatprep.subr.mxu0 %v2895
  %3101 = vmatpush2.msra.mxu0 %v2894
  %3102 = vmatprep.subr.mxu0 %v2893
  %3103 = vmatpush2.msra.mxu0 %v2892
  %3104 = vmatprep.subr.mxu0 %v2891
  %3105 = vmatpush2.msra.mxu0 %v2890
  %3106 = vmatprep.subr.mxu0 %v2889
  %3107 = vmatpush2.msra.mxu0 %v2888
  %3108 = vmatprep.subr.mxu0 %v2887
  %3109 = vmatpush2.msra.mxu0 %v2886
  %3110 = vmatprep.subr.mxu0 %v2885
  %3111 = vmatpush2.msra.mxu0 %v2884
  %3112 = vmatprep.subr.mxu0 %v2883
  %3113 = vmatpush2.msra.mxu0 %v2882
  %3114 = vmatprep.mubr.f32.mxu0 %v2841
  %3115 = vmatmul.mubr.f32.gmra.mxu0 %v2840
  %v3116 = vpop.f32.mrf.mxu0
  %v3117 = vadd.f32 %v3046, %v3116
  %v3118 = vpop.f32.mrf.mxu0
  %v3119 = vadd.f32 %v3048, %v3118
  %3120 = vdwg.mxu0
  %s3121 = scalar_lea.vmem %s5, 1024
  %v3122 = vld [vmem:[%s3121] sm:$0xff]
  %v3123 = vld [vmem:[%s3121 + $0x8] sm:$0xff]
  %v3124 = vld [vmem:[%s3121 + $0x10] sm:$0xff]
  %v3125 = vld [vmem:[%s3121 + $0x18] sm:$0xff]
  %v3126 = vld [vmem:[%s3121 + $0x20] sm:$0xff]
  %v3127 = vld [vmem:[%s3121 + $0x28] sm:$0xff]
  %v3128 = vld [vmem:[%s3121 + $0x30] sm:$0xff]
  %v3129 = vld [vmem:[%s3121 + $0x38] sm:$0xff]
  %v3130 = vld [vmem:[%s3121 + $0x40] sm:$0xff]
  %v3131 = vld [vmem:[%s3121 + $0x48] sm:$0xff]
  %v3132 = vld [vmem:[%s3121 + $0x50] sm:$0xff]
  %v3133 = vld [vmem:[%s3121 + $0x58] sm:$0xff]
  %v3134 = vld [vmem:[%s3121 + $0x60] sm:$0xff]
  %v3135 = vld [vmem:[%s3121 + $0x68] sm:$0xff]
  %v3136 = vld [vmem:[%s3121 + $0x70] sm:$0xff]
  %v3137 = vld [vmem:[%s3121 + $0x78] sm:$0xff]
  %v3138 = vld [vmem:[%s3121 + $0x80] sm:$0xff]
  %v3139 = vld [vmem:[%s3121 + $0x88] sm:$0xff]
  %v3140 = vld [vmem:[%s3121 + $0x90] sm:$0xff]
  %v3141 = vld [vmem:[%s3121 + $0x98] sm:$0xff]
  %v3142 = vld [vmem:[%s3121 + $0xa0] sm:$0xff]
  %v3143 = vld [vmem:[%s3121 + $0xa8] sm:$0xff]
  %v3144 = vld [vmem:[%s3121 + $0xb0] sm:$0xff]
  %v3145 = vld [vmem:[%s3121 + $0xb8] sm:$0xff]
  %v3146 = vld [vmem:[%s3121 + $0xc0] sm:$0xff]
  %v3147 = vld [vmem:[%s3121 + $0xc8] sm:$0xff]
  %v3148 = vld [vmem:[%s3121 + $0xd0] sm:$0xff]
  %v3149 = vld [vmem:[%s3121 + $0xd8] sm:$0xff]
  %v3150 = vld [vmem:[%s3121 + $0xe0] sm:$0xff]
  %v3151 = vld [vmem:[%s3121 + $0xe8] sm:$0xff]
  %v3152 = vld [vmem:[%s3121 + $0xf0] sm:$0xff]
  %v3153 = vld [vmem:[%s3121 + $0xf8] sm:$0xff]
  %v3154 = vld [vmem:[%s3121 + $0x100] sm:$0xff]
  %v3155 = vld [vmem:[%s3121 + $0x108] sm:$0xff]
  %v3156 = vld [vmem:[%s3121 + $0x110] sm:$0xff]
  %v3157 = vld [vmem:[%s3121 + $0x118] sm:$0xff]
  %v3158 = vld [vmem:[%s3121 + $0x120] sm:$0xff]
  %v3159 = vld [vmem:[%s3121 + $0x128] sm:$0xff]
  %v3160 = vld [vmem:[%s3121 + $0x130] sm:$0xff]
  %v3161 = vld [vmem:[%s3121 + $0x138] sm:$0xff]
  %v3162 = vld [vmem:[%s3121 + $0x140] sm:$0xff]
  %v3163 = vld [vmem:[%s3121 + $0x148] sm:$0xff]
  %v3164 = vld [vmem:[%s3121 + $0x150] sm:$0xff]
  %v3165 = vld [vmem:[%s3121 + $0x158] sm:$0xff]
  %v3166 = vld [vmem:[%s3121 + $0x160] sm:$0xff]
  %v3167 = vld [vmem:[%s3121 + $0x168] sm:$0xff]
  %v3168 = vld [vmem:[%s3121 + $0x170] sm:$0xff]
  %v3169 = vld [vmem:[%s3121 + $0x178] sm:$0xff]
  %v3170 = vld [vmem:[%s3121 + $0x180] sm:$0xff]
  %v3171 = vld [vmem:[%s3121 + $0x188] sm:$0xff]
  %v3172 = vld [vmem:[%s3121 + $0x190] sm:$0xff]
  %v3173 = vld [vmem:[%s3121 + $0x198] sm:$0xff]
  %v3174 = vld [vmem:[%s3121 + $0x1a0] sm:$0xff]
  %v3175 = vld [vmem:[%s3121 + $0x1a8] sm:$0xff]
  %v3176 = vld [vmem:[%s3121 + $0x1b0] sm:$0xff]
  %v3177 = vld [vmem:[%s3121 + $0x1b8] sm:$0xff]
  %v3178 = vld [vmem:[%s3121 + $0x1c0] sm:$0xff]
  %v3179 = vld [vmem:[%s3121 + $0x1c8] sm:$0xff]
  %v3180 = vld [vmem:[%s3121 + $0x1d0] sm:$0xff]
  %v3181 = vld [vmem:[%s3121 + $0x1d8] sm:$0xff]
  %v3182 = vld [vmem:[%s3121 + $0x1e0] sm:$0xff]
  %v3183 = vld [vmem:[%s3121 + $0x1e8] sm:$0xff]
  %v3184 = vld [vmem:[%s3121 + $0x1f0] sm:$0xff]
  %v3185 = vld [vmem:[%s3121 + $0x1f8] sm:$0xff]
  %3186 = vmatprep.subr.mxu0 %v3153
  %3187 = vmatpush1.msra.mxu0 %v3152
  %3188 = vmatprep.subr.mxu0 %v3151
  %3189 = vmatpush1.msra.mxu0 %v3150
  %3190 = vmatprep.subr.mxu0 %v3149
  %3191 = vmatpush1.msra.mxu0 %v3148
  %3192 = vmatprep.subr.mxu0 %v3147
  %3193 = vmatpush1.msra.mxu0 %v3146
  %3194 = vmatprep.subr.mxu0 %v3145
  %3195 = vmatpush1.msra.mxu0 %v3144
  %3196 = vmatprep.subr.mxu0 %v3143
  %3197 = vmatpush1.msra.mxu0 %v3142
  %3198 = vmatprep.subr.mxu0 %v3141
  %3199 = vmatpush1.msra.mxu0 %v3140
  %3200 = vmatprep.subr.mxu0 %v3139
  %3201 = vmatpush1.msra.mxu0 %v3138
  %3202 = vmatprep.subr.mxu0 %v3137
  %3203 = vmatpush1.msra.mxu0 %v3136
  %3204 = vmatprep.subr.mxu0 %v3135
  %3205 = vmatpush1.msra.mxu0 %v3134
  %3206 = vmatprep.subr.mxu0 %v3133
  %3207 = vmatpush1.msra.mxu0 %v3132
  %3208 = vmatprep.subr.mxu0 %v3131
  %3209 = vmatpush1.msra.mxu0 %v3130
  %3210 = vmatprep.subr.mxu0 %v3129
  %3211 = vmatpush1.msra.mxu0 %v3128
  %3212 = vmatprep.subr.mxu0 %v3127
  %3213 = vmatpush1.msra.mxu0 %v3126
  %3214 = vmatprep.subr.mxu0 %v3125
  %3215 = vmatpush1.msra.mxu0 %v3124
  %3216 = vmatprep.subr.mxu0 %v3123
  %3217 = vmatpush1.msra.mxu0 %v3122
  %3218 = vmatprep.subr.mxu0 %v3185
  %3219 = vmatpush2.msra.mxu0 %v3184
  %3220 = vmatprep.subr.mxu0 %v3183
  %3221 = vmatpush2.msra.mxu0 %v3182
  %3222 = vmatprep.subr.mxu0 %v3181
  %3223 = vmatpush2.msra.mxu0 %v3180
  %3224 = vmatprep.subr.mxu0 %v3179
  %3225 = vmatpush2.msra.mxu0 %v3178
  %3226 = vmatprep.subr.mxu0 %v3177
  %3227 = vmatpush2.msra.mxu0 %v3176
  %3228 = vmatprep.subr.mxu0 %v3175
  %3229 = vmatpush2.msra.mxu0 %v3174
  %3230 = vmatprep.subr.mxu0 %v3173
  %3231 = vmatpush2.msra.mxu0 %v3172
  %3232 = vmatprep.subr.mxu0 %v3171
  %3233 = vmatpush2.msra.mxu0 %v3170
  %3234 = vmatprep.subr.mxu0 %v3169
  %3235 = vmatpush2.msra.mxu0 %v3168
  %3236 = vmatprep.subr.mxu0 %v3167
  %3237 = vmatpush2.msra.mxu0 %v3166
  %3238 = vmatprep.subr.mxu0 %v3165
  %3239 = vmatpush2.msra.mxu0 %v3164
  %3240 = vmatprep.subr.mxu0 %v3163
  %3241 = vmatpush2.msra.mxu0 %v3162
  %3242 = vmatprep.subr.mxu0 %v3161
  %3243 = vmatpush2.msra.mxu0 %v3160
  %3244 = vmatprep.subr.mxu0 %v3159
  %3245 = vmatpush2.msra.mxu0 %v3158
  %3246 = vmatprep.subr.mxu0 %v3157
  %3247 = vmatpush2.msra.mxu0 %v3156
  %3248 = vmatprep.subr.mxu0 %v3155
  %3249 = vmatpush2.msra.mxu0 %v3154
  %3250 = vmatprep.mubr.f32.mxu0 %v2847
  %3251 = vmatmul.mubr.f32.gmra.mxu0 %v2846
  %v3252 = vpop.f32.mrf.mxu0
  %v3253 = vadd.f32 0.0, %v3252
  %v3254 = vpop.f32.mrf.mxu0
  %v3255 = vadd.f32 0.0, %v3254
  %3256 = vdwg.mxu0
  %v3257 = vadd.f32 %v3117, %v3253
  %v3258 = vadd.f32 %v3119, %v3255
  %s3259 = scalar_lea.vmem %s5, 1536
  %v3260 = vld [vmem:[%s3259] sm:$0xff]
  %v3261 = vld [vmem:[%s3259 + $0x8] sm:$0xff]
  %v3262 = vld [vmem:[%s3259 + $0x10] sm:$0xff]
  %v3263 = vld [vmem:[%s3259 + $0x18] sm:$0xff]
  %v3264 = vld [vmem:[%s3259 + $0x20] sm:$0xff]
  %v3265 = vld [vmem:[%s3259 + $0x28] sm:$0xff]
  %v3266 = vld [vmem:[%s3259 + $0x30] sm:$0xff]
  %v3267 = vld [vmem:[%s3259 + $0x38] sm:$0xff]
  %v3268 = vld [vmem:[%s3259 + $0x40] sm:$0xff]
  %v3269 = vld [vmem:[%s3259 + $0x48] sm:$0xff]
  %v3270 = vld [vmem:[%s3259 + $0x50] sm:$0xff]
  %v3271 = vld [vmem:[%s3259 + $0x58] sm:$0xff]
  %v3272 = vld [vmem:[%s3259 + $0x60] sm:$0xff]
  %v3273 = vld [vmem:[%s3259 + $0x68] sm:$0xff]
  %v3274 = vld [vmem:[%s3259 + $0x70] sm:$0xff]
  %v3275 = vld [vmem:[%s3259 + $0x78] sm:$0xff]
  %v3276 = vld [vmem:[%s3259 + $0x80] sm:$0xff]
  %v3277 = vld [vmem:[%s3259 + $0x88] sm:$0xff]
  %v3278 = vld [vmem:[%s3259 + $0x90] sm:$0xff]
  %v3279 = vld [vmem:[%s3259 + $0x98] sm:$0xff]
  %v3280 = vld [vmem:[%s3259 + $0xa0] sm:$0xff]
  %v3281 = vld [vmem:[%s3259 + $0xa8] sm:$0xff]
  %v3282 = vld [vmem:[%s3259 + $0xb0] sm:$0xff]
  %v3283 = vld [vmem:[%s3259 + $0xb8] sm:$0xff]
  %v3284 = vld [vmem:[%s3259 + $0xc0] sm:$0xff]
  %v3285 = vld [vmem:[%s3259 + $0xc8] sm:$0xff]
  %v3286 = vld [vmem:[%s3259 + $0xd0] sm:$0xff]
  %v3287 = vld [vmem:[%s3259 + $0xd8] sm:$0xff]
  %v3288 = vld [vmem:[%s3259 + $0xe0] sm:$0xff]
  %v3289 = vld [vmem:[%s3259 + $0xe8] sm:$0xff]
  %v3290 = vld [vmem:[%s3259 + $0xf0] sm:$0xff]
  %v3291 = vld [vmem:[%s3259 + $0xf8] sm:$0xff]
  %v3292 = vld [vmem:[%s3259 + $0x100] sm:$0xff]
  %v3293 = vld [vmem:[%s3259 + $0x108] sm:$0xff]
  %v3294 = vld [vmem:[%s3259 + $0x110] sm:$0xff]
  %v3295 = vld [vmem:[%s3259 + $0x118] sm:$0xff]
  %v3296 = vld [vmem:[%s3259 + $0x120] sm:$0xff]
  %v3297 = vld [vmem:[%s3259 + $0x128] sm:$0xff]
  %v3298 = vld [vmem:[%s3259 + $0x130] sm:$0xff]
  %v3299 = vld [vmem:[%s3259 + $0x138] sm:$0xff]
  %v3300 = vld [vmem:[%s3259 + $0x140] sm:$0xff]
  %v3301 = vld [vmem:[%s3259 + $0x148] sm:$0xff]
  %v3302 = vld [vmem:[%s3259 + $0x150] sm:$0xff]
  %v3303 = vld [vmem:[%s3259 + $0x158] sm:$0xff]
  %v3304 = vld [vmem:[%s3259 + $0x160] sm:$0xff]
  %v3305 = vld [vmem:[%s3259 + $0x168] sm:$0xff]
  %v3306 = vld [vmem:[%s3259 + $0x170] sm:$0xff]
  %v3307 = vld [vmem:[%s3259 + $0x178] sm:$0xff]
  %v3308 = vld [vmem:[%s3259 + $0x180] sm:$0xff]
  %v3309 = vld [vmem:[%s3259 + $0x188] sm:$0xff]
  %v3310 = vld [vmem:[%s3259 + $0x190] sm:$0xff]
  %v3311 = vld [vmem:[%s3259 + $0x198] sm:$0xff]
  %v3312 = vld [vmem:[%s3259 + $0x1a0] sm:$0xff]
  %v3313 = vld [vmem:[%s3259 + $0x1a8] sm:$0xff]
  %v3314 = vld [vmem:[%s3259 + $0x1b0] sm:$0xff]
  %v3315 = vld [vmem:[%s3259 + $0x1b8] sm:$0xff]
  %v3316 = vld [vmem:[%s3259 + $0x1c0] sm:$0xff]
  %v3317 = vld [vmem:[%s3259 + $0x1c8] sm:$0xff]
  %v3318 = vld [vmem:[%s3259 + $0x1d0] sm:$0xff]
  %v3319 = vld [vmem:[%s3259 + $0x1d8] sm:$0xff]
  %v3320 = vld [vmem:[%s3259 + $0x1e0] sm:$0xff]
  %v3321 = vld [vmem:[%s3259 + $0x1e8] sm:$0xff]
  %v3322 = vld [vmem:[%s3259 + $0x1f0] sm:$0xff]
  %v3323 = vld [vmem:[%s3259 + $0x1f8] sm:$0xff]
  %3324 = vmatprep.subr.mxu0 %v3291
  %3325 = vmatpush1.msra.mxu0 %v3290
  %3326 = vmatprep.subr.mxu0 %v3289
  %3327 = vmatpush1.msra.mxu0 %v3288
  %3328 = vmatprep.subr.mxu0 %v3287
  %3329 = vmatpush1.msra.mxu0 %v3286
  %3330 = vmatprep.subr.mxu0 %v3285
  %3331 = vmatpush1.msra.mxu0 %v3284
  %3332 = vmatprep.subr.mxu0 %v3283
  %3333 = vmatpush1.msra.mxu0 %v3282
  %3334 = vmatprep.subr.mxu0 %v3281
  %3335 = vmatpush1.msra.mxu0 %v3280
  %3336 = vmatprep.subr.mxu0 %v3279
  %3337 = vmatpush1.msra.mxu0 %v3278
  %3338 = vmatprep.subr.mxu0 %v3277
  %3339 = vmatpush1.msra.mxu0 %v3276
  %3340 = vmatprep.subr.mxu0 %v3275
  %3341 = vmatpush1.msra.mxu0 %v3274
  %3342 = vmatprep.subr.mxu0 %v3273
  %3343 = vmatpush1.msra.mxu0 %v3272
  %3344 = vmatprep.subr.mxu0 %v3271
  %3345 = vmatpush1.msra.mxu0 %v3270
  %3346 = vmatprep.subr.mxu0 %v3269
  %3347 = vmatpush1.msra.mxu0 %v3268
  %3348 = vmatprep.subr.mxu0 %v3267
  %3349 = vmatpush1.msra.mxu0 %v3266
  %3350 = vmatprep.subr.mxu0 %v3265
  %3351 = vmatpush1.msra.mxu0 %v3264
  %3352 = vmatprep.subr.mxu0 %v3263
  %3353 = vmatpush1.msra.mxu0 %v3262
  %3354 = vmatprep.subr.mxu0 %v3261
  %3355 = vmatpush1.msra.mxu0 %v3260
  %3356 = vmatprep.subr.mxu0 %v3323
  %3357 = vmatpush2.msra.mxu0 %v3322
  %3358 = vmatprep.subr.mxu0 %v3321
  %3359 = vmatpush2.msra.mxu0 %v3320
  %3360 = vmatprep.subr.mxu0 %v3319
  %3361 = vmatpush2.msra.mxu0 %v3318
  %3362 = vmatprep.subr.mxu0 %v3317
  %3363 = vmatpush2.msra.mxu0 %v3316
  %3364 = vmatprep.subr.mxu0 %v3315
  %3365 = vmatpush2.msra.mxu0 %v3314
  %3366 = vmatprep.subr.mxu0 %v3313
  %3367 = vmatpush2.msra.mxu0 %v3312
  %3368 = vmatprep.subr.mxu0 %v3311
  %3369 = vmatpush2.msra.mxu0 %v3310
  %3370 = vmatprep.subr.mxu0 %v3309
  %3371 = vmatpush2.msra.mxu0 %v3308
  %3372 = vmatprep.subr.mxu0 %v3307
  %3373 = vmatpush2.msra.mxu0 %v3306
  %3374 = vmatprep.subr.mxu0 %v3305
  %3375 = vmatpush2.msra.mxu0 %v3304
  %3376 = vmatprep.subr.mxu0 %v3303
  %3377 = vmatpush2.msra.mxu0 %v3302
  %3378 = vmatprep.subr.mxu0 %v3301
  %3379 = vmatpush2.msra.mxu0 %v3300
  %3380 = vmatprep.subr.mxu0 %v3299
  %3381 = vmatpush2.msra.mxu0 %v3298
  %3382 = vmatprep.subr.mxu0 %v3297
  %3383 = vmatpush2.msra.mxu0 %v3296
  %3384 = vmatprep.subr.mxu0 %v3295
  %3385 = vmatpush2.msra.mxu0 %v3294
  %3386 = vmatprep.subr.mxu0 %v3293
  %3387 = vmatpush2.msra.mxu0 %v3292
  %3388 = vmatprep.mubr.f32.mxu0 %v2849
  %3389 = vmatmul.mubr.f32.gmra.mxu0 %v2848
  %v3390 = vpop.f32.mrf.mxu0
  %v3391 = vadd.f32 0.0, %v3390
  %v3392 = vpop.f32.mrf.mxu0
  %v3393 = vadd.f32 0.0, %v3392
  %3394 = vdwg.mxu0
  %v3395 = vadd.f32 %v3257, %v3391
  %v3396 = vadd.f32 %v3258, %v3393
  %v3397 = vld [vmem:[%s6] sm:$0x3]
  %v3399 = vlaneseq
  %v3400 = vshrl.u32 %v3399, 7
  %v3401 = vsub.s32 0, %v3400
  %v3402 = vrot.slane %v3397, %v3401
  %v3403 = vlaneseq
  %v3404 = vshrl.u32 %v3403, 7
  %v3405 = vsub.s32 1, %v3404
  %v3406 = vrot.slane %v3397, %v3405
  %v3409 = vadd.f32 %v3395, %v3402
  %v3410 = vadd.f32 %v3396, %v3406
  %v3411 = vmax.f32 %v3409, 0.0
  %v3412 = vmax.f32 %v3410, 0.0
  %v3413 = vld [vmem:[%s7] sm:$0x3]
  %v3415 = vlaneseq
  %v3416 = vshrl.u32 %v3415, 7
  %v3417 = vsub.s32 0, %v3416
  %v3418 = vrot.slane %v3413, %v3417
  %v3419 = vlaneseq
  %v3420 = vshrl.u32 %v3419, 7
  %v3421 = vsub.s32 1, %v3420
  %v3422 = vrot.slane %v3413, %v3421
  %v3425 = vmul.f32 %v3411, %v3418
  %v3426 = vmul.f32 %v3412, %v3422
  %v3427 = vadd.f32 %v3425, %v3426
  %3428 = vadd.xlane.f32.xlu0 %v3427
  %v3429 = vpop.xlane.xlu0 %3428
  %v3430 = vld [vmem:[#allocation2] sm:$0x1]
  %v3432 = vlaneseq
  %v3433 = vshrl.u32 %v3432, 7
  %v3434 = vsub.s32 0, %v3433
  %v3435 = vrot.slane %v3430, %v3434
  %v3437 = vadd.f32 %v3429, %v3435
  %3439 = vset.pattern.permute.xlu0 0
  %3440 = vperm.xlu0 %3439, %v3437
  %v3441 = vpop.permute.xlu0 %3440
  %3443 = vst [vmem:[%s9] sm:$0xff] %v3441
  // Predicated region
  $region38: #{cnn_forward.1} parent=0 // pred_check
    _
  $region39: #{cnn_forward.1} parent=0 // pred_check_branch
    %3445 = sbr.rel (0) target = $region41
  $region40: #{cnn_forward.1} parent=0 // pred_region
    _
  $region41: #{cnn_forward.1} parent=0 // pred_fallthru
    _
  // Predicated region
  $region42: #{cnn_forward.1} parent=0 // pred_check
    _
  $region43: #{cnn_forward.1} parent=0 // pred_check_branch
    %3447 = sbr.rel (0) target = $region45
  $region44: #{cnn_forward.1} parent=0 // pred_region
    _
  $region45: #{cnn_forward.1} parent=0 // pred_fallthru
    _

</llo_original>
